<compile_context>
chip_gen: v7x
topology: tpu7x:2x2x1
jax: 0.10.0
libtpu: 0.0.40
codegen_flags: <defaults>
</compile_context>

<pallas_src>
import functools

import jax
import jax.numpy as jnp
from jax.experimental import pallas as pl
from jax.experimental.pallas import tpu as pltpu


def _mlp_vpu_kernel(*refs, dims, block_chunks, dropout_prob, dropout_mode,
                    use_approx_recip):
    num_inputs, h1_dim, h2_dim, num_classes = dims
    if dropout_mode == "tpu_prng":
        (seed_ref, x_ref, w1_ref, b1_ref, w2_ref, b2_ref, w3_ref, b3_ref,
         out_ref) = refs
        u_ref = None
    elif dropout_mode == "host_mask":
        (x_ref, u_ref, w1_ref, b1_ref, w2_ref, b2_ref, w3_ref, b3_ref,
         out_ref) = refs
        seed_ref = None
    else:  # eval mode / p == 0: dropout is the identity
        (x_ref, w1_ref, b1_ref, w2_ref, b2_ref, w3_ref, b3_ref, out_ref) = refs
        seed_ref = u_ref = None

    @pl.loop(0, block_chunks)
    def _(c):
        # One chunk = 8 sublanes x 128 lanes = 1024 batch rows, vreg-aligned.
        s0 = pl.multiple_of(c * 8, 8)

        # Linear(num_inputs, 5) + ReLU  (batch on lanes, unrolled VPU FMAs).
        h1 = [jnp.zeros((8, 128), jnp.float32) + b1_ref[j]
              for j in range(h1_dim)]
        for i in range(num_inputs):
            xi = x_ref[i, pl.ds(s0, 8), :]
            for j in range(h1_dim):
                h1[j] = h1[j] + xi * w1_ref[i * h1_dim + j]
        h1 = [jnp.maximum(v, 0.0) for v in h1]

        # Linear(5, 20) + ReLU
        h2 = [jnp.zeros((8, 128), jnp.float32) + b2_ref[j]
              for j in range(h2_dim)]
        for i in range(h1_dim):
            for j in range(h2_dim):
                h2[j] = h2[j] + h1[i] * w2_ref[i * h2_dim + j]
        h2 = [jnp.maximum(v, 0.0) for v in h2]

        # Linear(20, num_classes)
        logits = [jnp.zeros((8, 128), jnp.float32) + b3_ref[j]
                  for j in range(num_classes)]
        for i in range(h2_dim):
            for j in range(num_classes):
                logits[j] = logits[j] + h2[i] * w3_ref[i * num_classes + j]

        # Dropout (training only; eval == identity, matching module.eval()).
        if dropout_mode != "none":
            scale = jnp.float32(1.0 / (1.0 - dropout_prob))
            if dropout_mode == "tpu_prng":
                # Distinct seed per (batch block, chunk).
                pltpu.prng_seed(seed_ref[0]
                                + pl.program_id(0) * block_chunks + c)
                bits = pltpu.bitcast(
                    pltpu.prng_random_bits((num_classes, 8, 128)), jnp.uint32)
                thresh = jnp.uint32(
                    min(int(round(dropout_prob * (2 ** 32 - 1))), 2 ** 32 - 1))
                keeps = [bits[j] >= thresh for j in range(num_classes)]
            else:
                keeps = [u_ref[j, pl.ds(s0, 8), :] >= jnp.float32(dropout_prob)
                         for j in range(num_classes)]
            logits = [jnp.where(keeps[j], logits[j] * scale, 0.0)
                      for j in range(num_classes)]

        # Softmax over the class axis == across per-class vregs (pure VPU,
        # no cross-lane reduce), numerically stable.
        m = logits[0]
        for j in range(1, num_classes):
            m = jnp.maximum(m, logits[j])
        e = [jnp.exp(v - m) for v in logits]
        denom = e[0]
        for j in range(1, num_classes):
            denom = denom + e[j]
        inv = (pl.reciprocal(denom, approx=True) if use_approx_recip
               else 1.0 / denom)
        for j in range(num_classes):
            out_ref[j, pl.ds(s0, 8), :] = (e[j] * inv).astype(out_ref.dtype)


def _choose_block_chunks(n_chunks, num_inputs, num_classes, with_mask):
    """Chunks (1024 rows each) per grid block, with honest lane-padded VMEM math."""
    streams = num_inputs + num_classes * (2 if with_mask else 1)
    bytes_per_chunk = 2 * 4 * 8 * 128 * streams   # double-buffered f32 tiles
    budget = 8 * 1024 * 1024                      # headroom under v5e's 16 MiB
    block_chunks = int(max(1, min(budget // bytes_per_chunk, 8, n_chunks)))
    if n_chunks >= 2:
        # v7x megacore: keep >= 2 grid blocks so both TensorCores get work.
        block_chunks = min(block_chunks, (n_chunks + 1) // 2)
    return max(1, int(block_chunks))


def our_module_forward(x, params, *, dropout_prob=0.3, training=False, seed=0,
                       block_chunks=None):
    """OurModule forward as a batch-in-lanes Pallas TPU kernel.

    x: (batch, num_inputs) float
    params: (w1, b1, w2, b2, w3, b3) with w_i as (in, out), b_i as (out,)
    """
    w1, b1, w2, b2, w3, b3 = params
    batch, num_inputs = x.shape
    h1_dim, h2_dim, num_classes = w1.shape[1], w2.shape[1], w3.shape[1]

    if training and dropout_prob >= 1.0:
        raise ValueError("dropout_prob must be < 1 in training mode")

    on_tpu = jax.default_backend() == "tpu"
    dropout_mode = "none"
    if training and dropout_prob > 0.0:
        dropout_mode = "tpu_prng" if on_tpu else "host_mask"

    rows_per_chunk = 8 * 128
    n_chunks = (batch + rows_per_chunk - 1) // rows_per_chunk
    if block_chunks is None:
        block_chunks = _choose_block_chunks(
            n_chunks, num_inputs, num_classes, dropout_mode == "host_mask")
    block_chunks = int(max(1, min(block_chunks, n_chunks)))
    n_blocks = (n_chunks + block_chunks - 1) // block_chunks
    padded_batch = n_blocks * block_chunks * rows_per_chunk
    sub_total = padded_batch // 128
    sub_block = block_chunks * 8

    # Layout plumbing: batch onto the lane axis; zero-pad tail rows (finite
    # in-flight math, rows discarded on the output path).
    xf = x.astype(jnp.float32)
    xf = jnp.pad(xf, ((0, padded_batch - batch), (0, 0)))
    xt = xf.T.reshape(num_inputs, sub_total, 128)

    # Weights/biases flattened to 1-D f32 -> SMEM scalars (minimal padding).
    flat_params = (w1.reshape(-1).astype(jnp.float32),
                   b1.reshape(-1).astype(jnp.float32),
                   w2.reshape(-1).astype(jnp.float32),
                   b2.reshape(-1).astype(jnp.float32),
                   w3.reshape(-1).astype(jnp.float32),
                   b3.reshape(-1).astype(jnp.float32))

    x_spec = pl.BlockSpec((num_inputs, sub_block, 128),
                          lambda i, *_: (0, i, 0))
    out_spec = pl.BlockSpec((num_classes, sub_block, 128),
                            lambda i, *_: (0, i, 0))
    smem_spec = pl.BlockSpec(memory_space=pltpu.MemorySpace.SMEM)

    kernel = functools.partial(
        _mlp_vpu_kernel,
        dims=(num_inputs, h1_dim, h2_dim, num_classes),
        block_chunks=block_chunks,
        dropout_prob=float(dropout_prob),
        dropout_mode=dropout_mode,
        use_approx_recip=on_tpu)

    out_shape = jax.ShapeDtypeStruct((num_classes, sub_total, 128),
                                     jnp.float32)
    compiler_params = (pltpu.CompilerParams(dimension_semantics=("parallel",))
                       if on_tpu else None)

    args = []
    in_specs = [x_spec]
    num_scalar_prefetch = 0
    if dropout_mode == "tpu_prng":
        num_scalar_prefetch = 1
        args.append(jnp.asarray([seed], dtype=jnp.int32))
    args.append(xt)
    if dropout_mode == "host_mask":
        # TODO(synk): pltpu.prng_* has no lowering off-TPU / in interpret mode,
        # so stream a host-generated uniform mask there (neither path can
        # bit-match PyTorch's RNG stream).
        u = jax.random.uniform(jax.random.PRNGKey(seed),
                               (num_classes, sub_total, 128), jnp.float32)
        args.append(u)
        in_specs.append(pl.BlockSpec((num_classes, sub_block, 128),
                                     lambda i, *_: (0, i, 0)))
    args.extend(flat_params)
    in_specs.extend([smem_spec] * len(flat_params))

    grid_spec = pltpu.PrefetchScalarGridSpec(
        num_scalar_prefetch=num_scalar_prefetch,
        grid=(n_blocks,),
        in_specs=in_specs,
        out_specs=out_spec)

    out = pl.pallas_call(kernel, out_shape=out_shape, grid_spec=grid_spec,
                         compiler_params=compiler_params)(*args)

    # Un-interleave: (classes, padded_batch/128, 128) -> (batch, classes).
    return out.reshape(num_classes, padded_batch).T[:batch]


def init_params(key, num_inputs, num_classes):
    """Deterministic init mimicking PyTorch nn.Linear default (uniform +/-1/sqrt(fan_in))."""
    dims = [(num_inputs, 5), (5, 20), (20, num_classes)]
    params = []
    for fan_in, fan_out in dims:
        key, kw, kb = jax.random.split(key, 3)
        bound = 1.0 / (fan_in ** 0.5)
        w = jax.random.uniform(kw, (fan_in, fan_out), jnp.float32, -bound, bound)
        b = jax.random.uniform(kb, (fan_out,), jnp.float32, -bound, bound)
        params += [w, b]
    return tuple(params)


def _reference_eval(x, params):
    """Pure-JAX reference of the eval-mode forward (dropout = identity)."""
    w1, b1, w2, b2, w3, b3 = params
    h1 = jnp.maximum(x @ w1 + b1, 0.0)
    h2 = jnp.maximum(h1 @ w2 + b2, 0.0)
    logits = h2 @ w3 + b3
    return jax.nn.softmax(logits, axis=1)


if __name__ == "__main__":
    num_inputs, num_classes = 32, 10

    key = jax.random.PRNGKey(0)
    key, kx1, kx2 = jax.random.split(key, 3)
    params = init_params(key, num_inputs, num_classes)

    # Small, single-block eval case (batch pads to one 1024-row chunk).
    x_small = jax.random.normal(kx1, (300, num_inputs), dtype=jnp.float32)
    ref_small = _reference_eval(x_small, params)
    out_small = jax.block_until_ready(
        our_module_forward(x_small, params, dropout_prob=0.3, training=False))
    assert out_small.shape == (300, num_classes)
    # Tolerance covers pl.reciprocal(approx=True) on real TPU hardware.
    assert jnp.allclose(out_small, ref_small, atol=5e-3, rtol=5e-3)
    assert jnp.allclose(jnp.sum(out_small, axis=1), 1.0, atol=5e-3)

    # Multi-block eval case: 2304 rows -> 3 chunks -> block_chunks=2 ->
    # 2 grid blocks (exercises pipelining and the v7x >=2-block rule).
    x_big = jax.random.normal(kx2, (2304, num_inputs), dtype=jnp.float32)
    ref_big = _reference_eval(x_big, params)
    out_big = jax.block_until_ready(
        our_module_forward(x_big, params, training=False))
    assert out_big.shape == (2304, num_classes)
    assert jnp.allclose(out_big, ref_big, atol=5e-3, rtol=5e-3)
    assert jnp.allclose(jnp.sum(out_big, axis=1), 1.0, atol=5e-3)

    # Training-mode forward (dropout active): per-chunk TPU hardware PRNG
    # seeds on TPU backends, host-generated mask otherwise.
    out_train = jax.block_until_ready(
        our_module_forward(x_small, params, dropout_prob=0.3, training=True,
                           seed=123))
    assert out_train.shape == (300, num_classes)
    assert bool(jnp.all(jnp.isfinite(out_train)))
    assert jnp.allclose(jnp.sum(out_train, axis=1), 1.0, atol=5e-3)

    print("KERNEL_OK")
</pallas_src>

<mosaic_0001>
module attributes {stable_mosaic.version = 11 : i64} {
  func.func @_mlp_vpu_kernel(%arg0: i32, %arg1: memref<32x8x128xf32, #tpu.memory_space<vmem>>, %arg2: memref<160xf32, #tpu.memory_space<smem>>, %arg3: memref<5xf32, #tpu.memory_space<smem>>, %arg4: memref<100xf32, #tpu.memory_space<smem>>, %arg5: memref<20xf32, #tpu.memory_space<smem>>, %arg6: memref<200xf32, #tpu.memory_space<smem>>, %arg7: memref<10xf32, #tpu.memory_space<smem>>, %arg8: memref<10x8x128xf32, #tpu.memory_space<vmem>>) attributes {dimension_semantics = [#tpu.dimension_semantics<arbitrary>], iteration_bounds = array<i64: 1>, scalar_prefetch = 0 : i64, scratch_operands = 0 : i64, tpu.core_type = #tpu.core_type<tc>, window_params = [{transform_indices = @transform_0, window_bounds = array<i64: 32, 8, 128>}, {transform_indices = @transform_1, window_bounds = array<i64: 160>}, {transform_indices = @transform_2, window_bounds = array<i64: 5>}, {transform_indices = @transform_3, window_bounds = array<i64: 100>}, {transform_indices = @transform_4, window_bounds = array<i64: 20>}, {transform_indices = @transform_5, window_bounds = array<i64: 200>}, {transform_indices = @transform_6, window_bounds = array<i64: 10>}, {transform_indices = @transform_7, window_bounds = array<i64: 10, 8, 128>}]} {
    %c0_i32 = arith.constant 0 : i32
    %c1_i32 = arith.constant 1 : i32
    %0 = arith.muli %c0_i32, %c1_i32 : i32
    %c0_i32_0 = arith.constant 0 : i32
    %1 = arith.addi %c0_i32_0, %0 : i32
    %c8_i32 = arith.constant 8 : i32
    %2 = arith.muli %1, %c8_i32 : i32
    %3 = tpu.assume_multiple %2, 8 : i32
    %cst = arith.constant 0.000000e+00 : f32
    %4 = vector.broadcast %cst : f32 to vector<8x128xf32>
    %c0 = arith.constant 0 : index
    %5 = memref.load %arg3[%c0] : memref<5xf32, #tpu.memory_space<smem>>
    %6 = vector.broadcast %5 : f32 to vector<8x128xf32>
    %7 = arith.addf %4, %6 : vector<8x128xf32>
    %cst_1 = arith.constant 0.000000e+00 : f32
    %8 = vector.broadcast %cst_1 : f32 to vector<8x128xf32>
    %c1 = arith.constant 1 : index
    %9 = memref.load %arg3[%c1] : memref<5xf32, #tpu.memory_space<smem>>
    %10 = vector.broadcast %9 : f32 to vector<8x128xf32>
    %11 = arith.addf %8, %10 : vector<8x128xf32>
    %cst_2 = arith.constant 0.000000e+00 : f32
    %12 = vector.broadcast %cst_2 : f32 to vector<8x128xf32>
    %c2 = arith.constant 2 : index
    %13 = memref.load %arg3[%c2] : memref<5xf32, #tpu.memory_space<smem>>
    %14 = vector.broadcast %13 : f32 to vector<8x128xf32>
    %15 = arith.addf %12, %14 : vector<8x128xf32>
    %cst_3 = arith.constant 0.000000e+00 : f32
    %16 = vector.broadcast %cst_3 : f32 to vector<8x128xf32>
    %c3 = arith.constant 3 : index
    %17 = memref.load %arg3[%c3] : memref<5xf32, #tpu.memory_space<smem>>
    %18 = vector.broadcast %17 : f32 to vector<8x128xf32>
    %19 = arith.addf %16, %18 : vector<8x128xf32>
    %cst_4 = arith.constant 0.000000e+00 : f32
    %20 = vector.broadcast %cst_4 : f32 to vector<8x128xf32>
    %c4 = arith.constant 4 : index
    %21 = memref.load %arg3[%c4] : memref<5xf32, #tpu.memory_space<smem>>
    %22 = vector.broadcast %21 : f32 to vector<8x128xf32>
    %23 = arith.addf %20, %22 : vector<8x128xf32>
    %c0_5 = arith.constant 0 : index
    %24 = arith.index_cast %3 : i32 to index
    %c0_6 = arith.constant 0 : index
    %25 = vector.load %arg1[%c0_5, %24, %c0_6] : memref<32x8x128xf32, #tpu.memory_space<vmem>>, vector<1x8x128xf32>
    %26 = vector.shape_cast %25 : vector<1x8x128xf32> to vector<8x128xf32>
    %c0_7 = arith.constant 0 : index
    %27 = memref.load %arg2[%c0_7] : memref<160xf32, #tpu.memory_space<smem>>
    %28 = vector.broadcast %27 : f32 to vector<8x128xf32>
    %29 = arith.mulf %26, %28 : vector<8x128xf32>
    %30 = arith.addf %7, %29 : vector<8x128xf32>
    %c1_8 = arith.constant 1 : index
    %31 = memref.load %arg2[%c1_8] : memref<160xf32, #tpu.memory_space<smem>>
    %32 = vector.broadcast %31 : f32 to vector<8x128xf32>
    %33 = arith.mulf %26, %32 : vector<8x128xf32>
    %34 = arith.addf %11, %33 : vector<8x128xf32>
    %c2_9 = arith.constant 2 : index
    %35 = memref.load %arg2[%c2_9] : memref<160xf32, #tpu.memory_space<smem>>
    %36 = vector.broadcast %35 : f32 to vector<8x128xf32>
    %37 = arith.mulf %26, %36 : vector<8x128xf32>
    %38 = arith.addf %15, %37 : vector<8x128xf32>
    %c3_10 = arith.constant 3 : index
    %39 = memref.load %arg2[%c3_10] : memref<160xf32, #tpu.memory_space<smem>>
    %40 = vector.broadcast %39 : f32 to vector<8x128xf32>
    %41 = arith.mulf %26, %40 : vector<8x128xf32>
    %42 = arith.addf %19, %41 : vector<8x128xf32>
    %c4_11 = arith.constant 4 : index
    %43 = memref.load %arg2[%c4_11] : memref<160xf32, #tpu.memory_space<smem>>
    %44 = vector.broadcast %43 : f32 to vector<8x128xf32>
    %45 = arith.mulf %26, %44 : vector<8x128xf32>
    %46 = arith.addf %23, %45 : vector<8x128xf32>
    %c1_12 = arith.constant 1 : index
    %47 = arith.index_cast %3 : i32 to index
    %c0_13 = arith.constant 0 : index
    %48 = vector.load %arg1[%c1_12, %47, %c0_13] : memref<32x8x128xf32, #tpu.memory_space<vmem>>, vector<1x8x128xf32>
    %49 = vector.shape_cast %48 : vector<1x8x128xf32> to vector<8x128xf32>
    %c5 = arith.constant 5 : index
    %50 = memref.load %arg2[%c5] : memref<160xf32, #tpu.memory_space<smem>>
    %51 = vector.broadcast %50 : f32 to vector<8x128xf32>
    %52 = arith.mulf %49, %51 : vector<8x128xf32>
    %53 = arith.addf %30, %52 : vector<8x128xf32>
    %c6 = arith.constant 6 : index
    %54 = memref.load %arg2[%c6] : memref<160xf32, #tpu.memory_space<smem>>
    %55 = vector.broadcast %54 : f32 to vector<8x128xf32>
    %56 = arith.mulf %49, %55 : vector<8x128xf32>
    %57 = arith.addf %34, %56 : vector<8x128xf32>
    %c7 = arith.constant 7 : index
    %58 = memref.load %arg2[%c7] : memref<160xf32, #tpu.memory_space<smem>>
    %59 = vector.broadcast %58 : f32 to vector<8x128xf32>
    %60 = arith.mulf %49, %59 : vector<8x128xf32>
    %61 = arith.addf %38, %60 : vector<8x128xf32>
    %c8 = arith.constant 8 : index
    %62 = memref.load %arg2[%c8] : memref<160xf32, #tpu.memory_space<smem>>
    %63 = vector.broadcast %62 : f32 to vector<8x128xf32>
    %64 = arith.mulf %49, %63 : vector<8x128xf32>
    %65 = arith.addf %42, %64 : vector<8x128xf32>
    %c9 = arith.constant 9 : index
    %66 = memref.load %arg2[%c9] : memref<160xf32, #tpu.memory_space<smem>>
    %67 = vector.broadcast %66 : f32 to vector<8x128xf32>
    %68 = arith.mulf %49, %67 : vector<8x128xf32>
    %69 = arith.addf %46, %68 : vector<8x128xf32>
    %c2_14 = arith.constant 2 : index
    %70 = arith.index_cast %3 : i32 to index
    %c0_15 = arith.constant 0 : index
    %71 = vector.load %arg1[%c2_14, %70, %c0_15] : memref<32x8x128xf32, #tpu.memory_space<vmem>>, vector<1x8x128xf32>
    %72 = vector.shape_cast %71 : vector<1x8x128xf32> to vector<8x128xf32>
    %c10 = arith.constant 10 : index
    %73 = memref.load %arg2[%c10] : memref<160xf32, #tpu.memory_space<smem>>
    %74 = vector.broadcast %73 : f32 to vector<8x128xf32>
    %75 = arith.mulf %72, %74 : vector<8x128xf32>
    %76 = arith.addf %53, %75 : vector<8x128xf32>
    %c11 = arith.constant 11 : index
    %77 = memref.load %arg2[%c11] : memref<160xf32, #tpu.memory_space<smem>>
    %78 = vector.broadcast %77 : f32 to vector<8x128xf32>
    %79 = arith.mulf %72, %78 : vector<8x128xf32>
    %80 = arith.addf %57, %79 : vector<8x128xf32>
    %c12 = arith.constant 12 : index
    %81 = memref.load %arg2[%c12] : memref<160xf32, #tpu.memory_space<smem>>
    %82 = vector.broadcast %81 : f32 to vector<8x128xf32>
    %83 = arith.mulf %72, %82 : vector<8x128xf32>
    %84 = arith.addf %61, %83 : vector<8x128xf32>
    %c13 = arith.constant 13 : index
    %85 = memref.load %arg2[%c13] : memref<160xf32, #tpu.memory_space<smem>>
    %86 = vector.broadcast %85 : f32 to vector<8x128xf32>
    %87 = arith.mulf %72, %86 : vector<8x128xf32>
    %88 = arith.addf %65, %87 : vector<8x128xf32>
    %c14 = arith.constant 14 : index
    %89 = memref.load %arg2[%c14] : memref<160xf32, #tpu.memory_space<smem>>
    %90 = vector.broadcast %89 : f32 to vector<8x128xf32>
    %91 = arith.mulf %72, %90 : vector<8x128xf32>
    %92 = arith.addf %69, %91 : vector<8x128xf32>
    %c3_16 = arith.constant 3 : index
    %93 = arith.index_cast %3 : i32 to index
    %c0_17 = arith.constant 0 : index
    %94 = vector.load %arg1[%c3_16, %93, %c0_17] : memref<32x8x128xf32, #tpu.memory_space<vmem>>, vector<1x8x128xf32>
    %95 = vector.shape_cast %94 : vector<1x8x128xf32> to vector<8x128xf32>
    %c15 = arith.constant 15 : index
    %96 = memref.load %arg2[%c15] : memref<160xf32, #tpu.memory_space<smem>>
    %97 = vector.broadcast %96 : f32 to vector<8x128xf32>
    %98 = arith.mulf %95, %97 : vector<8x128xf32>
    %99 = arith.addf %76, %98 : vector<8x128xf32>
    %c16 = arith.constant 16 : index
    %100 = memref.load %arg2[%c16] : memref<160xf32, #tpu.memory_space<smem>>
    %101 = vector.broadcast %100 : f32 to vector<8x128xf32>
    %102 = arith.mulf %95, %101 : vector<8x128xf32>
    %103 = arith.addf %80, %102 : vector<8x128xf32>
    %c17 = arith.constant 17 : index
    %104 = memref.load %arg2[%c17] : memref<160xf32, #tpu.memory_space<smem>>
    %105 = vector.broadcast %104 : f32 to vector<8x128xf32>
    %106 = arith.mulf %95, %105 : vector<8x128xf32>
    %107 = arith.addf %84, %106 : vector<8x128xf32>
    %c18 = arith.constant 18 : index
    %108 = memref.load %arg2[%c18] : memref<160xf32, #tpu.memory_space<smem>>
    %109 = vector.broadcast %108 : f32 to vector<8x128xf32>
    %110 = arith.mulf %95, %109 : vector<8x128xf32>
    %111 = arith.addf %88, %110 : vector<8x128xf32>
    %c19 = arith.constant 19 : index
    %112 = memref.load %arg2[%c19] : memref<160xf32, #tpu.memory_space<smem>>
    %113 = vector.broadcast %112 : f32 to vector<8x128xf32>
    %114 = arith.mulf %95, %113 : vector<8x128xf32>
    %115 = arith.addf %92, %114 : vector<8x128xf32>
    %c4_18 = arith.constant 4 : index
    %116 = arith.index_cast %3 : i32 to index
    %c0_19 = arith.constant 0 : index
    %117 = vector.load %arg1[%c4_18, %116, %c0_19] : memref<32x8x128xf32, #tpu.memory_space<vmem>>, vector<1x8x128xf32>
    %118 = vector.shape_cast %117 : vector<1x8x128xf32> to vector<8x128xf32>
    %c20 = arith.constant 20 : index
    %119 = memref.load %arg2[%c20] : memref<160xf32, #tpu.memory_space<smem>>
    %120 = vector.broadcast %119 : f32 to vector<8x128xf32>
    %121 = arith.mulf %118, %120 : vector<8x128xf32>
    %122 = arith.addf %99, %121 : vector<8x128xf32>
    %c21 = arith.constant 21 : index
    %123 = memref.load %arg2[%c21] : memref<160xf32, #tpu.memory_space<smem>>
    %124 = vector.broadcast %123 : f32 to vector<8x128xf32>
    %125 = arith.mulf %118, %124 : vector<8x128xf32>
    %126 = arith.addf %103, %125 : vector<8x128xf32>
    %c22 = arith.constant 22 : index
    %127 = memref.load %arg2[%c22] : memref<160xf32, #tpu.memory_space<smem>>
    %128 = vector.broadcast %127 : f32 to vector<8x128xf32>
    %129 = arith.mulf %118, %128 : vector<8x128xf32>
    %130 = arith.addf %107, %129 : vector<8x128xf32>
    %c23 = arith.constant 23 : index
    %131 = memref.load %arg2[%c23] : memref<160xf32, #tpu.memory_space<smem>>
    %132 = vector.broadcast %131 : f32 to vector<8x128xf32>
    %133 = arith.mulf %118, %132 : vector<8x128xf32>
    %134 = arith.addf %111, %133 : vector<8x128xf32>
    %c24 = arith.constant 24 : index
    %135 = memref.load %arg2[%c24] : memref<160xf32, #tpu.memory_space<smem>>
    %136 = vector.broadcast %135 : f32 to vector<8x128xf32>
    %137 = arith.mulf %118, %136 : vector<8x128xf32>
    %138 = arith.addf %115, %137 : vector<8x128xf32>
    %c5_20 = arith.constant 5 : index
    %139 = arith.index_cast %3 : i32 to index
    %c0_21 = arith.constant 0 : index
    %140 = vector.load %arg1[%c5_20, %139, %c0_21] : memref<32x8x128xf32, #tpu.memory_space<vmem>>, vector<1x8x128xf32>
    %141 = vector.shape_cast %140 : vector<1x8x128xf32> to vector<8x128xf32>
    %c25 = arith.constant 25 : index
    %142 = memref.load %arg2[%c25] : memref<160xf32, #tpu.memory_space<smem>>
    %143 = vector.broadcast %142 : f32 to vector<8x128xf32>
    %144 = arith.mulf %141, %143 : vector<8x128xf32>
    %145 = arith.addf %122, %144 : vector<8x128xf32>
    %c26 = arith.constant 26 : index
    %146 = memref.load %arg2[%c26] : memref<160xf32, #tpu.memory_space<smem>>
    %147 = vector.broadcast %146 : f32 to vector<8x128xf32>
    %148 = arith.mulf %141, %147 : vector<8x128xf32>
    %149 = arith.addf %126, %148 : vector<8x128xf32>
    %c27 = arith.constant 27 : index
    %150 = memref.load %arg2[%c27] : memref<160xf32, #tpu.memory_space<smem>>
    %151 = vector.broadcast %150 : f32 to vector<8x128xf32>
    %152 = arith.mulf %141, %151 : vector<8x128xf32>
    %153 = arith.addf %130, %152 : vector<8x128xf32>
    %c28 = arith.constant 28 : index
    %154 = memref.load %arg2[%c28] : memref<160xf32, #tpu.memory_space<smem>>
    %155 = vector.broadcast %154 : f32 to vector<8x128xf32>
    %156 = arith.mulf %141, %155 : vector<8x128xf32>
    %157 = arith.addf %134, %156 : vector<8x128xf32>
    %c29 = arith.constant 29 : index
    %158 = memref.load %arg2[%c29] : memref<160xf32, #tpu.memory_space<smem>>
    %159 = vector.broadcast %158 : f32 to vector<8x128xf32>
    %160 = arith.mulf %141, %159 : vector<8x128xf32>
    %161 = arith.addf %138, %160 : vector<8x128xf32>
    %c6_22 = arith.constant 6 : index
    %162 = arith.index_cast %3 : i32 to index
    %c0_23 = arith.constant 0 : index
    %163 = vector.load %arg1[%c6_22, %162, %c0_23] : memref<32x8x128xf32, #tpu.memory_space<vmem>>, vector<1x8x128xf32>
    %164 = vector.shape_cast %163 : vector<1x8x128xf32> to vector<8x128xf32>
    %c30 = arith.constant 30 : index
    %165 = memref.load %arg2[%c30] : memref<160xf32, #tpu.memory_space<smem>>
    %166 = vector.broadcast %165 : f32 to vector<8x128xf32>
    %167 = arith.mulf %164, %166 : vector<8x128xf32>
    %168 = arith.addf %145, %167 : vector<8x128xf32>
    %c31 = arith.constant 31 : index
    %169 = memref.load %arg2[%c31] : memref<160xf32, #tpu.memory_space<smem>>
    %170 = vector.broadcast %169 : f32 to vector<8x128xf32>
    %171 = arith.mulf %164, %170 : vector<8x128xf32>
    %172 = arith.addf %149, %171 : vector<8x128xf32>
    %c32 = arith.constant 32 : index
    %173 = memref.load %arg2[%c32] : memref<160xf32, #tpu.memory_space<smem>>
    %174 = vector.broadcast %173 : f32 to vector<8x128xf32>
    %175 = arith.mulf %164, %174 : vector<8x128xf32>
    %176 = arith.addf %153, %175 : vector<8x128xf32>
    %c33 = arith.constant 33 : index
    %177 = memref.load %arg2[%c33] : memref<160xf32, #tpu.memory_space<smem>>
    %178 = vector.broadcast %177 : f32 to vector<8x128xf32>
    %179 = arith.mulf %164, %178 : vector<8x128xf32>
    %180 = arith.addf %157, %179 : vector<8x128xf32>
    %c34 = arith.constant 34 : index
    %181 = memref.load %arg2[%c34] : memref<160xf32, #tpu.memory_space<smem>>
    %182 = vector.broadcast %181 : f32 to vector<8x128xf32>
    %183 = arith.mulf %164, %182 : vector<8x128xf32>
    %184 = arith.addf %161, %183 : vector<8x128xf32>
    %c7_24 = arith.constant 7 : index
    %185 = arith.index_cast %3 : i32 to index
    %c0_25 = arith.constant 0 : index
    %186 = vector.load %arg1[%c7_24, %185, %c0_25] : memref<32x8x128xf32, #tpu.memory_space<vmem>>, vector<1x8x128xf32>
    %187 = vector.shape_cast %186 : vector<1x8x128xf32> to vector<8x128xf32>
    %c35 = arith.constant 35 : index
    %188 = memref.load %arg2[%c35] : memref<160xf32, #tpu.memory_space<smem>>
    %189 = vector.broadcast %188 : f32 to vector<8x128xf32>
    %190 = arith.mulf %187, %189 : vector<8x128xf32>
    %191 = arith.addf %168, %190 : vector<8x128xf32>
    %c36 = arith.constant 36 : index
    %192 = memref.load %arg2[%c36] : memref<160xf32, #tpu.memory_space<smem>>
    %193 = vector.broadcast %192 : f32 to vector<8x128xf32>
    %194 = arith.mulf %187, %193 : vector<8x128xf32>
    %195 = arith.addf %172, %194 : vector<8x128xf32>
    %c37 = arith.constant 37 : index
    %196 = memref.load %arg2[%c37] : memref<160xf32, #tpu.memory_space<smem>>
    %197 = vector.broadcast %196 : f32 to vector<8x128xf32>
    %198 = arith.mulf %187, %197 : vector<8x128xf32>
    %199 = arith.addf %176, %198 : vector<8x128xf32>
    %c38 = arith.constant 38 : index
    %200 = memref.load %arg2[%c38] : memref<160xf32, #tpu.memory_space<smem>>
    %201 = vector.broadcast %200 : f32 to vector<8x128xf32>
    %202 = arith.mulf %187, %201 : vector<8x128xf32>
    %203 = arith.addf %180, %202 : vector<8x128xf32>
    %c39 = arith.constant 39 : index
    %204 = memref.load %arg2[%c39] : memref<160xf32, #tpu.memory_space<smem>>
    %205 = vector.broadcast %204 : f32 to vector<8x128xf32>
    %206 = arith.mulf %187, %205 : vector<8x128xf32>
    %207 = arith.addf %184, %206 : vector<8x128xf32>
    %c8_26 = arith.constant 8 : index
    %208 = arith.index_cast %3 : i32 to index
    %c0_27 = arith.constant 0 : index
    %209 = vector.load %arg1[%c8_26, %208, %c0_27] : memref<32x8x128xf32, #tpu.memory_space<vmem>>, vector<1x8x128xf32>
    %210 = vector.shape_cast %209 : vector<1x8x128xf32> to vector<8x128xf32>
    %c40 = arith.constant 40 : index
    %211 = memref.load %arg2[%c40] : memref<160xf32, #tpu.memory_space<smem>>
    %212 = vector.broadcast %211 : f32 to vector<8x128xf32>
    %213 = arith.mulf %210, %212 : vector<8x128xf32>
    %214 = arith.addf %191, %213 : vector<8x128xf32>
    %c41 = arith.constant 41 : index
    %215 = memref.load %arg2[%c41] : memref<160xf32, #tpu.memory_space<smem>>
    %216 = vector.broadcast %215 : f32 to vector<8x128xf32>
    %217 = arith.mulf %210, %216 : vector<8x128xf32>
    %218 = arith.addf %195, %217 : vector<8x128xf32>
    %c42 = arith.constant 42 : index
    %219 = memref.load %arg2[%c42] : memref<160xf32, #tpu.memory_space<smem>>
    %220 = vector.broadcast %219 : f32 to vector<8x128xf32>
    %221 = arith.mulf %210, %220 : vector<8x128xf32>
    %222 = arith.addf %199, %221 : vector<8x128xf32>
    %c43 = arith.constant 43 : index
    %223 = memref.load %arg2[%c43] : memref<160xf32, #tpu.memory_space<smem>>
    %224 = vector.broadcast %223 : f32 to vector<8x128xf32>
    %225 = arith.mulf %210, %224 : vector<8x128xf32>
    %226 = arith.addf %203, %225 : vector<8x128xf32>
    %c44 = arith.constant 44 : index
    %227 = memref.load %arg2[%c44] : memref<160xf32, #tpu.memory_space<smem>>
    %228 = vector.broadcast %227 : f32 to vector<8x128xf32>
    %229 = arith.mulf %210, %228 : vector<8x128xf32>
    %230 = arith.addf %207, %229 : vector<8x128xf32>
    %c9_28 = arith.constant 9 : index
    %231 = arith.index_cast %3 : i32 to index
    %c0_29 = arith.constant 0 : index
    %232 = vector.load %arg1[%c9_28, %231, %c0_29] : memref<32x8x128xf32, #tpu.memory_space<vmem>>, vector<1x8x128xf32>
    %233 = vector.shape_cast %232 : vector<1x8x128xf32> to vector<8x128xf32>
    %c45 = arith.constant 45 : index
    %234 = memref.load %arg2[%c45] : memref<160xf32, #tpu.memory_space<smem>>
    %235 = vector.broadcast %234 : f32 to vector<8x128xf32>
    %236 = arith.mulf %233, %235 : vector<8x128xf32>
    %237 = arith.addf %214, %236 : vector<8x128xf32>
    %c46 = arith.constant 46 : index
    %238 = memref.load %arg2[%c46] : memref<160xf32, #tpu.memory_space<smem>>
    %239 = vector.broadcast %238 : f32 to vector<8x128xf32>
    %240 = arith.mulf %233, %239 : vector<8x128xf32>
    %241 = arith.addf %218, %240 : vector<8x128xf32>
    %c47 = arith.constant 47 : index
    %242 = memref.load %arg2[%c47] : memref<160xf32, #tpu.memory_space<smem>>
    %243 = vector.broadcast %242 : f32 to vector<8x128xf32>
    %244 = arith.mulf %233, %243 : vector<8x128xf32>
    %245 = arith.addf %222, %244 : vector<8x128xf32>
    %c48 = arith.constant 48 : index
    %246 = memref.load %arg2[%c48] : memref<160xf32, #tpu.memory_space<smem>>
    %247 = vector.broadcast %246 : f32 to vector<8x128xf32>
    %248 = arith.mulf %233, %247 : vector<8x128xf32>
    %249 = arith.addf %226, %248 : vector<8x128xf32>
    %c49 = arith.constant 49 : index
    %250 = memref.load %arg2[%c49] : memref<160xf32, #tpu.memory_space<smem>>
    %251 = vector.broadcast %250 : f32 to vector<8x128xf32>
    %252 = arith.mulf %233, %251 : vector<8x128xf32>
    %253 = arith.addf %230, %252 : vector<8x128xf32>
    %c10_30 = arith.constant 10 : index
    %254 = arith.index_cast %3 : i32 to index
    %c0_31 = arith.constant 0 : index
    %255 = vector.load %arg1[%c10_30, %254, %c0_31] : memref<32x8x128xf32, #tpu.memory_space<vmem>>, vector<1x8x128xf32>
    %256 = vector.shape_cast %255 : vector<1x8x128xf32> to vector<8x128xf32>
    %c50 = arith.constant 50 : index
    %257 = memref.load %arg2[%c50] : memref<160xf32, #tpu.memory_space<smem>>
    %258 = vector.broadcast %257 : f32 to vector<8x128xf32>
    %259 = arith.mulf %256, %258 : vector<8x128xf32>
    %260 = arith.addf %237, %259 : vector<8x128xf32>
    %c51 = arith.constant 51 : index
    %261 = memref.load %arg2[%c51] : memref<160xf32, #tpu.memory_space<smem>>
    %262 = vector.broadcast %261 : f32 to vector<8x128xf32>
    %263 = arith.mulf %256, %262 : vector<8x128xf32>
    %264 = arith.addf %241, %263 : vector<8x128xf32>
    %c52 = arith.constant 52 : index
    %265 = memref.load %arg2[%c52] : memref<160xf32, #tpu.memory_space<smem>>
    %266 = vector.broadcast %265 : f32 to vector<8x128xf32>
    %267 = arith.mulf %256, %266 : vector<8x128xf32>
    %268 = arith.addf %245, %267 : vector<8x128xf32>
    %c53 = arith.constant 53 : index
    %269 = memref.load %arg2[%c53] : memref<160xf32, #tpu.memory_space<smem>>
    %270 = vector.broadcast %269 : f32 to vector<8x128xf32>
    %271 = arith.mulf %256, %270 : vector<8x128xf32>
    %272 = arith.addf %249, %271 : vector<8x128xf32>
    %c54 = arith.constant 54 : index
    %273 = memref.load %arg2[%c54] : memref<160xf32, #tpu.memory_space<smem>>
    %274 = vector.broadcast %273 : f32 to vector<8x128xf32>
    %275 = arith.mulf %256, %274 : vector<8x128xf32>
    %276 = arith.addf %253, %275 : vector<8x128xf32>
    %c11_32 = arith.constant 11 : index
    %277 = arith.index_cast %3 : i32 to index
    %c0_33 = arith.constant 0 : index
    %278 = vector.load %arg1[%c11_32, %277, %c0_33] : memref<32x8x128xf32, #tpu.memory_space<vmem>>, vector<1x8x128xf32>
    %279 = vector.shape_cast %278 : vector<1x8x128xf32> to vector<8x128xf32>
    %c55 = arith.constant 55 : index
    %280 = memref.load %arg2[%c55] : memref<160xf32, #tpu.memory_space<smem>>
    %281 = vector.broadcast %280 : f32 to vector<8x128xf32>
    %282 = arith.mulf %279, %281 : vector<8x128xf32>
    %283 = arith.addf %260, %282 : vector<8x128xf32>
    %c56 = arith.constant 56 : index
    %284 = memref.load %arg2[%c56] : memref<160xf32, #tpu.memory_space<smem>>
    %285 = vector.broadcast %284 : f32 to vector<8x128xf32>
    %286 = arith.mulf %279, %285 : vector<8x128xf32>
    %287 = arith.addf %264, %286 : vector<8x128xf32>
    %c57 = arith.constant 57 : index
    %288 = memref.load %arg2[%c57] : memref<160xf32, #tpu.memory_space<smem>>
    %289 = vector.broadcast %288 : f32 to vector<8x128xf32>
    %290 = arith.mulf %279, %289 : vector<8x128xf32>
    %291 = arith.addf %268, %290 : vector<8x128xf32>
    %c58 = arith.constant 58 : index
    %292 = memref.load %arg2[%c58] : memref<160xf32, #tpu.memory_space<smem>>
    %293 = vector.broadcast %292 : f32 to vector<8x128xf32>
    %294 = arith.mulf %279, %293 : vector<8x128xf32>
    %295 = arith.addf %272, %294 : vector<8x128xf32>
    %c59 = arith.constant 59 : index
    %296 = memref.load %arg2[%c59] : memref<160xf32, #tpu.memory_space<smem>>
    %297 = vector.broadcast %296 : f32 to vector<8x128xf32>
    %298 = arith.mulf %279, %297 : vector<8x128xf32>
    %299 = arith.addf %276, %298 : vector<8x128xf32>
    %c12_34 = arith.constant 12 : index
    %300 = arith.index_cast %3 : i32 to index
    %c0_35 = arith.constant 0 : index
    %301 = vector.load %arg1[%c12_34, %300, %c0_35] : memref<32x8x128xf32, #tpu.memory_space<vmem>>, vector<1x8x128xf32>
    %302 = vector.shape_cast %301 : vector<1x8x128xf32> to vector<8x128xf32>
    %c60 = arith.constant 60 : index
    %303 = memref.load %arg2[%c60] : memref<160xf32, #tpu.memory_space<smem>>
    %304 = vector.broadcast %303 : f32 to vector<8x128xf32>
    %305 = arith.mulf %302, %304 : vector<8x128xf32>
    %306 = arith.addf %283, %305 : vector<8x128xf32>
    %c61 = arith.constant 61 : index
    %307 = memref.load %arg2[%c61] : memref<160xf32, #tpu.memory_space<smem>>
    %308 = vector.broadcast %307 : f32 to vector<8x128xf32>
    %309 = arith.mulf %302, %308 : vector<8x128xf32>
    %310 = arith.addf %287, %309 : vector<8x128xf32>
    %c62 = arith.constant 62 : index
    %311 = memref.load %arg2[%c62] : memref<160xf32, #tpu.memory_space<smem>>
    %312 = vector.broadcast %311 : f32 to vector<8x128xf32>
    %313 = arith.mulf %302, %312 : vector<8x128xf32>
    %314 = arith.addf %291, %313 : vector<8x128xf32>
    %c63 = arith.constant 63 : index
    %315 = memref.load %arg2[%c63] : memref<160xf32, #tpu.memory_space<smem>>
    %316 = vector.broadcast %315 : f32 to vector<8x128xf32>
    %317 = arith.mulf %302, %316 : vector<8x128xf32>
    %318 = arith.addf %295, %317 : vector<8x128xf32>
    %c64 = arith.constant 64 : index
    %319 = memref.load %arg2[%c64] : memref<160xf32, #tpu.memory_space<smem>>
    %320 = vector.broadcast %319 : f32 to vector<8x128xf32>
    %321 = arith.mulf %302, %320 : vector<8x128xf32>
    %322 = arith.addf %299, %321 : vector<8x128xf32>
    %c13_36 = arith.constant 13 : index
    %323 = arith.index_cast %3 : i32 to index
    %c0_37 = arith.constant 0 : index
    %324 = vector.load %arg1[%c13_36, %323, %c0_37] : memref<32x8x128xf32, #tpu.memory_space<vmem>>, vector<1x8x128xf32>
    %325 = vector.shape_cast %324 : vector<1x8x128xf32> to vector<8x128xf32>
    %c65 = arith.constant 65 : index
    %326 = memref.load %arg2[%c65] : memref<160xf32, #tpu.memory_space<smem>>
    %327 = vector.broadcast %326 : f32 to vector<8x128xf32>
    %328 = arith.mulf %325, %327 : vector<8x128xf32>
    %329 = arith.addf %306, %328 : vector<8x128xf32>
    %c66 = arith.constant 66 : index
    %330 = memref.load %arg2[%c66] : memref<160xf32, #tpu.memory_space<smem>>
    %331 = vector.broadcast %330 : f32 to vector<8x128xf32>
    %332 = arith.mulf %325, %331 : vector<8x128xf32>
    %333 = arith.addf %310, %332 : vector<8x128xf32>
    %c67 = arith.constant 67 : index
    %334 = memref.load %arg2[%c67] : memref<160xf32, #tpu.memory_space<smem>>
    %335 = vector.broadcast %334 : f32 to vector<8x128xf32>
    %336 = arith.mulf %325, %335 : vector<8x128xf32>
    %337 = arith.addf %314, %336 : vector<8x128xf32>
    %c68 = arith.constant 68 : index
    %338 = memref.load %arg2[%c68] : memref<160xf32, #tpu.memory_space<smem>>
    %339 = vector.broadcast %338 : f32 to vector<8x128xf32>
    %340 = arith.mulf %325, %339 : vector<8x128xf32>
    %341 = arith.addf %318, %340 : vector<8x128xf32>
    %c69 = arith.constant 69 : index
    %342 = memref.load %arg2[%c69] : memref<160xf32, #tpu.memory_space<smem>>
    %343 = vector.broadcast %342 : f32 to vector<8x128xf32>
    %344 = arith.mulf %325, %343 : vector<8x128xf32>
    %345 = arith.addf %322, %344 : vector<8x128xf32>
    %c14_38 = arith.constant 14 : index
    %346 = arith.index_cast %3 : i32 to index
    %c0_39 = arith.constant 0 : index
    %347 = vector.load %arg1[%c14_38, %346, %c0_39] : memref<32x8x128xf32, #tpu.memory_space<vmem>>, vector<1x8x128xf32>
    %348 = vector.shape_cast %347 : vector<1x8x128xf32> to vector<8x128xf32>
    %c70 = arith.constant 70 : index
    %349 = memref.load %arg2[%c70] : memref<160xf32, #tpu.memory_space<smem>>
    %350 = vector.broadcast %349 : f32 to vector<8x128xf32>
    %351 = arith.mulf %348, %350 : vector<8x128xf32>
    %352 = arith.addf %329, %351 : vector<8x128xf32>
    %c71 = arith.constant 71 : index
    %353 = memref.load %arg2[%c71] : memref<160xf32, #tpu.memory_space<smem>>
    %354 = vector.broadcast %353 : f32 to vector<8x128xf32>
    %355 = arith.mulf %348, %354 : vector<8x128xf32>
    %356 = arith.addf %333, %355 : vector<8x128xf32>
    %c72 = arith.constant 72 : index
    %357 = memref.load %arg2[%c72] : memref<160xf32, #tpu.memory_space<smem>>
    %358 = vector.broadcast %357 : f32 to vector<8x128xf32>
    %359 = arith.mulf %348, %358 : vector<8x128xf32>
    %360 = arith.addf %337, %359 : vector<8x128xf32>
    %c73 = arith.constant 73 : index
    %361 = memref.load %arg2[%c73] : memref<160xf32, #tpu.memory_space<smem>>
    %362 = vector.broadcast %361 : f32 to vector<8x128xf32>
    %363 = arith.mulf %348, %362 : vector<8x128xf32>
    %364 = arith.addf %341, %363 : vector<8x128xf32>
    %c74 = arith.constant 74 : index
    %365 = memref.load %arg2[%c74] : memref<160xf32, #tpu.memory_space<smem>>
    %366 = vector.broadcast %365 : f32 to vector<8x128xf32>
    %367 = arith.mulf %348, %366 : vector<8x128xf32>
    %368 = arith.addf %345, %367 : vector<8x128xf32>
    %c15_40 = arith.constant 15 : index
    %369 = arith.index_cast %3 : i32 to index
    %c0_41 = arith.constant 0 : index
    %370 = vector.load %arg1[%c15_40, %369, %c0_41] : memref<32x8x128xf32, #tpu.memory_space<vmem>>, vector<1x8x128xf32>
    %371 = vector.shape_cast %370 : vector<1x8x128xf32> to vector<8x128xf32>
    %c75 = arith.constant 75 : index
    %372 = memref.load %arg2[%c75] : memref<160xf32, #tpu.memory_space<smem>>
    %373 = vector.broadcast %372 : f32 to vector<8x128xf32>
    %374 = arith.mulf %371, %373 : vector<8x128xf32>
    %375 = arith.addf %352, %374 : vector<8x128xf32>
    %c76 = arith.constant 76 : index
    %376 = memref.load %arg2[%c76] : memref<160xf32, #tpu.memory_space<smem>>
    %377 = vector.broadcast %376 : f32 to vector<8x128xf32>
    %378 = arith.mulf %371, %377 : vector<8x128xf32>
    %379 = arith.addf %356, %378 : vector<8x128xf32>
    %c77 = arith.constant 77 : index
    %380 = memref.load %arg2[%c77] : memref<160xf32, #tpu.memory_space<smem>>
    %381 = vector.broadcast %380 : f32 to vector<8x128xf32>
    %382 = arith.mulf %371, %381 : vector<8x128xf32>
    %383 = arith.addf %360, %382 : vector<8x128xf32>
    %c78 = arith.constant 78 : index
    %384 = memref.load %arg2[%c78] : memref<160xf32, #tpu.memory_space<smem>>
    %385 = vector.broadcast %384 : f32 to vector<8x128xf32>
    %386 = arith.mulf %371, %385 : vector<8x128xf32>
    %387 = arith.addf %364, %386 : vector<8x128xf32>
    %c79 = arith.constant 79 : index
    %388 = memref.load %arg2[%c79] : memref<160xf32, #tpu.memory_space<smem>>
    %389 = vector.broadcast %388 : f32 to vector<8x128xf32>
    %390 = arith.mulf %371, %389 : vector<8x128xf32>
    %391 = arith.addf %368, %390 : vector<8x128xf32>
    %c16_42 = arith.constant 16 : index
    %392 = arith.index_cast %3 : i32 to index
    %c0_43 = arith.constant 0 : index
    %393 = vector.load %arg1[%c16_42, %392, %c0_43] : memref<32x8x128xf32, #tpu.memory_space<vmem>>, vector<1x8x128xf32>
    %394 = vector.shape_cast %393 : vector<1x8x128xf32> to vector<8x128xf32>
    %c80 = arith.constant 80 : index
    %395 = memref.load %arg2[%c80] : memref<160xf32, #tpu.memory_space<smem>>
    %396 = vector.broadcast %395 : f32 to vector<8x128xf32>
    %397 = arith.mulf %394, %396 : vector<8x128xf32>
    %398 = arith.addf %375, %397 : vector<8x128xf32>
    %c81 = arith.constant 81 : index
    %399 = memref.load %arg2[%c81] : memref<160xf32, #tpu.memory_space<smem>>
    %400 = vector.broadcast %399 : f32 to vector<8x128xf32>
    %401 = arith.mulf %394, %400 : vector<8x128xf32>
    %402 = arith.addf %379, %401 : vector<8x128xf32>
    %c82 = arith.constant 82 : index
    %403 = memref.load %arg2[%c82] : memref<160xf32, #tpu.memory_space<smem>>
    %404 = vector.broadcast %403 : f32 to vector<8x128xf32>
    %405 = arith.mulf %394, %404 : vector<8x128xf32>
    %406 = arith.addf %383, %405 : vector<8x128xf32>
    %c83 = arith.constant 83 : index
    %407 = memref.load %arg2[%c83] : memref<160xf32, #tpu.memory_space<smem>>
    %408 = vector.broadcast %407 : f32 to vector<8x128xf32>
    %409 = arith.mulf %394, %408 : vector<8x128xf32>
    %410 = arith.addf %387, %409 : vector<8x128xf32>
    %c84 = arith.constant 84 : index
    %411 = memref.load %arg2[%c84] : memref<160xf32, #tpu.memory_space<smem>>
    %412 = vector.broadcast %411 : f32 to vector<8x128xf32>
    %413 = arith.mulf %394, %412 : vector<8x128xf32>
    %414 = arith.addf %391, %413 : vector<8x128xf32>
    %c17_44 = arith.constant 17 : index
    %415 = arith.index_cast %3 : i32 to index
    %c0_45 = arith.constant 0 : index
    %416 = vector.load %arg1[%c17_44, %415, %c0_45] : memref<32x8x128xf32, #tpu.memory_space<vmem>>, vector<1x8x128xf32>
    %417 = vector.shape_cast %416 : vector<1x8x128xf32> to vector<8x128xf32>
    %c85 = arith.constant 85 : index
    %418 = memref.load %arg2[%c85] : memref<160xf32, #tpu.memory_space<smem>>
    %419 = vector.broadcast %418 : f32 to vector<8x128xf32>
    %420 = arith.mulf %417, %419 : vector<8x128xf32>
    %421 = arith.addf %398, %420 : vector<8x128xf32>
    %c86 = arith.constant 86 : index
    %422 = memref.load %arg2[%c86] : memref<160xf32, #tpu.memory_space<smem>>
    %423 = vector.broadcast %422 : f32 to vector<8x128xf32>
    %424 = arith.mulf %417, %423 : vector<8x128xf32>
    %425 = arith.addf %402, %424 : vector<8x128xf32>
    %c87 = arith.constant 87 : index
    %426 = memref.load %arg2[%c87] : memref<160xf32, #tpu.memory_space<smem>>
    %427 = vector.broadcast %426 : f32 to vector<8x128xf32>
    %428 = arith.mulf %417, %427 : vector<8x128xf32>
    %429 = arith.addf %406, %428 : vector<8x128xf32>
    %c88 = arith.constant 88 : index
    %430 = memref.load %arg2[%c88] : memref<160xf32, #tpu.memory_space<smem>>
    %431 = vector.broadcast %430 : f32 to vector<8x128xf32>
    %432 = arith.mulf %417, %431 : vector<8x128xf32>
    %433 = arith.addf %410, %432 : vector<8x128xf32>
    %c89 = arith.constant 89 : index
    %434 = memref.load %arg2[%c89] : memref<160xf32, #tpu.memory_space<smem>>
    %435 = vector.broadcast %434 : f32 to vector<8x128xf32>
    %436 = arith.mulf %417, %435 : vector<8x128xf32>
    %437 = arith.addf %414, %436 : vector<8x128xf32>
    %c18_46 = arith.constant 18 : index
    %438 = arith.index_cast %3 : i32 to index
    %c0_47 = arith.constant 0 : index
    %439 = vector.load %arg1[%c18_46, %438, %c0_47] : memref<32x8x128xf32, #tpu.memory_space<vmem>>, vector<1x8x128xf32>
    %440 = vector.shape_cast %439 : vector<1x8x128xf32> to vector<8x128xf32>
    %c90 = arith.constant 90 : index
    %441 = memref.load %arg2[%c90] : memref<160xf32, #tpu.memory_space<smem>>
    %442 = vector.broadcast %441 : f32 to vector<8x128xf32>
    %443 = arith.mulf %440, %442 : vector<8x128xf32>
    %444 = arith.addf %421, %443 : vector<8x128xf32>
    %c91 = arith.constant 91 : index
    %445 = memref.load %arg2[%c91] : memref<160xf32, #tpu.memory_space<smem>>
    %446 = vector.broadcast %445 : f32 to vector<8x128xf32>
    %447 = arith.mulf %440, %446 : vector<8x128xf32>
    %448 = arith.addf %425, %447 : vector<8x128xf32>
    %c92 = arith.constant 92 : index
    %449 = memref.load %arg2[%c92] : memref<160xf32, #tpu.memory_space<smem>>
    %450 = vector.broadcast %449 : f32 to vector<8x128xf32>
    %451 = arith.mulf %440, %450 : vector<8x128xf32>
    %452 = arith.addf %429, %451 : vector<8x128xf32>
    %c93 = arith.constant 93 : index
    %453 = memref.load %arg2[%c93] : memref<160xf32, #tpu.memory_space<smem>>
    %454 = vector.broadcast %453 : f32 to vector<8x128xf32>
    %455 = arith.mulf %440, %454 : vector<8x128xf32>
    %456 = arith.addf %433, %455 : vector<8x128xf32>
    %c94 = arith.constant 94 : index
    %457 = memref.load %arg2[%c94] : memref<160xf32, #tpu.memory_space<smem>>
    %458 = vector.broadcast %457 : f32 to vector<8x128xf32>
    %459 = arith.mulf %440, %458 : vector<8x128xf32>
    %460 = arith.addf %437, %459 : vector<8x128xf32>
    %c19_48 = arith.constant 19 : index
    %461 = arith.index_cast %3 : i32 to index
    %c0_49 = arith.constant 0 : index
    %462 = vector.load %arg1[%c19_48, %461, %c0_49] : memref<32x8x128xf32, #tpu.memory_space<vmem>>, vector<1x8x128xf32>
    %463 = vector.shape_cast %462 : vector<1x8x128xf32> to vector<8x128xf32>
    %c95 = arith.constant 95 : index
    %464 = memref.load %arg2[%c95] : memref<160xf32, #tpu.memory_space<smem>>
    %465 = vector.broadcast %464 : f32 to vector<8x128xf32>
    %466 = arith.mulf %463, %465 : vector<8x128xf32>
    %467 = arith.addf %444, %466 : vector<8x128xf32>
    %c96 = arith.constant 96 : index
    %468 = memref.load %arg2[%c96] : memref<160xf32, #tpu.memory_space<smem>>
    %469 = vector.broadcast %468 : f32 to vector<8x128xf32>
    %470 = arith.mulf %463, %469 : vector<8x128xf32>
    %471 = arith.addf %448, %470 : vector<8x128xf32>
    %c97 = arith.constant 97 : index
    %472 = memref.load %arg2[%c97] : memref<160xf32, #tpu.memory_space<smem>>
    %473 = vector.broadcast %472 : f32 to vector<8x128xf32>
    %474 = arith.mulf %463, %473 : vector<8x128xf32>
    %475 = arith.addf %452, %474 : vector<8x128xf32>
    %c98 = arith.constant 98 : index
    %476 = memref.load %arg2[%c98] : memref<160xf32, #tpu.memory_space<smem>>
    %477 = vector.broadcast %476 : f32 to vector<8x128xf32>
    %478 = arith.mulf %463, %477 : vector<8x128xf32>
    %479 = arith.addf %456, %478 : vector<8x128xf32>
    %c99 = arith.constant 99 : index
    %480 = memref.load %arg2[%c99] : memref<160xf32, #tpu.memory_space<smem>>
    %481 = vector.broadcast %480 : f32 to vector<8x128xf32>
    %482 = arith.mulf %463, %481 : vector<8x128xf32>
    %483 = arith.addf %460, %482 : vector<8x128xf32>
    %c20_50 = arith.constant 20 : index
    %484 = arith.index_cast %3 : i32 to index
    %c0_51 = arith.constant 0 : index
    %485 = vector.load %arg1[%c20_50, %484, %c0_51] : memref<32x8x128xf32, #tpu.memory_space<vmem>>, vector<1x8x128xf32>
    %486 = vector.shape_cast %485 : vector<1x8x128xf32> to vector<8x128xf32>
    %c100 = arith.constant 100 : index
    %487 = memref.load %arg2[%c100] : memref<160xf32, #tpu.memory_space<smem>>
    %488 = vector.broadcast %487 : f32 to vector<8x128xf32>
    %489 = arith.mulf %486, %488 : vector<8x128xf32>
    %490 = arith.addf %467, %489 : vector<8x128xf32>
    %c101 = arith.constant 101 : index
    %491 = memref.load %arg2[%c101] : memref<160xf32, #tpu.memory_space<smem>>
    %492 = vector.broadcast %491 : f32 to vector<8x128xf32>
    %493 = arith.mulf %486, %492 : vector<8x128xf32>
    %494 = arith.addf %471, %493 : vector<8x128xf32>
    %c102 = arith.constant 102 : index
    %495 = memref.load %arg2[%c102] : memref<160xf32, #tpu.memory_space<smem>>
    %496 = vector.broadcast %495 : f32 to vector<8x128xf32>
    %497 = arith.mulf %486, %496 : vector<8x128xf32>
    %498 = arith.addf %475, %497 : vector<8x128xf32>
    %c103 = arith.constant 103 : index
    %499 = memref.load %arg2[%c103] : memref<160xf32, #tpu.memory_space<smem>>
    %500 = vector.broadcast %499 : f32 to vector<8x128xf32>
    %501 = arith.mulf %486, %500 : vector<8x128xf32>
    %502 = arith.addf %479, %501 : vector<8x128xf32>
    %c104 = arith.constant 104 : index
    %503 = memref.load %arg2[%c104] : memref<160xf32, #tpu.memory_space<smem>>
    %504 = vector.broadcast %503 : f32 to vector<8x128xf32>
    %505 = arith.mulf %486, %504 : vector<8x128xf32>
    %506 = arith.addf %483, %505 : vector<8x128xf32>
    %c21_52 = arith.constant 21 : index
    %507 = arith.index_cast %3 : i32 to index
    %c0_53 = arith.constant 0 : index
    %508 = vector.load %arg1[%c21_52, %507, %c0_53] : memref<32x8x128xf32, #tpu.memory_space<vmem>>, vector<1x8x128xf32>
    %509 = vector.shape_cast %508 : vector<1x8x128xf32> to vector<8x128xf32>
    %c105 = arith.constant 105 : index
    %510 = memref.load %arg2[%c105] : memref<160xf32, #tpu.memory_space<smem>>
    %511 = vector.broadcast %510 : f32 to vector<8x128xf32>
    %512 = arith.mulf %509, %511 : vector<8x128xf32>
    %513 = arith.addf %490, %512 : vector<8x128xf32>
    %c106 = arith.constant 106 : index
    %514 = memref.load %arg2[%c106] : memref<160xf32, #tpu.memory_space<smem>>
    %515 = vector.broadcast %514 : f32 to vector<8x128xf32>
    %516 = arith.mulf %509, %515 : vector<8x128xf32>
    %517 = arith.addf %494, %516 : vector<8x128xf32>
    %c107 = arith.constant 107 : index
    %518 = memref.load %arg2[%c107] : memref<160xf32, #tpu.memory_space<smem>>
    %519 = vector.broadcast %518 : f32 to vector<8x128xf32>
    %520 = arith.mulf %509, %519 : vector<8x128xf32>
    %521 = arith.addf %498, %520 : vector<8x128xf32>
    %c108 = arith.constant 108 : index
    %522 = memref.load %arg2[%c108] : memref<160xf32, #tpu.memory_space<smem>>
    %523 = vector.broadcast %522 : f32 to vector<8x128xf32>
    %524 = arith.mulf %509, %523 : vector<8x128xf32>
    %525 = arith.addf %502, %524 : vector<8x128xf32>
    %c109 = arith.constant 109 : index
    %526 = memref.load %arg2[%c109] : memref<160xf32, #tpu.memory_space<smem>>
    %527 = vector.broadcast %526 : f32 to vector<8x128xf32>
    %528 = arith.mulf %509, %527 : vector<8x128xf32>
    %529 = arith.addf %506, %528 : vector<8x128xf32>
    %c22_54 = arith.constant 22 : index
    %530 = arith.index_cast %3 : i32 to index
    %c0_55 = arith.constant 0 : index
    %531 = vector.load %arg1[%c22_54, %530, %c0_55] : memref<32x8x128xf32, #tpu.memory_space<vmem>>, vector<1x8x128xf32>
    %532 = vector.shape_cast %531 : vector<1x8x128xf32> to vector<8x128xf32>
    %c110 = arith.constant 110 : index
    %533 = memref.load %arg2[%c110] : memref<160xf32, #tpu.memory_space<smem>>
    %534 = vector.broadcast %533 : f32 to vector<8x128xf32>
    %535 = arith.mulf %532, %534 : vector<8x128xf32>
    %536 = arith.addf %513, %535 : vector<8x128xf32>
    %c111 = arith.constant 111 : index
    %537 = memref.load %arg2[%c111] : memref<160xf32, #tpu.memory_space<smem>>
    %538 = vector.broadcast %537 : f32 to vector<8x128xf32>
    %539 = arith.mulf %532, %538 : vector<8x128xf32>
    %540 = arith.addf %517, %539 : vector<8x128xf32>
    %c112 = arith.constant 112 : index
    %541 = memref.load %arg2[%c112] : memref<160xf32, #tpu.memory_space<smem>>
    %542 = vector.broadcast %541 : f32 to vector<8x128xf32>
    %543 = arith.mulf %532, %542 : vector<8x128xf32>
    %544 = arith.addf %521, %543 : vector<8x128xf32>
    %c113 = arith.constant 113 : index
    %545 = memref.load %arg2[%c113] : memref<160xf32, #tpu.memory_space<smem>>
    %546 = vector.broadcast %545 : f32 to vector<8x128xf32>
    %547 = arith.mulf %532, %546 : vector<8x128xf32>
    %548 = arith.addf %525, %547 : vector<8x128xf32>
    %c114 = arith.constant 114 : index
    %549 = memref.load %arg2[%c114] : memref<160xf32, #tpu.memory_space<smem>>
    %550 = vector.broadcast %549 : f32 to vector<8x128xf32>
    %551 = arith.mulf %532, %550 : vector<8x128xf32>
    %552 = arith.addf %529, %551 : vector<8x128xf32>
    %c23_56 = arith.constant 23 : index
    %553 = arith.index_cast %3 : i32 to index
    %c0_57 = arith.constant 0 : index
    %554 = vector.load %arg1[%c23_56, %553, %c0_57] : memref<32x8x128xf32, #tpu.memory_space<vmem>>, vector<1x8x128xf32>
    %555 = vector.shape_cast %554 : vector<1x8x128xf32> to vector<8x128xf32>
    %c115 = arith.constant 115 : index
    %556 = memref.load %arg2[%c115] : memref<160xf32, #tpu.memory_space<smem>>
    %557 = vector.broadcast %556 : f32 to vector<8x128xf32>
    %558 = arith.mulf %555, %557 : vector<8x128xf32>
    %559 = arith.addf %536, %558 : vector<8x128xf32>
    %c116 = arith.constant 116 : index
    %560 = memref.load %arg2[%c116] : memref<160xf32, #tpu.memory_space<smem>>
    %561 = vector.broadcast %560 : f32 to vector<8x128xf32>
    %562 = arith.mulf %555, %561 : vector<8x128xf32>
    %563 = arith.addf %540, %562 : vector<8x128xf32>
    %c117 = arith.constant 117 : index
    %564 = memref.load %arg2[%c117] : memref<160xf32, #tpu.memory_space<smem>>
    %565 = vector.broadcast %564 : f32 to vector<8x128xf32>
    %566 = arith.mulf %555, %565 : vector<8x128xf32>
    %567 = arith.addf %544, %566 : vector<8x128xf32>
    %c118 = arith.constant 118 : index
    %568 = memref.load %arg2[%c118] : memref<160xf32, #tpu.memory_space<smem>>
    %569 = vector.broadcast %568 : f32 to vector<8x128xf32>
    %570 = arith.mulf %555, %569 : vector<8x128xf32>
    %571 = arith.addf %548, %570 : vector<8x128xf32>
    %c119 = arith.constant 119 : index
    %572 = memref.load %arg2[%c119] : memref<160xf32, #tpu.memory_space<smem>>
    %573 = vector.broadcast %572 : f32 to vector<8x128xf32>
    %574 = arith.mulf %555, %573 : vector<8x128xf32>
    %575 = arith.addf %552, %574 : vector<8x128xf32>
    %c24_58 = arith.constant 24 : index
    %576 = arith.index_cast %3 : i32 to index
    %c0_59 = arith.constant 0 : index
    %577 = vector.load %arg1[%c24_58, %576, %c0_59] : memref<32x8x128xf32, #tpu.memory_space<vmem>>, vector<1x8x128xf32>
    %578 = vector.shape_cast %577 : vector<1x8x128xf32> to vector<8x128xf32>
    %c120 = arith.constant 120 : index
    %579 = memref.load %arg2[%c120] : memref<160xf32, #tpu.memory_space<smem>>
    %580 = vector.broadcast %579 : f32 to vector<8x128xf32>
    %581 = arith.mulf %578, %580 : vector<8x128xf32>
    %582 = arith.addf %559, %581 : vector<8x128xf32>
    %c121 = arith.constant 121 : index
    %583 = memref.load %arg2[%c121] : memref<160xf32, #tpu.memory_space<smem>>
    %584 = vector.broadcast %583 : f32 to vector<8x128xf32>
    %585 = arith.mulf %578, %584 : vector<8x128xf32>
    %586 = arith.addf %563, %585 : vector<8x128xf32>
    %c122 = arith.constant 122 : index
    %587 = memref.load %arg2[%c122] : memref<160xf32, #tpu.memory_space<smem>>
    %588 = vector.broadcast %587 : f32 to vector<8x128xf32>
    %589 = arith.mulf %578, %588 : vector<8x128xf32>
    %590 = arith.addf %567, %589 : vector<8x128xf32>
    %c123 = arith.constant 123 : index
    %591 = memref.load %arg2[%c123] : memref<160xf32, #tpu.memory_space<smem>>
    %592 = vector.broadcast %591 : f32 to vector<8x128xf32>
    %593 = arith.mulf %578, %592 : vector<8x128xf32>
    %594 = arith.addf %571, %593 : vector<8x128xf32>
    %c124 = arith.constant 124 : index
    %595 = memref.load %arg2[%c124] : memref<160xf32, #tpu.memory_space<smem>>
    %596 = vector.broadcast %595 : f32 to vector<8x128xf32>
    %597 = arith.mulf %578, %596 : vector<8x128xf32>
    %598 = arith.addf %575, %597 : vector<8x128xf32>
    %c25_60 = arith.constant 25 : index
    %599 = arith.index_cast %3 : i32 to index
    %c0_61 = arith.constant 0 : index
    %600 = vector.load %arg1[%c25_60, %599, %c0_61] : memref<32x8x128xf32, #tpu.memory_space<vmem>>, vector<1x8x128xf32>
    %601 = vector.shape_cast %600 : vector<1x8x128xf32> to vector<8x128xf32>
    %c125 = arith.constant 125 : index
    %602 = memref.load %arg2[%c125] : memref<160xf32, #tpu.memory_space<smem>>
    %603 = vector.broadcast %602 : f32 to vector<8x128xf32>
    %604 = arith.mulf %601, %603 : vector<8x128xf32>
    %605 = arith.addf %582, %604 : vector<8x128xf32>
    %c126 = arith.constant 126 : index
    %606 = memref.load %arg2[%c126] : memref<160xf32, #tpu.memory_space<smem>>
    %607 = vector.broadcast %606 : f32 to vector<8x128xf32>
    %608 = arith.mulf %601, %607 : vector<8x128xf32>
    %609 = arith.addf %586, %608 : vector<8x128xf32>
    %c127 = arith.constant 127 : index
    %610 = memref.load %arg2[%c127] : memref<160xf32, #tpu.memory_space<smem>>
    %611 = vector.broadcast %610 : f32 to vector<8x128xf32>
    %612 = arith.mulf %601, %611 : vector<8x128xf32>
    %613 = arith.addf %590, %612 : vector<8x128xf32>
    %c128 = arith.constant 128 : index
    %614 = memref.load %arg2[%c128] : memref<160xf32, #tpu.memory_space<smem>>
    %615 = vector.broadcast %614 : f32 to vector<8x128xf32>
    %616 = arith.mulf %601, %615 : vector<8x128xf32>
    %617 = arith.addf %594, %616 : vector<8x128xf32>
    %c129 = arith.constant 129 : index
    %618 = memref.load %arg2[%c129] : memref<160xf32, #tpu.memory_space<smem>>
    %619 = vector.broadcast %618 : f32 to vector<8x128xf32>
    %620 = arith.mulf %601, %619 : vector<8x128xf32>
    %621 = arith.addf %598, %620 : vector<8x128xf32>
    %c26_62 = arith.constant 26 : index
    %622 = arith.index_cast %3 : i32 to index
    %c0_63 = arith.constant 0 : index
    %623 = vector.load %arg1[%c26_62, %622, %c0_63] : memref<32x8x128xf32, #tpu.memory_space<vmem>>, vector<1x8x128xf32>
    %624 = vector.shape_cast %623 : vector<1x8x128xf32> to vector<8x128xf32>
    %c130 = arith.constant 130 : index
    %625 = memref.load %arg2[%c130] : memref<160xf32, #tpu.memory_space<smem>>
    %626 = vector.broadcast %625 : f32 to vector<8x128xf32>
    %627 = arith.mulf %624, %626 : vector<8x128xf32>
    %628 = arith.addf %605, %627 : vector<8x128xf32>
    %c131 = arith.constant 131 : index
    %629 = memref.load %arg2[%c131] : memref<160xf32, #tpu.memory_space<smem>>
    %630 = vector.broadcast %629 : f32 to vector<8x128xf32>
    %631 = arith.mulf %624, %630 : vector<8x128xf32>
    %632 = arith.addf %609, %631 : vector<8x128xf32>
    %c132 = arith.constant 132 : index
    %633 = memref.load %arg2[%c132] : memref<160xf32, #tpu.memory_space<smem>>
    %634 = vector.broadcast %633 : f32 to vector<8x128xf32>
    %635 = arith.mulf %624, %634 : vector<8x128xf32>
    %636 = arith.addf %613, %635 : vector<8x128xf32>
    %c133 = arith.constant 133 : index
    %637 = memref.load %arg2[%c133] : memref<160xf32, #tpu.memory_space<smem>>
    %638 = vector.broadcast %637 : f32 to vector<8x128xf32>
    %639 = arith.mulf %624, %638 : vector<8x128xf32>
    %640 = arith.addf %617, %639 : vector<8x128xf32>
    %c134 = arith.constant 134 : index
    %641 = memref.load %arg2[%c134] : memref<160xf32, #tpu.memory_space<smem>>
    %642 = vector.broadcast %641 : f32 to vector<8x128xf32>
    %643 = arith.mulf %624, %642 : vector<8x128xf32>
    %644 = arith.addf %621, %643 : vector<8x128xf32>
    %c27_64 = arith.constant 27 : index
    %645 = arith.index_cast %3 : i32 to index
    %c0_65 = arith.constant 0 : index
    %646 = vector.load %arg1[%c27_64, %645, %c0_65] : memref<32x8x128xf32, #tpu.memory_space<vmem>>, vector<1x8x128xf32>
    %647 = vector.shape_cast %646 : vector<1x8x128xf32> to vector<8x128xf32>
    %c135 = arith.constant 135 : index
    %648 = memref.load %arg2[%c135] : memref<160xf32, #tpu.memory_space<smem>>
    %649 = vector.broadcast %648 : f32 to vector<8x128xf32>
    %650 = arith.mulf %647, %649 : vector<8x128xf32>
    %651 = arith.addf %628, %650 : vector<8x128xf32>
    %c136 = arith.constant 136 : index
    %652 = memref.load %arg2[%c136] : memref<160xf32, #tpu.memory_space<smem>>
    %653 = vector.broadcast %652 : f32 to vector<8x128xf32>
    %654 = arith.mulf %647, %653 : vector<8x128xf32>
    %655 = arith.addf %632, %654 : vector<8x128xf32>
    %c137 = arith.constant 137 : index
    %656 = memref.load %arg2[%c137] : memref<160xf32, #tpu.memory_space<smem>>
    %657 = vector.broadcast %656 : f32 to vector<8x128xf32>
    %658 = arith.mulf %647, %657 : vector<8x128xf32>
    %659 = arith.addf %636, %658 : vector<8x128xf32>
    %c138 = arith.constant 138 : index
    %660 = memref.load %arg2[%c138] : memref<160xf32, #tpu.memory_space<smem>>
    %661 = vector.broadcast %660 : f32 to vector<8x128xf32>
    %662 = arith.mulf %647, %661 : vector<8x128xf32>
    %663 = arith.addf %640, %662 : vector<8x128xf32>
    %c139 = arith.constant 139 : index
    %664 = memref.load %arg2[%c139] : memref<160xf32, #tpu.memory_space<smem>>
    %665 = vector.broadcast %664 : f32 to vector<8x128xf32>
    %666 = arith.mulf %647, %665 : vector<8x128xf32>
    %667 = arith.addf %644, %666 : vector<8x128xf32>
    %c28_66 = arith.constant 28 : index
    %668 = arith.index_cast %3 : i32 to index
    %c0_67 = arith.constant 0 : index
    %669 = vector.load %arg1[%c28_66, %668, %c0_67] : memref<32x8x128xf32, #tpu.memory_space<vmem>>, vector<1x8x128xf32>
    %670 = vector.shape_cast %669 : vector<1x8x128xf32> to vector<8x128xf32>
    %c140 = arith.constant 140 : index
    %671 = memref.load %arg2[%c140] : memref<160xf32, #tpu.memory_space<smem>>
    %672 = vector.broadcast %671 : f32 to vector<8x128xf32>
    %673 = arith.mulf %670, %672 : vector<8x128xf32>
    %674 = arith.addf %651, %673 : vector<8x128xf32>
    %c141 = arith.constant 141 : index
    %675 = memref.load %arg2[%c141] : memref<160xf32, #tpu.memory_space<smem>>
    %676 = vector.broadcast %675 : f32 to vector<8x128xf32>
    %677 = arith.mulf %670, %676 : vector<8x128xf32>
    %678 = arith.addf %655, %677 : vector<8x128xf32>
    %c142 = arith.constant 142 : index
    %679 = memref.load %arg2[%c142] : memref<160xf32, #tpu.memory_space<smem>>
    %680 = vector.broadcast %679 : f32 to vector<8x128xf32>
    %681 = arith.mulf %670, %680 : vector<8x128xf32>
    %682 = arith.addf %659, %681 : vector<8x128xf32>
    %c143 = arith.constant 143 : index
    %683 = memref.load %arg2[%c143] : memref<160xf32, #tpu.memory_space<smem>>
    %684 = vector.broadcast %683 : f32 to vector<8x128xf32>
    %685 = arith.mulf %670, %684 : vector<8x128xf32>
    %686 = arith.addf %663, %685 : vector<8x128xf32>
    %c144 = arith.constant 144 : index
    %687 = memref.load %arg2[%c144] : memref<160xf32, #tpu.memory_space<smem>>
    %688 = vector.broadcast %687 : f32 to vector<8x128xf32>
    %689 = arith.mulf %670, %688 : vector<8x128xf32>
    %690 = arith.addf %667, %689 : vector<8x128xf32>
    %c29_68 = arith.constant 29 : index
    %691 = arith.index_cast %3 : i32 to index
    %c0_69 = arith.constant 0 : index
    %692 = vector.load %arg1[%c29_68, %691, %c0_69] : memref<32x8x128xf32, #tpu.memory_space<vmem>>, vector<1x8x128xf32>
    %693 = vector.shape_cast %692 : vector<1x8x128xf32> to vector<8x128xf32>
    %c145 = arith.constant 145 : index
    %694 = memref.load %arg2[%c145] : memref<160xf32, #tpu.memory_space<smem>>
    %695 = vector.broadcast %694 : f32 to vector<8x128xf32>
    %696 = arith.mulf %693, %695 : vector<8x128xf32>
    %697 = arith.addf %674, %696 : vector<8x128xf32>
    %c146 = arith.constant 146 : index
    %698 = memref.load %arg2[%c146] : memref<160xf32, #tpu.memory_space<smem>>
    %699 = vector.broadcast %698 : f32 to vector<8x128xf32>
    %700 = arith.mulf %693, %699 : vector<8x128xf32>
    %701 = arith.addf %678, %700 : vector<8x128xf32>
    %c147 = arith.constant 147 : index
    %702 = memref.load %arg2[%c147] : memref<160xf32, #tpu.memory_space<smem>>
    %703 = vector.broadcast %702 : f32 to vector<8x128xf32>
    %704 = arith.mulf %693, %703 : vector<8x128xf32>
    %705 = arith.addf %682, %704 : vector<8x128xf32>
    %c148 = arith.constant 148 : index
    %706 = memref.load %arg2[%c148] : memref<160xf32, #tpu.memory_space<smem>>
    %707 = vector.broadcast %706 : f32 to vector<8x128xf32>
    %708 = arith.mulf %693, %707 : vector<8x128xf32>
    %709 = arith.addf %686, %708 : vector<8x128xf32>
    %c149 = arith.constant 149 : index
    %710 = memref.load %arg2[%c149] : memref<160xf32, #tpu.memory_space<smem>>
    %711 = vector.broadcast %710 : f32 to vector<8x128xf32>
    %712 = arith.mulf %693, %711 : vector<8x128xf32>
    %713 = arith.addf %690, %712 : vector<8x128xf32>
    %c30_70 = arith.constant 30 : index
    %714 = arith.index_cast %3 : i32 to index
    %c0_71 = arith.constant 0 : index
    %715 = vector.load %arg1[%c30_70, %714, %c0_71] : memref<32x8x128xf32, #tpu.memory_space<vmem>>, vector<1x8x128xf32>
    %716 = vector.shape_cast %715 : vector<1x8x128xf32> to vector<8x128xf32>
    %c150 = arith.constant 150 : index
    %717 = memref.load %arg2[%c150] : memref<160xf32, #tpu.memory_space<smem>>
    %718 = vector.broadcast %717 : f32 to vector<8x128xf32>
    %719 = arith.mulf %716, %718 : vector<8x128xf32>
    %720 = arith.addf %697, %719 : vector<8x128xf32>
    %c151 = arith.constant 151 : index
    %721 = memref.load %arg2[%c151] : memref<160xf32, #tpu.memory_space<smem>>
    %722 = vector.broadcast %721 : f32 to vector<8x128xf32>
    %723 = arith.mulf %716, %722 : vector<8x128xf32>
    %724 = arith.addf %701, %723 : vector<8x128xf32>
    %c152 = arith.constant 152 : index
    %725 = memref.load %arg2[%c152] : memref<160xf32, #tpu.memory_space<smem>>
    %726 = vector.broadcast %725 : f32 to vector<8x128xf32>
    %727 = arith.mulf %716, %726 : vector<8x128xf32>
    %728 = arith.addf %705, %727 : vector<8x128xf32>
    %c153 = arith.constant 153 : index
    %729 = memref.load %arg2[%c153] : memref<160xf32, #tpu.memory_space<smem>>
    %730 = vector.broadcast %729 : f32 to vector<8x128xf32>
    %731 = arith.mulf %716, %730 : vector<8x128xf32>
    %732 = arith.addf %709, %731 : vector<8x128xf32>
    %c154 = arith.constant 154 : index
    %733 = memref.load %arg2[%c154] : memref<160xf32, #tpu.memory_space<smem>>
    %734 = vector.broadcast %733 : f32 to vector<8x128xf32>
    %735 = arith.mulf %716, %734 : vector<8x128xf32>
    %736 = arith.addf %713, %735 : vector<8x128xf32>
    %c31_72 = arith.constant 31 : index
    %737 = arith.index_cast %3 : i32 to index
    %c0_73 = arith.constant 0 : index
    %738 = vector.load %arg1[%c31_72, %737, %c0_73] : memref<32x8x128xf32, #tpu.memory_space<vmem>>, vector<1x8x128xf32>
    %739 = vector.shape_cast %738 : vector<1x8x128xf32> to vector<8x128xf32>
    %c155 = arith.constant 155 : index
    %740 = memref.load %arg2[%c155] : memref<160xf32, #tpu.memory_space<smem>>
    %741 = vector.broadcast %740 : f32 to vector<8x128xf32>
    %742 = arith.mulf %739, %741 : vector<8x128xf32>
    %743 = arith.addf %720, %742 : vector<8x128xf32>
    %c156 = arith.constant 156 : index
    %744 = memref.load %arg2[%c156] : memref<160xf32, #tpu.memory_space<smem>>
    %745 = vector.broadcast %744 : f32 to vector<8x128xf32>
    %746 = arith.mulf %739, %745 : vector<8x128xf32>
    %747 = arith.addf %724, %746 : vector<8x128xf32>
    %c157 = arith.constant 157 : index
    %748 = memref.load %arg2[%c157] : memref<160xf32, #tpu.memory_space<smem>>
    %749 = vector.broadcast %748 : f32 to vector<8x128xf32>
    %750 = arith.mulf %739, %749 : vector<8x128xf32>
    %751 = arith.addf %728, %750 : vector<8x128xf32>
    %c158 = arith.constant 158 : index
    %752 = memref.load %arg2[%c158] : memref<160xf32, #tpu.memory_space<smem>>
    %753 = vector.broadcast %752 : f32 to vector<8x128xf32>
    %754 = arith.mulf %739, %753 : vector<8x128xf32>
    %755 = arith.addf %732, %754 : vector<8x128xf32>
    %c159 = arith.constant 159 : index
    %756 = memref.load %arg2[%c159] : memref<160xf32, #tpu.memory_space<smem>>
    %757 = vector.broadcast %756 : f32 to vector<8x128xf32>
    %758 = arith.mulf %739, %757 : vector<8x128xf32>
    %759 = arith.addf %736, %758 : vector<8x128xf32>
    %cst_74 = arith.constant 0.000000e+00 : f32
    %760 = vector.broadcast %cst_74 : f32 to vector<8x128xf32>
    %761 = arith.maximumf %743, %760 : vector<8x128xf32>
    %cst_75 = arith.constant 0.000000e+00 : f32
    %762 = vector.broadcast %cst_75 : f32 to vector<8x128xf32>
    %763 = arith.maximumf %747, %762 : vector<8x128xf32>
    %cst_76 = arith.constant 0.000000e+00 : f32
    %764 = vector.broadcast %cst_76 : f32 to vector<8x128xf32>
    %765 = arith.maximumf %751, %764 : vector<8x128xf32>
    %cst_77 = arith.constant 0.000000e+00 : f32
    %766 = vector.broadcast %cst_77 : f32 to vector<8x128xf32>
    %767 = arith.maximumf %755, %766 : vector<8x128xf32>
    %cst_78 = arith.constant 0.000000e+00 : f32
    %768 = vector.broadcast %cst_78 : f32 to vector<8x128xf32>
    %769 = arith.maximumf %759, %768 : vector<8x128xf32>
    %cst_79 = arith.constant 0.000000e+00 : f32
    %770 = vector.broadcast %cst_79 : f32 to vector<8x128xf32>
    %c0_80 = arith.constant 0 : index
    %771 = memref.load %arg5[%c0_80] : memref<20xf32, #tpu.memory_space<smem>>
    %772 = vector.broadcast %771 : f32 to vector<8x128xf32>
    %773 = arith.addf %770, %772 : vector<8x128xf32>
    %cst_81 = arith.constant 0.000000e+00 : f32
    %774 = vector.broadcast %cst_81 : f32 to vector<8x128xf32>
    %c1_82 = arith.constant 1 : index
    %775 = memref.load %arg5[%c1_82] : memref<20xf32, #tpu.memory_space<smem>>
    %776 = vector.broadcast %775 : f32 to vector<8x128xf32>
    %777 = arith.addf %774, %776 : vector<8x128xf32>
    %cst_83 = arith.constant 0.000000e+00 : f32
    %778 = vector.broadcast %cst_83 : f32 to vector<8x128xf32>
    %c2_84 = arith.constant 2 : index
    %779 = memref.load %arg5[%c2_84] : memref<20xf32, #tpu.memory_space<smem>>
    %780 = vector.broadcast %779 : f32 to vector<8x128xf32>
    %781 = arith.addf %778, %780 : vector<8x128xf32>
    %cst_85 = arith.constant 0.000000e+00 : f32
    %782 = vector.broadcast %cst_85 : f32 to vector<8x128xf32>
    %c3_86 = arith.constant 3 : index
    %783 = memref.load %arg5[%c3_86] : memref<20xf32, #tpu.memory_space<smem>>
    %784 = vector.broadcast %783 : f32 to vector<8x128xf32>
    %785 = arith.addf %782, %784 : vector<8x128xf32>
    %cst_87 = arith.constant 0.000000e+00 : f32
    %786 = vector.broadcast %cst_87 : f32 to vector<8x128xf32>
    %c4_88 = arith.constant 4 : index
    %787 = memref.load %arg5[%c4_88] : memref<20xf32, #tpu.memory_space<smem>>
    %788 = vector.broadcast %787 : f32 to vector<8x128xf32>
    %789 = arith.addf %786, %788 : vector<8x128xf32>
    %cst_89 = arith.constant 0.000000e+00 : f32
    %790 = vector.broadcast %cst_89 : f32 to vector<8x128xf32>
    %c5_90 = arith.constant 5 : index
    %791 = memref.load %arg5[%c5_90] : memref<20xf32, #tpu.memory_space<smem>>
    %792 = vector.broadcast %791 : f32 to vector<8x128xf32>
    %793 = arith.addf %790, %792 : vector<8x128xf32>
    %cst_91 = arith.constant 0.000000e+00 : f32
    %794 = vector.broadcast %cst_91 : f32 to vector<8x128xf32>
    %c6_92 = arith.constant 6 : index
    %795 = memref.load %arg5[%c6_92] : memref<20xf32, #tpu.memory_space<smem>>
    %796 = vector.broadcast %795 : f32 to vector<8x128xf32>
    %797 = arith.addf %794, %796 : vector<8x128xf32>
    %cst_93 = arith.constant 0.000000e+00 : f32
    %798 = vector.broadcast %cst_93 : f32 to vector<8x128xf32>
    %c7_94 = arith.constant 7 : index
    %799 = memref.load %arg5[%c7_94] : memref<20xf32, #tpu.memory_space<smem>>
    %800 = vector.broadcast %799 : f32 to vector<8x128xf32>
    %801 = arith.addf %798, %800 : vector<8x128xf32>
    %cst_95 = arith.constant 0.000000e+00 : f32
    %802 = vector.broadcast %cst_95 : f32 to vector<8x128xf32>
    %c8_96 = arith.constant 8 : index
    %803 = memref.load %arg5[%c8_96] : memref<20xf32, #tpu.memory_space<smem>>
    %804 = vector.broadcast %803 : f32 to vector<8x128xf32>
    %805 = arith.addf %802, %804 : vector<8x128xf32>
    %cst_97 = arith.constant 0.000000e+00 : f32
    %806 = vector.broadcast %cst_97 : f32 to vector<8x128xf32>
    %c9_98 = arith.constant 9 : index
    %807 = memref.load %arg5[%c9_98] : memref<20xf32, #tpu.memory_space<smem>>
    %808 = vector.broadcast %807 : f32 to vector<8x128xf32>
    %809 = arith.addf %806, %808 : vector<8x128xf32>
    %cst_99 = arith.constant 0.000000e+00 : f32
    %810 = vector.broadcast %cst_99 : f32 to vector<8x128xf32>
    %c10_100 = arith.constant 10 : index
    %811 = memref.load %arg5[%c10_100] : memref<20xf32, #tpu.memory_space<smem>>
    %812 = vector.broadcast %811 : f32 to vector<8x128xf32>
    %813 = arith.addf %810, %812 : vector<8x128xf32>
    %cst_101 = arith.constant 0.000000e+00 : f32
    %814 = vector.broadcast %cst_101 : f32 to vector<8x128xf32>
    %c11_102 = arith.constant 11 : index
    %815 = memref.load %arg5[%c11_102] : memref<20xf32, #tpu.memory_space<smem>>
    %816 = vector.broadcast %815 : f32 to vector<8x128xf32>
    %817 = arith.addf %814, %816 : vector<8x128xf32>
    %cst_103 = arith.constant 0.000000e+00 : f32
    %818 = vector.broadcast %cst_103 : f32 to vector<8x128xf32>
    %c12_104 = arith.constant 12 : index
    %819 = memref.load %arg5[%c12_104] : memref<20xf32, #tpu.memory_space<smem>>
    %820 = vector.broadcast %819 : f32 to vector<8x128xf32>
    %821 = arith.addf %818, %820 : vector<8x128xf32>
    %cst_105 = arith.constant 0.000000e+00 : f32
    %822 = vector.broadcast %cst_105 : f32 to vector<8x128xf32>
    %c13_106 = arith.constant 13 : index
    %823 = memref.load %arg5[%c13_106] : memref<20xf32, #tpu.memory_space<smem>>
    %824 = vector.broadcast %823 : f32 to vector<8x128xf32>
    %825 = arith.addf %822, %824 : vector<8x128xf32>
    %cst_107 = arith.constant 0.000000e+00 : f32
    %826 = vector.broadcast %cst_107 : f32 to vector<8x128xf32>
    %c14_108 = arith.constant 14 : index
    %827 = memref.load %arg5[%c14_108] : memref<20xf32, #tpu.memory_space<smem>>
    %828 = vector.broadcast %827 : f32 to vector<8x128xf32>
    %829 = arith.addf %826, %828 : vector<8x128xf32>
    %cst_109 = arith.constant 0.000000e+00 : f32
    %830 = vector.broadcast %cst_109 : f32 to vector<8x128xf32>
    %c15_110 = arith.constant 15 : index
    %831 = memref.load %arg5[%c15_110] : memref<20xf32, #tpu.memory_space<smem>>
    %832 = vector.broadcast %831 : f32 to vector<8x128xf32>
    %833 = arith.addf %830, %832 : vector<8x128xf32>
    %cst_111 = arith.constant 0.000000e+00 : f32
    %834 = vector.broadcast %cst_111 : f32 to vector<8x128xf32>
    %c16_112 = arith.constant 16 : index
    %835 = memref.load %arg5[%c16_112] : memref<20xf32, #tpu.memory_space<smem>>
    %836 = vector.broadcast %835 : f32 to vector<8x128xf32>
    %837 = arith.addf %834, %836 : vector<8x128xf32>
    %cst_113 = arith.constant 0.000000e+00 : f32
    %838 = vector.broadcast %cst_113 : f32 to vector<8x128xf32>
    %c17_114 = arith.constant 17 : index
    %839 = memref.load %arg5[%c17_114] : memref<20xf32, #tpu.memory_space<smem>>
    %840 = vector.broadcast %839 : f32 to vector<8x128xf32>
    %841 = arith.addf %838, %840 : vector<8x128xf32>
    %cst_115 = arith.constant 0.000000e+00 : f32
    %842 = vector.broadcast %cst_115 : f32 to vector<8x128xf32>
    %c18_116 = arith.constant 18 : index
    %843 = memref.load %arg5[%c18_116] : memref<20xf32, #tpu.memory_space<smem>>
    %844 = vector.broadcast %843 : f32 to vector<8x128xf32>
    %845 = arith.addf %842, %844 : vector<8x128xf32>
    %cst_117 = arith.constant 0.000000e+00 : f32
    %846 = vector.broadcast %cst_117 : f32 to vector<8x128xf32>
    %c19_118 = arith.constant 19 : index
    %847 = memref.load %arg5[%c19_118] : memref<20xf32, #tpu.memory_space<smem>>
    %848 = vector.broadcast %847 : f32 to vector<8x128xf32>
    %849 = arith.addf %846, %848 : vector<8x128xf32>
    %c0_119 = arith.constant 0 : index
    %850 = memref.load %arg4[%c0_119] : memref<100xf32, #tpu.memory_space<smem>>
    %851 = vector.broadcast %850 : f32 to vector<8x128xf32>
    %852 = arith.mulf %761, %851 : vector<8x128xf32>
    %853 = arith.addf %773, %852 : vector<8x128xf32>
    %c1_120 = arith.constant 1 : index
    %854 = memref.load %arg4[%c1_120] : memref<100xf32, #tpu.memory_space<smem>>
    %855 = vector.broadcast %854 : f32 to vector<8x128xf32>
    %856 = arith.mulf %761, %855 : vector<8x128xf32>
    %857 = arith.addf %777, %856 : vector<8x128xf32>
    %c2_121 = arith.constant 2 : index
    %858 = memref.load %arg4[%c2_121] : memref<100xf32, #tpu.memory_space<smem>>
    %859 = vector.broadcast %858 : f32 to vector<8x128xf32>
    %860 = arith.mulf %761, %859 : vector<8x128xf32>
    %861 = arith.addf %781, %860 : vector<8x128xf32>
    %c3_122 = arith.constant 3 : index
    %862 = memref.load %arg4[%c3_122] : memref<100xf32, #tpu.memory_space<smem>>
    %863 = vector.broadcast %862 : f32 to vector<8x128xf32>
    %864 = arith.mulf %761, %863 : vector<8x128xf32>
    %865 = arith.addf %785, %864 : vector<8x128xf32>
    %c4_123 = arith.constant 4 : index
    %866 = memref.load %arg4[%c4_123] : memref<100xf32, #tpu.memory_space<smem>>
    %867 = vector.broadcast %866 : f32 to vector<8x128xf32>
    %868 = arith.mulf %761, %867 : vector<8x128xf32>
    %869 = arith.addf %789, %868 : vector<8x128xf32>
    %c5_124 = arith.constant 5 : index
    %870 = memref.load %arg4[%c5_124] : memref<100xf32, #tpu.memory_space<smem>>
    %871 = vector.broadcast %870 : f32 to vector<8x128xf32>
    %872 = arith.mulf %761, %871 : vector<8x128xf32>
    %873 = arith.addf %793, %872 : vector<8x128xf32>
    %c6_125 = arith.constant 6 : index
    %874 = memref.load %arg4[%c6_125] : memref<100xf32, #tpu.memory_space<smem>>
    %875 = vector.broadcast %874 : f32 to vector<8x128xf32>
    %876 = arith.mulf %761, %875 : vector<8x128xf32>
    %877 = arith.addf %797, %876 : vector<8x128xf32>
    %c7_126 = arith.constant 7 : index
    %878 = memref.load %arg4[%c7_126] : memref<100xf32, #tpu.memory_space<smem>>
    %879 = vector.broadcast %878 : f32 to vector<8x128xf32>
    %880 = arith.mulf %761, %879 : vector<8x128xf32>
    %881 = arith.addf %801, %880 : vector<8x128xf32>
    %c8_127 = arith.constant 8 : index
    %882 = memref.load %arg4[%c8_127] : memref<100xf32, #tpu.memory_space<smem>>
    %883 = vector.broadcast %882 : f32 to vector<8x128xf32>
    %884 = arith.mulf %761, %883 : vector<8x128xf32>
    %885 = arith.addf %805, %884 : vector<8x128xf32>
    %c9_128 = arith.constant 9 : index
    %886 = memref.load %arg4[%c9_128] : memref<100xf32, #tpu.memory_space<smem>>
    %887 = vector.broadcast %886 : f32 to vector<8x128xf32>
    %888 = arith.mulf %761, %887 : vector<8x128xf32>
    %889 = arith.addf %809, %888 : vector<8x128xf32>
    %c10_129 = arith.constant 10 : index
    %890 = memref.load %arg4[%c10_129] : memref<100xf32, #tpu.memory_space<smem>>
    %891 = vector.broadcast %890 : f32 to vector<8x128xf32>
    %892 = arith.mulf %761, %891 : vector<8x128xf32>
    %893 = arith.addf %813, %892 : vector<8x128xf32>
    %c11_130 = arith.constant 11 : index
    %894 = memref.load %arg4[%c11_130] : memref<100xf32, #tpu.memory_space<smem>>
    %895 = vector.broadcast %894 : f32 to vector<8x128xf32>
    %896 = arith.mulf %761, %895 : vector<8x128xf32>
    %897 = arith.addf %817, %896 : vector<8x128xf32>
    %c12_131 = arith.constant 12 : index
    %898 = memref.load %arg4[%c12_131] : memref<100xf32, #tpu.memory_space<smem>>
    %899 = vector.broadcast %898 : f32 to vector<8x128xf32>
    %900 = arith.mulf %761, %899 : vector<8x128xf32>
    %901 = arith.addf %821, %900 : vector<8x128xf32>
    %c13_132 = arith.constant 13 : index
    %902 = memref.load %arg4[%c13_132] : memref<100xf32, #tpu.memory_space<smem>>
    %903 = vector.broadcast %902 : f32 to vector<8x128xf32>
    %904 = arith.mulf %761, %903 : vector<8x128xf32>
    %905 = arith.addf %825, %904 : vector<8x128xf32>
    %c14_133 = arith.constant 14 : index
    %906 = memref.load %arg4[%c14_133] : memref<100xf32, #tpu.memory_space<smem>>
    %907 = vector.broadcast %906 : f32 to vector<8x128xf32>
    %908 = arith.mulf %761, %907 : vector<8x128xf32>
    %909 = arith.addf %829, %908 : vector<8x128xf32>
    %c15_134 = arith.constant 15 : index
    %910 = memref.load %arg4[%c15_134] : memref<100xf32, #tpu.memory_space<smem>>
    %911 = vector.broadcast %910 : f32 to vector<8x128xf32>
    %912 = arith.mulf %761, %911 : vector<8x128xf32>
    %913 = arith.addf %833, %912 : vector<8x128xf32>
    %c16_135 = arith.constant 16 : index
    %914 = memref.load %arg4[%c16_135] : memref<100xf32, #tpu.memory_space<smem>>
    %915 = vector.broadcast %914 : f32 to vector<8x128xf32>
    %916 = arith.mulf %761, %915 : vector<8x128xf32>
    %917 = arith.addf %837, %916 : vector<8x128xf32>
    %c17_136 = arith.constant 17 : index
    %918 = memref.load %arg4[%c17_136] : memref<100xf32, #tpu.memory_space<smem>>
    %919 = vector.broadcast %918 : f32 to vector<8x128xf32>
    %920 = arith.mulf %761, %919 : vector<8x128xf32>
    %921 = arith.addf %841, %920 : vector<8x128xf32>
    %c18_137 = arith.constant 18 : index
    %922 = memref.load %arg4[%c18_137] : memref<100xf32, #tpu.memory_space<smem>>
    %923 = vector.broadcast %922 : f32 to vector<8x128xf32>
    %924 = arith.mulf %761, %923 : vector<8x128xf32>
    %925 = arith.addf %845, %924 : vector<8x128xf32>
    %c19_138 = arith.constant 19 : index
    %926 = memref.load %arg4[%c19_138] : memref<100xf32, #tpu.memory_space<smem>>
    %927 = vector.broadcast %926 : f32 to vector<8x128xf32>
    %928 = arith.mulf %761, %927 : vector<8x128xf32>
    %929 = arith.addf %849, %928 : vector<8x128xf32>
    %c20_139 = arith.constant 20 : index
    %930 = memref.load %arg4[%c20_139] : memref<100xf32, #tpu.memory_space<smem>>
    %931 = vector.broadcast %930 : f32 to vector<8x128xf32>
    %932 = arith.mulf %763, %931 : vector<8x128xf32>
    %933 = arith.addf %853, %932 : vector<8x128xf32>
    %c21_140 = arith.constant 21 : index
    %934 = memref.load %arg4[%c21_140] : memref<100xf32, #tpu.memory_space<smem>>
    %935 = vector.broadcast %934 : f32 to vector<8x128xf32>
    %936 = arith.mulf %763, %935 : vector<8x128xf32>
    %937 = arith.addf %857, %936 : vector<8x128xf32>
    %c22_141 = arith.constant 22 : index
    %938 = memref.load %arg4[%c22_141] : memref<100xf32, #tpu.memory_space<smem>>
    %939 = vector.broadcast %938 : f32 to vector<8x128xf32>
    %940 = arith.mulf %763, %939 : vector<8x128xf32>
    %941 = arith.addf %861, %940 : vector<8x128xf32>
    %c23_142 = arith.constant 23 : index
    %942 = memref.load %arg4[%c23_142] : memref<100xf32, #tpu.memory_space<smem>>
    %943 = vector.broadcast %942 : f32 to vector<8x128xf32>
    %944 = arith.mulf %763, %943 : vector<8x128xf32>
    %945 = arith.addf %865, %944 : vector<8x128xf32>
    %c24_143 = arith.constant 24 : index
    %946 = memref.load %arg4[%c24_143] : memref<100xf32, #tpu.memory_space<smem>>
    %947 = vector.broadcast %946 : f32 to vector<8x128xf32>
    %948 = arith.mulf %763, %947 : vector<8x128xf32>
    %949 = arith.addf %869, %948 : vector<8x128xf32>
    %c25_144 = arith.constant 25 : index
    %950 = memref.load %arg4[%c25_144] : memref<100xf32, #tpu.memory_space<smem>>
    %951 = vector.broadcast %950 : f32 to vector<8x128xf32>
    %952 = arith.mulf %763, %951 : vector<8x128xf32>
    %953 = arith.addf %873, %952 : vector<8x128xf32>
    %c26_145 = arith.constant 26 : index
    %954 = memref.load %arg4[%c26_145] : memref<100xf32, #tpu.memory_space<smem>>
    %955 = vector.broadcast %954 : f32 to vector<8x128xf32>
    %956 = arith.mulf %763, %955 : vector<8x128xf32>
    %957 = arith.addf %877, %956 : vector<8x128xf32>
    %c27_146 = arith.constant 27 : index
    %958 = memref.load %arg4[%c27_146] : memref<100xf32, #tpu.memory_space<smem>>
    %959 = vector.broadcast %958 : f32 to vector<8x128xf32>
    %960 = arith.mulf %763, %959 : vector<8x128xf32>
    %961 = arith.addf %881, %960 : vector<8x128xf32>
    %c28_147 = arith.constant 28 : index
    %962 = memref.load %arg4[%c28_147] : memref<100xf32, #tpu.memory_space<smem>>
    %963 = vector.broadcast %962 : f32 to vector<8x128xf32>
    %964 = arith.mulf %763, %963 : vector<8x128xf32>
    %965 = arith.addf %885, %964 : vector<8x128xf32>
    %c29_148 = arith.constant 29 : index
    %966 = memref.load %arg4[%c29_148] : memref<100xf32, #tpu.memory_space<smem>>
    %967 = vector.broadcast %966 : f32 to vector<8x128xf32>
    %968 = arith.mulf %763, %967 : vector<8x128xf32>
    %969 = arith.addf %889, %968 : vector<8x128xf32>
    %c30_149 = arith.constant 30 : index
    %970 = memref.load %arg4[%c30_149] : memref<100xf32, #tpu.memory_space<smem>>
    %971 = vector.broadcast %970 : f32 to vector<8x128xf32>
    %972 = arith.mulf %763, %971 : vector<8x128xf32>
    %973 = arith.addf %893, %972 : vector<8x128xf32>
    %c31_150 = arith.constant 31 : index
    %974 = memref.load %arg4[%c31_150] : memref<100xf32, #tpu.memory_space<smem>>
    %975 = vector.broadcast %974 : f32 to vector<8x128xf32>
    %976 = arith.mulf %763, %975 : vector<8x128xf32>
    %977 = arith.addf %897, %976 : vector<8x128xf32>
    %c32_151 = arith.constant 32 : index
    %978 = memref.load %arg4[%c32_151] : memref<100xf32, #tpu.memory_space<smem>>
    %979 = vector.broadcast %978 : f32 to vector<8x128xf32>
    %980 = arith.mulf %763, %979 : vector<8x128xf32>
    %981 = arith.addf %901, %980 : vector<8x128xf32>
    %c33_152 = arith.constant 33 : index
    %982 = memref.load %arg4[%c33_152] : memref<100xf32, #tpu.memory_space<smem>>
    %983 = vector.broadcast %982 : f32 to vector<8x128xf32>
    %984 = arith.mulf %763, %983 : vector<8x128xf32>
    %985 = arith.addf %905, %984 : vector<8x128xf32>
    %c34_153 = arith.constant 34 : index
    %986 = memref.load %arg4[%c34_153] : memref<100xf32, #tpu.memory_space<smem>>
    %987 = vector.broadcast %986 : f32 to vector<8x128xf32>
    %988 = arith.mulf %763, %987 : vector<8x128xf32>
    %989 = arith.addf %909, %988 : vector<8x128xf32>
    %c35_154 = arith.constant 35 : index
    %990 = memref.load %arg4[%c35_154] : memref<100xf32, #tpu.memory_space<smem>>
    %991 = vector.broadcast %990 : f32 to vector<8x128xf32>
    %992 = arith.mulf %763, %991 : vector<8x128xf32>
    %993 = arith.addf %913, %992 : vector<8x128xf32>
    %c36_155 = arith.constant 36 : index
    %994 = memref.load %arg4[%c36_155] : memref<100xf32, #tpu.memory_space<smem>>
    %995 = vector.broadcast %994 : f32 to vector<8x128xf32>
    %996 = arith.mulf %763, %995 : vector<8x128xf32>
    %997 = arith.addf %917, %996 : vector<8x128xf32>
    %c37_156 = arith.constant 37 : index
    %998 = memref.load %arg4[%c37_156] : memref<100xf32, #tpu.memory_space<smem>>
    %999 = vector.broadcast %998 : f32 to vector<8x128xf32>
    %1000 = arith.mulf %763, %999 : vector<8x128xf32>
    %1001 = arith.addf %921, %1000 : vector<8x128xf32>
    %c38_157 = arith.constant 38 : index
    %1002 = memref.load %arg4[%c38_157] : memref<100xf32, #tpu.memory_space<smem>>
    %1003 = vector.broadcast %1002 : f32 to vector<8x128xf32>
    %1004 = arith.mulf %763, %1003 : vector<8x128xf32>
    %1005 = arith.addf %925, %1004 : vector<8x128xf32>
    %c39_158 = arith.constant 39 : index
    %1006 = memref.load %arg4[%c39_158] : memref<100xf32, #tpu.memory_space<smem>>
    %1007 = vector.broadcast %1006 : f32 to vector<8x128xf32>
    %1008 = arith.mulf %763, %1007 : vector<8x128xf32>
    %1009 = arith.addf %929, %1008 : vector<8x128xf32>
    %c40_159 = arith.constant 40 : index
    %1010 = memref.load %arg4[%c40_159] : memref<100xf32, #tpu.memory_space<smem>>
    %1011 = vector.broadcast %1010 : f32 to vector<8x128xf32>
    %1012 = arith.mulf %765, %1011 : vector<8x128xf32>
    %1013 = arith.addf %933, %1012 : vector<8x128xf32>
    %c41_160 = arith.constant 41 : index
    %1014 = memref.load %arg4[%c41_160] : memref<100xf32, #tpu.memory_space<smem>>
    %1015 = vector.broadcast %1014 : f32 to vector<8x128xf32>
    %1016 = arith.mulf %765, %1015 : vector<8x128xf32>
    %1017 = arith.addf %937, %1016 : vector<8x128xf32>
    %c42_161 = arith.constant 42 : index
    %1018 = memref.load %arg4[%c42_161] : memref<100xf32, #tpu.memory_space<smem>>
    %1019 = vector.broadcast %1018 : f32 to vector<8x128xf32>
    %1020 = arith.mulf %765, %1019 : vector<8x128xf32>
    %1021 = arith.addf %941, %1020 : vector<8x128xf32>
    %c43_162 = arith.constant 43 : index
    %1022 = memref.load %arg4[%c43_162] : memref<100xf32, #tpu.memory_space<smem>>
    %1023 = vector.broadcast %1022 : f32 to vector<8x128xf32>
    %1024 = arith.mulf %765, %1023 : vector<8x128xf32>
    %1025 = arith.addf %945, %1024 : vector<8x128xf32>
    %c44_163 = arith.constant 44 : index
    %1026 = memref.load %arg4[%c44_163] : memref<100xf32, #tpu.memory_space<smem>>
    %1027 = vector.broadcast %1026 : f32 to vector<8x128xf32>
    %1028 = arith.mulf %765, %1027 : vector<8x128xf32>
    %1029 = arith.addf %949, %1028 : vector<8x128xf32>
    %c45_164 = arith.constant 45 : index
    %1030 = memref.load %arg4[%c45_164] : memref<100xf32, #tpu.memory_space<smem>>
    %1031 = vector.broadcast %1030 : f32 to vector<8x128xf32>
    %1032 = arith.mulf %765, %1031 : vector<8x128xf32>
    %1033 = arith.addf %953, %1032 : vector<8x128xf32>
    %c46_165 = arith.constant 46 : index
    %1034 = memref.load %arg4[%c46_165] : memref<100xf32, #tpu.memory_space<smem>>
    %1035 = vector.broadcast %1034 : f32 to vector<8x128xf32>
    %1036 = arith.mulf %765, %1035 : vector<8x128xf32>
    %1037 = arith.addf %957, %1036 : vector<8x128xf32>
    %c47_166 = arith.constant 47 : index
    %1038 = memref.load %arg4[%c47_166] : memref<100xf32, #tpu.memory_space<smem>>
    %1039 = vector.broadcast %1038 : f32 to vector<8x128xf32>
    %1040 = arith.mulf %765, %1039 : vector<8x128xf32>
    %1041 = arith.addf %961, %1040 : vector<8x128xf32>
    %c48_167 = arith.constant 48 : index
    %1042 = memref.load %arg4[%c48_167] : memref<100xf32, #tpu.memory_space<smem>>
    %1043 = vector.broadcast %1042 : f32 to vector<8x128xf32>
    %1044 = arith.mulf %765, %1043 : vector<8x128xf32>
    %1045 = arith.addf %965, %1044 : vector<8x128xf32>
    %c49_168 = arith.constant 49 : index
    %1046 = memref.load %arg4[%c49_168] : memref<100xf32, #tpu.memory_space<smem>>
    %1047 = vector.broadcast %1046 : f32 to vector<8x128xf32>
    %1048 = arith.mulf %765, %1047 : vector<8x128xf32>
    %1049 = arith.addf %969, %1048 : vector<8x128xf32>
    %c50_169 = arith.constant 50 : index
    %1050 = memref.load %arg4[%c50_169] : memref<100xf32, #tpu.memory_space<smem>>
    %1051 = vector.broadcast %1050 : f32 to vector<8x128xf32>
    %1052 = arith.mulf %765, %1051 : vector<8x128xf32>
    %1053 = arith.addf %973, %1052 : vector<8x128xf32>
    %c51_170 = arith.constant 51 : index
    %1054 = memref.load %arg4[%c51_170] : memref<100xf32, #tpu.memory_space<smem>>
    %1055 = vector.broadcast %1054 : f32 to vector<8x128xf32>
    %1056 = arith.mulf %765, %1055 : vector<8x128xf32>
    %1057 = arith.addf %977, %1056 : vector<8x128xf32>
    %c52_171 = arith.constant 52 : index
    %1058 = memref.load %arg4[%c52_171] : memref<100xf32, #tpu.memory_space<smem>>
    %1059 = vector.broadcast %1058 : f32 to vector<8x128xf32>
    %1060 = arith.mulf %765, %1059 : vector<8x128xf32>
    %1061 = arith.addf %981, %1060 : vector<8x128xf32>
    %c53_172 = arith.constant 53 : index
    %1062 = memref.load %arg4[%c53_172] : memref<100xf32, #tpu.memory_space<smem>>
    %1063 = vector.broadcast %1062 : f32 to vector<8x128xf32>
    %1064 = arith.mulf %765, %1063 : vector<8x128xf32>
    %1065 = arith.addf %985, %1064 : vector<8x128xf32>
    %c54_173 = arith.constant 54 : index
    %1066 = memref.load %arg4[%c54_173] : memref<100xf32, #tpu.memory_space<smem>>
    %1067 = vector.broadcast %1066 : f32 to vector<8x128xf32>
    %1068 = arith.mulf %765, %1067 : vector<8x128xf32>
    %1069 = arith.addf %989, %1068 : vector<8x128xf32>
    %c55_174 = arith.constant 55 : index
    %1070 = memref.load %arg4[%c55_174] : memref<100xf32, #tpu.memory_space<smem>>
    %1071 = vector.broadcast %1070 : f32 to vector<8x128xf32>
    %1072 = arith.mulf %765, %1071 : vector<8x128xf32>
    %1073 = arith.addf %993, %1072 : vector<8x128xf32>
    %c56_175 = arith.constant 56 : index
    %1074 = memref.load %arg4[%c56_175] : memref<100xf32, #tpu.memory_space<smem>>
    %1075 = vector.broadcast %1074 : f32 to vector<8x128xf32>
    %1076 = arith.mulf %765, %1075 : vector<8x128xf32>
    %1077 = arith.addf %997, %1076 : vector<8x128xf32>
    %c57_176 = arith.constant 57 : index
    %1078 = memref.load %arg4[%c57_176] : memref<100xf32, #tpu.memory_space<smem>>
    %1079 = vector.broadcast %1078 : f32 to vector<8x128xf32>
    %1080 = arith.mulf %765, %1079 : vector<8x128xf32>
    %1081 = arith.addf %1001, %1080 : vector<8x128xf32>
    %c58_177 = arith.constant 58 : index
    %1082 = memref.load %arg4[%c58_177] : memref<100xf32, #tpu.memory_space<smem>>
    %1083 = vector.broadcast %1082 : f32 to vector<8x128xf32>
    %1084 = arith.mulf %765, %1083 : vector<8x128xf32>
    %1085 = arith.addf %1005, %1084 : vector<8x128xf32>
    %c59_178 = arith.constant 59 : index
    %1086 = memref.load %arg4[%c59_178] : memref<100xf32, #tpu.memory_space<smem>>
    %1087 = vector.broadcast %1086 : f32 to vector<8x128xf32>
    %1088 = arith.mulf %765, %1087 : vector<8x128xf32>
    %1089 = arith.addf %1009, %1088 : vector<8x128xf32>
    %c60_179 = arith.constant 60 : index
    %1090 = memref.load %arg4[%c60_179] : memref<100xf32, #tpu.memory_space<smem>>
    %1091 = vector.broadcast %1090 : f32 to vector<8x128xf32>
    %1092 = arith.mulf %767, %1091 : vector<8x128xf32>
    %1093 = arith.addf %1013, %1092 : vector<8x128xf32>
    %c61_180 = arith.constant 61 : index
    %1094 = memref.load %arg4[%c61_180] : memref<100xf32, #tpu.memory_space<smem>>
    %1095 = vector.broadcast %1094 : f32 to vector<8x128xf32>
    %1096 = arith.mulf %767, %1095 : vector<8x128xf32>
    %1097 = arith.addf %1017, %1096 : vector<8x128xf32>
    %c62_181 = arith.constant 62 : index
    %1098 = memref.load %arg4[%c62_181] : memref<100xf32, #tpu.memory_space<smem>>
    %1099 = vector.broadcast %1098 : f32 to vector<8x128xf32>
    %1100 = arith.mulf %767, %1099 : vector<8x128xf32>
    %1101 = arith.addf %1021, %1100 : vector<8x128xf32>
    %c63_182 = arith.constant 63 : index
    %1102 = memref.load %arg4[%c63_182] : memref<100xf32, #tpu.memory_space<smem>>
    %1103 = vector.broadcast %1102 : f32 to vector<8x128xf32>
    %1104 = arith.mulf %767, %1103 : vector<8x128xf32>
    %1105 = arith.addf %1025, %1104 : vector<8x128xf32>
    %c64_183 = arith.constant 64 : index
    %1106 = memref.load %arg4[%c64_183] : memref<100xf32, #tpu.memory_space<smem>>
    %1107 = vector.broadcast %1106 : f32 to vector<8x128xf32>
    %1108 = arith.mulf %767, %1107 : vector<8x128xf32>
    %1109 = arith.addf %1029, %1108 : vector<8x128xf32>
    %c65_184 = arith.constant 65 : index
    %1110 = memref.load %arg4[%c65_184] : memref<100xf32, #tpu.memory_space<smem>>
    %1111 = vector.broadcast %1110 : f32 to vector<8x128xf32>
    %1112 = arith.mulf %767, %1111 : vector<8x128xf32>
    %1113 = arith.addf %1033, %1112 : vector<8x128xf32>
    %c66_185 = arith.constant 66 : index
    %1114 = memref.load %arg4[%c66_185] : memref<100xf32, #tpu.memory_space<smem>>
    %1115 = vector.broadcast %1114 : f32 to vector<8x128xf32>
    %1116 = arith.mulf %767, %1115 : vector<8x128xf32>
    %1117 = arith.addf %1037, %1116 : vector<8x128xf32>
    %c67_186 = arith.constant 67 : index
    %1118 = memref.load %arg4[%c67_186] : memref<100xf32, #tpu.memory_space<smem>>
    %1119 = vector.broadcast %1118 : f32 to vector<8x128xf32>
    %1120 = arith.mulf %767, %1119 : vector<8x128xf32>
    %1121 = arith.addf %1041, %1120 : vector<8x128xf32>
    %c68_187 = arith.constant 68 : index
    %1122 = memref.load %arg4[%c68_187] : memref<100xf32, #tpu.memory_space<smem>>
    %1123 = vector.broadcast %1122 : f32 to vector<8x128xf32>
    %1124 = arith.mulf %767, %1123 : vector<8x128xf32>
    %1125 = arith.addf %1045, %1124 : vector<8x128xf32>
    %c69_188 = arith.constant 69 : index
    %1126 = memref.load %arg4[%c69_188] : memref<100xf32, #tpu.memory_space<smem>>
    %1127 = vector.broadcast %1126 : f32 to vector<8x128xf32>
    %1128 = arith.mulf %767, %1127 : vector<8x128xf32>
    %1129 = arith.addf %1049, %1128 : vector<8x128xf32>
    %c70_189 = arith.constant 70 : index
    %1130 = memref.load %arg4[%c70_189] : memref<100xf32, #tpu.memory_space<smem>>
    %1131 = vector.broadcast %1130 : f32 to vector<8x128xf32>
    %1132 = arith.mulf %767, %1131 : vector<8x128xf32>
    %1133 = arith.addf %1053, %1132 : vector<8x128xf32>
    %c71_190 = arith.constant 71 : index
    %1134 = memref.load %arg4[%c71_190] : memref<100xf32, #tpu.memory_space<smem>>
    %1135 = vector.broadcast %1134 : f32 to vector<8x128xf32>
    %1136 = arith.mulf %767, %1135 : vector<8x128xf32>
    %1137 = arith.addf %1057, %1136 : vector<8x128xf32>
    %c72_191 = arith.constant 72 : index
    %1138 = memref.load %arg4[%c72_191] : memref<100xf32, #tpu.memory_space<smem>>
    %1139 = vector.broadcast %1138 : f32 to vector<8x128xf32>
    %1140 = arith.mulf %767, %1139 : vector<8x128xf32>
    %1141 = arith.addf %1061, %1140 : vector<8x128xf32>
    %c73_192 = arith.constant 73 : index
    %1142 = memref.load %arg4[%c73_192] : memref<100xf32, #tpu.memory_space<smem>>
    %1143 = vector.broadcast %1142 : f32 to vector<8x128xf32>
    %1144 = arith.mulf %767, %1143 : vector<8x128xf32>
    %1145 = arith.addf %1065, %1144 : vector<8x128xf32>
    %c74_193 = arith.constant 74 : index
    %1146 = memref.load %arg4[%c74_193] : memref<100xf32, #tpu.memory_space<smem>>
    %1147 = vector.broadcast %1146 : f32 to vector<8x128xf32>
    %1148 = arith.mulf %767, %1147 : vector<8x128xf32>
    %1149 = arith.addf %1069, %1148 : vector<8x128xf32>
    %c75_194 = arith.constant 75 : index
    %1150 = memref.load %arg4[%c75_194] : memref<100xf32, #tpu.memory_space<smem>>
    %1151 = vector.broadcast %1150 : f32 to vector<8x128xf32>
    %1152 = arith.mulf %767, %1151 : vector<8x128xf32>
    %1153 = arith.addf %1073, %1152 : vector<8x128xf32>
    %c76_195 = arith.constant 76 : index
    %1154 = memref.load %arg4[%c76_195] : memref<100xf32, #tpu.memory_space<smem>>
    %1155 = vector.broadcast %1154 : f32 to vector<8x128xf32>
    %1156 = arith.mulf %767, %1155 : vector<8x128xf32>
    %1157 = arith.addf %1077, %1156 : vector<8x128xf32>
    %c77_196 = arith.constant 77 : index
    %1158 = memref.load %arg4[%c77_196] : memref<100xf32, #tpu.memory_space<smem>>
    %1159 = vector.broadcast %1158 : f32 to vector<8x128xf32>
    %1160 = arith.mulf %767, %1159 : vector<8x128xf32>
    %1161 = arith.addf %1081, %1160 : vector<8x128xf32>
    %c78_197 = arith.constant 78 : index
    %1162 = memref.load %arg4[%c78_197] : memref<100xf32, #tpu.memory_space<smem>>
    %1163 = vector.broadcast %1162 : f32 to vector<8x128xf32>
    %1164 = arith.mulf %767, %1163 : vector<8x128xf32>
    %1165 = arith.addf %1085, %1164 : vector<8x128xf32>
    %c79_198 = arith.constant 79 : index
    %1166 = memref.load %arg4[%c79_198] : memref<100xf32, #tpu.memory_space<smem>>
    %1167 = vector.broadcast %1166 : f32 to vector<8x128xf32>
    %1168 = arith.mulf %767, %1167 : vector<8x128xf32>
    %1169 = arith.addf %1089, %1168 : vector<8x128xf32>
    %c80_199 = arith.constant 80 : index
    %1170 = memref.load %arg4[%c80_199] : memref<100xf32, #tpu.memory_space<smem>>
    %1171 = vector.broadcast %1170 : f32 to vector<8x128xf32>
    %1172 = arith.mulf %769, %1171 : vector<8x128xf32>
    %1173 = arith.addf %1093, %1172 : vector<8x128xf32>
    %c81_200 = arith.constant 81 : index
    %1174 = memref.load %arg4[%c81_200] : memref<100xf32, #tpu.memory_space<smem>>
    %1175 = vector.broadcast %1174 : f32 to vector<8x128xf32>
    %1176 = arith.mulf %769, %1175 : vector<8x128xf32>
    %1177 = arith.addf %1097, %1176 : vector<8x128xf32>
    %c82_201 = arith.constant 82 : index
    %1178 = memref.load %arg4[%c82_201] : memref<100xf32, #tpu.memory_space<smem>>
    %1179 = vector.broadcast %1178 : f32 to vector<8x128xf32>
    %1180 = arith.mulf %769, %1179 : vector<8x128xf32>
    %1181 = arith.addf %1101, %1180 : vector<8x128xf32>
    %c83_202 = arith.constant 83 : index
    %1182 = memref.load %arg4[%c83_202] : memref<100xf32, #tpu.memory_space<smem>>
    %1183 = vector.broadcast %1182 : f32 to vector<8x128xf32>
    %1184 = arith.mulf %769, %1183 : vector<8x128xf32>
    %1185 = arith.addf %1105, %1184 : vector<8x128xf32>
    %c84_203 = arith.constant 84 : index
    %1186 = memref.load %arg4[%c84_203] : memref<100xf32, #tpu.memory_space<smem>>
    %1187 = vector.broadcast %1186 : f32 to vector<8x128xf32>
    %1188 = arith.mulf %769, %1187 : vector<8x128xf32>
    %1189 = arith.addf %1109, %1188 : vector<8x128xf32>
    %c85_204 = arith.constant 85 : index
    %1190 = memref.load %arg4[%c85_204] : memref<100xf32, #tpu.memory_space<smem>>
    %1191 = vector.broadcast %1190 : f32 to vector<8x128xf32>
    %1192 = arith.mulf %769, %1191 : vector<8x128xf32>
    %1193 = arith.addf %1113, %1192 : vector<8x128xf32>
    %c86_205 = arith.constant 86 : index
    %1194 = memref.load %arg4[%c86_205] : memref<100xf32, #tpu.memory_space<smem>>
    %1195 = vector.broadcast %1194 : f32 to vector<8x128xf32>
    %1196 = arith.mulf %769, %1195 : vector<8x128xf32>
    %1197 = arith.addf %1117, %1196 : vector<8x128xf32>
    %c87_206 = arith.constant 87 : index
    %1198 = memref.load %arg4[%c87_206] : memref<100xf32, #tpu.memory_space<smem>>
    %1199 = vector.broadcast %1198 : f32 to vector<8x128xf32>
    %1200 = arith.mulf %769, %1199 : vector<8x128xf32>
    %1201 = arith.addf %1121, %1200 : vector<8x128xf32>
    %c88_207 = arith.constant 88 : index
    %1202 = memref.load %arg4[%c88_207] : memref<100xf32, #tpu.memory_space<smem>>
    %1203 = vector.broadcast %1202 : f32 to vector<8x128xf32>
    %1204 = arith.mulf %769, %1203 : vector<8x128xf32>
    %1205 = arith.addf %1125, %1204 : vector<8x128xf32>
    %c89_208 = arith.constant 89 : index
    %1206 = memref.load %arg4[%c89_208] : memref<100xf32, #tpu.memory_space<smem>>
    %1207 = vector.broadcast %1206 : f32 to vector<8x128xf32>
    %1208 = arith.mulf %769, %1207 : vector<8x128xf32>
    %1209 = arith.addf %1129, %1208 : vector<8x128xf32>
    %c90_209 = arith.constant 90 : index
    %1210 = memref.load %arg4[%c90_209] : memref<100xf32, #tpu.memory_space<smem>>
    %1211 = vector.broadcast %1210 : f32 to vector<8x128xf32>
    %1212 = arith.mulf %769, %1211 : vector<8x128xf32>
    %1213 = arith.addf %1133, %1212 : vector<8x128xf32>
    %c91_210 = arith.constant 91 : index
    %1214 = memref.load %arg4[%c91_210] : memref<100xf32, #tpu.memory_space<smem>>
    %1215 = vector.broadcast %1214 : f32 to vector<8x128xf32>
    %1216 = arith.mulf %769, %1215 : vector<8x128xf32>
    %1217 = arith.addf %1137, %1216 : vector<8x128xf32>
    %c92_211 = arith.constant 92 : index
    %1218 = memref.load %arg4[%c92_211] : memref<100xf32, #tpu.memory_space<smem>>
    %1219 = vector.broadcast %1218 : f32 to vector<8x128xf32>
    %1220 = arith.mulf %769, %1219 : vector<8x128xf32>
    %1221 = arith.addf %1141, %1220 : vector<8x128xf32>
    %c93_212 = arith.constant 93 : index
    %1222 = memref.load %arg4[%c93_212] : memref<100xf32, #tpu.memory_space<smem>>
    %1223 = vector.broadcast %1222 : f32 to vector<8x128xf32>
    %1224 = arith.mulf %769, %1223 : vector<8x128xf32>
    %1225 = arith.addf %1145, %1224 : vector<8x128xf32>
    %c94_213 = arith.constant 94 : index
    %1226 = memref.load %arg4[%c94_213] : memref<100xf32, #tpu.memory_space<smem>>
    %1227 = vector.broadcast %1226 : f32 to vector<8x128xf32>
    %1228 = arith.mulf %769, %1227 : vector<8x128xf32>
    %1229 = arith.addf %1149, %1228 : vector<8x128xf32>
    %c95_214 = arith.constant 95 : index
    %1230 = memref.load %arg4[%c95_214] : memref<100xf32, #tpu.memory_space<smem>>
    %1231 = vector.broadcast %1230 : f32 to vector<8x128xf32>
    %1232 = arith.mulf %769, %1231 : vector<8x128xf32>
    %1233 = arith.addf %1153, %1232 : vector<8x128xf32>
    %c96_215 = arith.constant 96 : index
    %1234 = memref.load %arg4[%c96_215] : memref<100xf32, #tpu.memory_space<smem>>
    %1235 = vector.broadcast %1234 : f32 to vector<8x128xf32>
    %1236 = arith.mulf %769, %1235 : vector<8x128xf32>
    %1237 = arith.addf %1157, %1236 : vector<8x128xf32>
    %c97_216 = arith.constant 97 : index
    %1238 = memref.load %arg4[%c97_216] : memref<100xf32, #tpu.memory_space<smem>>
    %1239 = vector.broadcast %1238 : f32 to vector<8x128xf32>
    %1240 = arith.mulf %769, %1239 : vector<8x128xf32>
    %1241 = arith.addf %1161, %1240 : vector<8x128xf32>
    %c98_217 = arith.constant 98 : index
    %1242 = memref.load %arg4[%c98_217] : memref<100xf32, #tpu.memory_space<smem>>
    %1243 = vector.broadcast %1242 : f32 to vector<8x128xf32>
    %1244 = arith.mulf %769, %1243 : vector<8x128xf32>
    %1245 = arith.addf %1165, %1244 : vector<8x128xf32>
    %c99_218 = arith.constant 99 : index
    %1246 = memref.load %arg4[%c99_218] : memref<100xf32, #tpu.memory_space<smem>>
    %1247 = vector.broadcast %1246 : f32 to vector<8x128xf32>
    %1248 = arith.mulf %769, %1247 : vector<8x128xf32>
    %1249 = arith.addf %1169, %1248 : vector<8x128xf32>
    %cst_219 = arith.constant 0.000000e+00 : f32
    %1250 = vector.broadcast %cst_219 : f32 to vector<8x128xf32>
    %1251 = arith.maximumf %1173, %1250 : vector<8x128xf32>
    %cst_220 = arith.constant 0.000000e+00 : f32
    %1252 = vector.broadcast %cst_220 : f32 to vector<8x128xf32>
    %1253 = arith.maximumf %1177, %1252 : vector<8x128xf32>
    %cst_221 = arith.constant 0.000000e+00 : f32
    %1254 = vector.broadcast %cst_221 : f32 to vector<8x128xf32>
    %1255 = arith.maximumf %1181, %1254 : vector<8x128xf32>
    %cst_222 = arith.constant 0.000000e+00 : f32
    %1256 = vector.broadcast %cst_222 : f32 to vector<8x128xf32>
    %1257 = arith.maximumf %1185, %1256 : vector<8x128xf32>
    %cst_223 = arith.constant 0.000000e+00 : f32
    %1258 = vector.broadcast %cst_223 : f32 to vector<8x128xf32>
    %1259 = arith.maximumf %1189, %1258 : vector<8x128xf32>
    %cst_224 = arith.constant 0.000000e+00 : f32
    %1260 = vector.broadcast %cst_224 : f32 to vector<8x128xf32>
    %1261 = arith.maximumf %1193, %1260 : vector<8x128xf32>
    %cst_225 = arith.constant 0.000000e+00 : f32
    %1262 = vector.broadcast %cst_225 : f32 to vector<8x128xf32>
    %1263 = arith.maximumf %1197, %1262 : vector<8x128xf32>
    %cst_226 = arith.constant 0.000000e+00 : f32
    %1264 = vector.broadcast %cst_226 : f32 to vector<8x128xf32>
    %1265 = arith.maximumf %1201, %1264 : vector<8x128xf32>
    %cst_227 = arith.constant 0.000000e+00 : f32
    %1266 = vector.broadcast %cst_227 : f32 to vector<8x128xf32>
    %1267 = arith.maximumf %1205, %1266 : vector<8x128xf32>
    %cst_228 = arith.constant 0.000000e+00 : f32
    %1268 = vector.broadcast %cst_228 : f32 to vector<8x128xf32>
    %1269 = arith.maximumf %1209, %1268 : vector<8x128xf32>
    %cst_229 = arith.constant 0.000000e+00 : f32
    %1270 = vector.broadcast %cst_229 : f32 to vector<8x128xf32>
    %1271 = arith.maximumf %1213, %1270 : vector<8x128xf32>
    %cst_230 = arith.constant 0.000000e+00 : f32
    %1272 = vector.broadcast %cst_230 : f32 to vector<8x128xf32>
    %1273 = arith.maximumf %1217, %1272 : vector<8x128xf32>
    %cst_231 = arith.constant 0.000000e+00 : f32
    %1274 = vector.broadcast %cst_231 : f32 to vector<8x128xf32>
    %1275 = arith.maximumf %1221, %1274 : vector<8x128xf32>
    %cst_232 = arith.constant 0.000000e+00 : f32
    %1276 = vector.broadcast %cst_232 : f32 to vector<8x128xf32>
    %1277 = arith.maximumf %1225, %1276 : vector<8x128xf32>
    %cst_233 = arith.constant 0.000000e+00 : f32
    %1278 = vector.broadcast %cst_233 : f32 to vector<8x128xf32>
    %1279 = arith.maximumf %1229, %1278 : vector<8x128xf32>
    %cst_234 = arith.constant 0.000000e+00 : f32
    %1280 = vector.broadcast %cst_234 : f32 to vector<8x128xf32>
    %1281 = arith.maximumf %1233, %1280 : vector<8x128xf32>
    %cst_235 = arith.constant 0.000000e+00 : f32
    %1282 = vector.broadcast %cst_235 : f32 to vector<8x128xf32>
    %1283 = arith.maximumf %1237, %1282 : vector<8x128xf32>
    %cst_236 = arith.constant 0.000000e+00 : f32
    %1284 = vector.broadcast %cst_236 : f32 to vector<8x128xf32>
    %1285 = arith.maximumf %1241, %1284 : vector<8x128xf32>
    %cst_237 = arith.constant 0.000000e+00 : f32
    %1286 = vector.broadcast %cst_237 : f32 to vector<8x128xf32>
    %1287 = arith.maximumf %1245, %1286 : vector<8x128xf32>
    %cst_238 = arith.constant 0.000000e+00 : f32
    %1288 = vector.broadcast %cst_238 : f32 to vector<8x128xf32>
    %1289 = arith.maximumf %1249, %1288 : vector<8x128xf32>
    %cst_239 = arith.constant 0.000000e+00 : f32
    %1290 = vector.broadcast %cst_239 : f32 to vector<8x128xf32>
    %c0_240 = arith.constant 0 : index
    %1291 = memref.load %arg7[%c0_240] : memref<10xf32, #tpu.memory_space<smem>>
    %1292 = vector.broadcast %1291 : f32 to vector<8x128xf32>
    %1293 = arith.addf %1290, %1292 : vector<8x128xf32>
    %cst_241 = arith.constant 0.000000e+00 : f32
    %1294 = vector.broadcast %cst_241 : f32 to vector<8x128xf32>
    %c1_242 = arith.constant 1 : index
    %1295 = memref.load %arg7[%c1_242] : memref<10xf32, #tpu.memory_space<smem>>
    %1296 = vector.broadcast %1295 : f32 to vector<8x128xf32>
    %1297 = arith.addf %1294, %1296 : vector<8x128xf32>
    %cst_243 = arith.constant 0.000000e+00 : f32
    %1298 = vector.broadcast %cst_243 : f32 to vector<8x128xf32>
    %c2_244 = arith.constant 2 : index
    %1299 = memref.load %arg7[%c2_244] : memref<10xf32, #tpu.memory_space<smem>>
    %1300 = vector.broadcast %1299 : f32 to vector<8x128xf32>
    %1301 = arith.addf %1298, %1300 : vector<8x128xf32>
    %cst_245 = arith.constant 0.000000e+00 : f32
    %1302 = vector.broadcast %cst_245 : f32 to vector<8x128xf32>
    %c3_246 = arith.constant 3 : index
    %1303 = memref.load %arg7[%c3_246] : memref<10xf32, #tpu.memory_space<smem>>
    %1304 = vector.broadcast %1303 : f32 to vector<8x128xf32>
    %1305 = arith.addf %1302, %1304 : vector<8x128xf32>
    %cst_247 = arith.constant 0.000000e+00 : f32
    %1306 = vector.broadcast %cst_247 : f32 to vector<8x128xf32>
    %c4_248 = arith.constant 4 : index
    %1307 = memref.load %arg7[%c4_248] : memref<10xf32, #tpu.memory_space<smem>>
    %1308 = vector.broadcast %1307 : f32 to vector<8x128xf32>
    %1309 = arith.addf %1306, %1308 : vector<8x128xf32>
    %cst_249 = arith.constant 0.000000e+00 : f32
    %1310 = vector.broadcast %cst_249 : f32 to vector<8x128xf32>
    %c5_250 = arith.constant 5 : index
    %1311 = memref.load %arg7[%c5_250] : memref<10xf32, #tpu.memory_space<smem>>
    %1312 = vector.broadcast %1311 : f32 to vector<8x128xf32>
    %1313 = arith.addf %1310, %1312 : vector<8x128xf32>
    %cst_251 = arith.constant 0.000000e+00 : f32
    %1314 = vector.broadcast %cst_251 : f32 to vector<8x128xf32>
    %c6_252 = arith.constant 6 : index
    %1315 = memref.load %arg7[%c6_252] : memref<10xf32, #tpu.memory_space<smem>>
    %1316 = vector.broadcast %1315 : f32 to vector<8x128xf32>
    %1317 = arith.addf %1314, %1316 : vector<8x128xf32>
    %cst_253 = arith.constant 0.000000e+00 : f32
    %1318 = vector.broadcast %cst_253 : f32 to vector<8x128xf32>
    %c7_254 = arith.constant 7 : index
    %1319 = memref.load %arg7[%c7_254] : memref<10xf32, #tpu.memory_space<smem>>
    %1320 = vector.broadcast %1319 : f32 to vector<8x128xf32>
    %1321 = arith.addf %1318, %1320 : vector<8x128xf32>
    %cst_255 = arith.constant 0.000000e+00 : f32
    %1322 = vector.broadcast %cst_255 : f32 to vector<8x128xf32>
    %c8_256 = arith.constant 8 : index
    %1323 = memref.load %arg7[%c8_256] : memref<10xf32, #tpu.memory_space<smem>>
    %1324 = vector.broadcast %1323 : f32 to vector<8x128xf32>
    %1325 = arith.addf %1322, %1324 : vector<8x128xf32>
    %cst_257 = arith.constant 0.000000e+00 : f32
    %1326 = vector.broadcast %cst_257 : f32 to vector<8x128xf32>
    %c9_258 = arith.constant 9 : index
    %1327 = memref.load %arg7[%c9_258] : memref<10xf32, #tpu.memory_space<smem>>
    %1328 = vector.broadcast %1327 : f32 to vector<8x128xf32>
    %1329 = arith.addf %1326, %1328 : vector<8x128xf32>
    %c0_259 = arith.constant 0 : index
    %1330 = memref.load %arg6[%c0_259] : memref<200xf32, #tpu.memory_space<smem>>
    %1331 = vector.broadcast %1330 : f32 to vector<8x128xf32>
    %1332 = arith.mulf %1251, %1331 : vector<8x128xf32>
    %1333 = arith.addf %1293, %1332 : vector<8x128xf32>
    %c1_260 = arith.constant 1 : index
    %1334 = memref.load %arg6[%c1_260] : memref<200xf32, #tpu.memory_space<smem>>
    %1335 = vector.broadcast %1334 : f32 to vector<8x128xf32>
    %1336 = arith.mulf %1251, %1335 : vector<8x128xf32>
    %1337 = arith.addf %1297, %1336 : vector<8x128xf32>
    %c2_261 = arith.constant 2 : index
    %1338 = memref.load %arg6[%c2_261] : memref<200xf32, #tpu.memory_space<smem>>
    %1339 = vector.broadcast %1338 : f32 to vector<8x128xf32>
    %1340 = arith.mulf %1251, %1339 : vector<8x128xf32>
    %1341 = arith.addf %1301, %1340 : vector<8x128xf32>
    %c3_262 = arith.constant 3 : index
    %1342 = memref.load %arg6[%c3_262] : memref<200xf32, #tpu.memory_space<smem>>
    %1343 = vector.broadcast %1342 : f32 to vector<8x128xf32>
    %1344 = arith.mulf %1251, %1343 : vector<8x128xf32>
    %1345 = arith.addf %1305, %1344 : vector<8x128xf32>
    %c4_263 = arith.constant 4 : index
    %1346 = memref.load %arg6[%c4_263] : memref<200xf32, #tpu.memory_space<smem>>
    %1347 = vector.broadcast %1346 : f32 to vector<8x128xf32>
    %1348 = arith.mulf %1251, %1347 : vector<8x128xf32>
    %1349 = arith.addf %1309, %1348 : vector<8x128xf32>
    %c5_264 = arith.constant 5 : index
    %1350 = memref.load %arg6[%c5_264] : memref<200xf32, #tpu.memory_space<smem>>
    %1351 = vector.broadcast %1350 : f32 to vector<8x128xf32>
    %1352 = arith.mulf %1251, %1351 : vector<8x128xf32>
    %1353 = arith.addf %1313, %1352 : vector<8x128xf32>
    %c6_265 = arith.constant 6 : index
    %1354 = memref.load %arg6[%c6_265] : memref<200xf32, #tpu.memory_space<smem>>
    %1355 = vector.broadcast %1354 : f32 to vector<8x128xf32>
    %1356 = arith.mulf %1251, %1355 : vector<8x128xf32>
    %1357 = arith.addf %1317, %1356 : vector<8x128xf32>
    %c7_266 = arith.constant 7 : index
    %1358 = memref.load %arg6[%c7_266] : memref<200xf32, #tpu.memory_space<smem>>
    %1359 = vector.broadcast %1358 : f32 to vector<8x128xf32>
    %1360 = arith.mulf %1251, %1359 : vector<8x128xf32>
    %1361 = arith.addf %1321, %1360 : vector<8x128xf32>
    %c8_267 = arith.constant 8 : index
    %1362 = memref.load %arg6[%c8_267] : memref<200xf32, #tpu.memory_space<smem>>
    %1363 = vector.broadcast %1362 : f32 to vector<8x128xf32>
    %1364 = arith.mulf %1251, %1363 : vector<8x128xf32>
    %1365 = arith.addf %1325, %1364 : vector<8x128xf32>
    %c9_268 = arith.constant 9 : index
    %1366 = memref.load %arg6[%c9_268] : memref<200xf32, #tpu.memory_space<smem>>
    %1367 = vector.broadcast %1366 : f32 to vector<8x128xf32>
    %1368 = arith.mulf %1251, %1367 : vector<8x128xf32>
    %1369 = arith.addf %1329, %1368 : vector<8x128xf32>
    %c10_269 = arith.constant 10 : index
    %1370 = memref.load %arg6[%c10_269] : memref<200xf32, #tpu.memory_space<smem>>
    %1371 = vector.broadcast %1370 : f32 to vector<8x128xf32>
    %1372 = arith.mulf %1253, %1371 : vector<8x128xf32>
    %1373 = arith.addf %1333, %1372 : vector<8x128xf32>
    %c11_270 = arith.constant 11 : index
    %1374 = memref.load %arg6[%c11_270] : memref<200xf32, #tpu.memory_space<smem>>
    %1375 = vector.broadcast %1374 : f32 to vector<8x128xf32>
    %1376 = arith.mulf %1253, %1375 : vector<8x128xf32>
    %1377 = arith.addf %1337, %1376 : vector<8x128xf32>
    %c12_271 = arith.constant 12 : index
    %1378 = memref.load %arg6[%c12_271] : memref<200xf32, #tpu.memory_space<smem>>
    %1379 = vector.broadcast %1378 : f32 to vector<8x128xf32>
    %1380 = arith.mulf %1253, %1379 : vector<8x128xf32>
    %1381 = arith.addf %1341, %1380 : vector<8x128xf32>
    %c13_272 = arith.constant 13 : index
    %1382 = memref.load %arg6[%c13_272] : memref<200xf32, #tpu.memory_space<smem>>
    %1383 = vector.broadcast %1382 : f32 to vector<8x128xf32>
    %1384 = arith.mulf %1253, %1383 : vector<8x128xf32>
    %1385 = arith.addf %1345, %1384 : vector<8x128xf32>
    %c14_273 = arith.constant 14 : index
    %1386 = memref.load %arg6[%c14_273] : memref<200xf32, #tpu.memory_space<smem>>
    %1387 = vector.broadcast %1386 : f32 to vector<8x128xf32>
    %1388 = arith.mulf %1253, %1387 : vector<8x128xf32>
    %1389 = arith.addf %1349, %1388 : vector<8x128xf32>
    %c15_274 = arith.constant 15 : index
    %1390 = memref.load %arg6[%c15_274] : memref<200xf32, #tpu.memory_space<smem>>
    %1391 = vector.broadcast %1390 : f32 to vector<8x128xf32>
    %1392 = arith.mulf %1253, %1391 : vector<8x128xf32>
    %1393 = arith.addf %1353, %1392 : vector<8x128xf32>
    %c16_275 = arith.constant 16 : index
    %1394 = memref.load %arg6[%c16_275] : memref<200xf32, #tpu.memory_space<smem>>
    %1395 = vector.broadcast %1394 : f32 to vector<8x128xf32>
    %1396 = arith.mulf %1253, %1395 : vector<8x128xf32>
    %1397 = arith.addf %1357, %1396 : vector<8x128xf32>
    %c17_276 = arith.constant 17 : index
    %1398 = memref.load %arg6[%c17_276] : memref<200xf32, #tpu.memory_space<smem>>
    %1399 = vector.broadcast %1398 : f32 to vector<8x128xf32>
    %1400 = arith.mulf %1253, %1399 : vector<8x128xf32>
    %1401 = arith.addf %1361, %1400 : vector<8x128xf32>
    %c18_277 = arith.constant 18 : index
    %1402 = memref.load %arg6[%c18_277] : memref<200xf32, #tpu.memory_space<smem>>
    %1403 = vector.broadcast %1402 : f32 to vector<8x128xf32>
    %1404 = arith.mulf %1253, %1403 : vector<8x128xf32>
    %1405 = arith.addf %1365, %1404 : vector<8x128xf32>
    %c19_278 = arith.constant 19 : index
    %1406 = memref.load %arg6[%c19_278] : memref<200xf32, #tpu.memory_space<smem>>
    %1407 = vector.broadcast %1406 : f32 to vector<8x128xf32>
    %1408 = arith.mulf %1253, %1407 : vector<8x128xf32>
    %1409 = arith.addf %1369, %1408 : vector<8x128xf32>
    %c20_279 = arith.constant 20 : index
    %1410 = memref.load %arg6[%c20_279] : memref<200xf32, #tpu.memory_space<smem>>
    %1411 = vector.broadcast %1410 : f32 to vector<8x128xf32>
    %1412 = arith.mulf %1255, %1411 : vector<8x128xf32>
    %1413 = arith.addf %1373, %1412 : vector<8x128xf32>
    %c21_280 = arith.constant 21 : index
    %1414 = memref.load %arg6[%c21_280] : memref<200xf32, #tpu.memory_space<smem>>
    %1415 = vector.broadcast %1414 : f32 to vector<8x128xf32>
    %1416 = arith.mulf %1255, %1415 : vector<8x128xf32>
    %1417 = arith.addf %1377, %1416 : vector<8x128xf32>
    %c22_281 = arith.constant 22 : index
    %1418 = memref.load %arg6[%c22_281] : memref<200xf32, #tpu.memory_space<smem>>
    %1419 = vector.broadcast %1418 : f32 to vector<8x128xf32>
    %1420 = arith.mulf %1255, %1419 : vector<8x128xf32>
    %1421 = arith.addf %1381, %1420 : vector<8x128xf32>
    %c23_282 = arith.constant 23 : index
    %1422 = memref.load %arg6[%c23_282] : memref<200xf32, #tpu.memory_space<smem>>
    %1423 = vector.broadcast %1422 : f32 to vector<8x128xf32>
    %1424 = arith.mulf %1255, %1423 : vector<8x128xf32>
    %1425 = arith.addf %1385, %1424 : vector<8x128xf32>
    %c24_283 = arith.constant 24 : index
    %1426 = memref.load %arg6[%c24_283] : memref<200xf32, #tpu.memory_space<smem>>
    %1427 = vector.broadcast %1426 : f32 to vector<8x128xf32>
    %1428 = arith.mulf %1255, %1427 : vector<8x128xf32>
    %1429 = arith.addf %1389, %1428 : vector<8x128xf32>
    %c25_284 = arith.constant 25 : index
    %1430 = memref.load %arg6[%c25_284] : memref<200xf32, #tpu.memory_space<smem>>
    %1431 = vector.broadcast %1430 : f32 to vector<8x128xf32>
    %1432 = arith.mulf %1255, %1431 : vector<8x128xf32>
    %1433 = arith.addf %1393, %1432 : vector<8x128xf32>
    %c26_285 = arith.constant 26 : index
    %1434 = memref.load %arg6[%c26_285] : memref<200xf32, #tpu.memory_space<smem>>
    %1435 = vector.broadcast %1434 : f32 to vector<8x128xf32>
    %1436 = arith.mulf %1255, %1435 : vector<8x128xf32>
    %1437 = arith.addf %1397, %1436 : vector<8x128xf32>
    %c27_286 = arith.constant 27 : index
    %1438 = memref.load %arg6[%c27_286] : memref<200xf32, #tpu.memory_space<smem>>
    %1439 = vector.broadcast %1438 : f32 to vector<8x128xf32>
    %1440 = arith.mulf %1255, %1439 : vector<8x128xf32>
    %1441 = arith.addf %1401, %1440 : vector<8x128xf32>
    %c28_287 = arith.constant 28 : index
    %1442 = memref.load %arg6[%c28_287] : memref<200xf32, #tpu.memory_space<smem>>
    %1443 = vector.broadcast %1442 : f32 to vector<8x128xf32>
    %1444 = arith.mulf %1255, %1443 : vector<8x128xf32>
    %1445 = arith.addf %1405, %1444 : vector<8x128xf32>
    %c29_288 = arith.constant 29 : index
    %1446 = memref.load %arg6[%c29_288] : memref<200xf32, #tpu.memory_space<smem>>
    %1447 = vector.broadcast %1446 : f32 to vector<8x128xf32>
    %1448 = arith.mulf %1255, %1447 : vector<8x128xf32>
    %1449 = arith.addf %1409, %1448 : vector<8x128xf32>
    %c30_289 = arith.constant 30 : index
    %1450 = memref.load %arg6[%c30_289] : memref<200xf32, #tpu.memory_space<smem>>
    %1451 = vector.broadcast %1450 : f32 to vector<8x128xf32>
    %1452 = arith.mulf %1257, %1451 : vector<8x128xf32>
    %1453 = arith.addf %1413, %1452 : vector<8x128xf32>
    %c31_290 = arith.constant 31 : index
    %1454 = memref.load %arg6[%c31_290] : memref<200xf32, #tpu.memory_space<smem>>
    %1455 = vector.broadcast %1454 : f32 to vector<8x128xf32>
    %1456 = arith.mulf %1257, %1455 : vector<8x128xf32>
    %1457 = arith.addf %1417, %1456 : vector<8x128xf32>
    %c32_291 = arith.constant 32 : index
    %1458 = memref.load %arg6[%c32_291] : memref<200xf32, #tpu.memory_space<smem>>
    %1459 = vector.broadcast %1458 : f32 to vector<8x128xf32>
    %1460 = arith.mulf %1257, %1459 : vector<8x128xf32>
    %1461 = arith.addf %1421, %1460 : vector<8x128xf32>
    %c33_292 = arith.constant 33 : index
    %1462 = memref.load %arg6[%c33_292] : memref<200xf32, #tpu.memory_space<smem>>
    %1463 = vector.broadcast %1462 : f32 to vector<8x128xf32>
    %1464 = arith.mulf %1257, %1463 : vector<8x128xf32>
    %1465 = arith.addf %1425, %1464 : vector<8x128xf32>
    %c34_293 = arith.constant 34 : index
    %1466 = memref.load %arg6[%c34_293] : memref<200xf32, #tpu.memory_space<smem>>
    %1467 = vector.broadcast %1466 : f32 to vector<8x128xf32>
    %1468 = arith.mulf %1257, %1467 : vector<8x128xf32>
    %1469 = arith.addf %1429, %1468 : vector<8x128xf32>
    %c35_294 = arith.constant 35 : index
    %1470 = memref.load %arg6[%c35_294] : memref<200xf32, #tpu.memory_space<smem>>
    %1471 = vector.broadcast %1470 : f32 to vector<8x128xf32>
    %1472 = arith.mulf %1257, %1471 : vector<8x128xf32>
    %1473 = arith.addf %1433, %1472 : vector<8x128xf32>
    %c36_295 = arith.constant 36 : index
    %1474 = memref.load %arg6[%c36_295] : memref<200xf32, #tpu.memory_space<smem>>
    %1475 = vector.broadcast %1474 : f32 to vector<8x128xf32>
    %1476 = arith.mulf %1257, %1475 : vector<8x128xf32>
    %1477 = arith.addf %1437, %1476 : vector<8x128xf32>
    %c37_296 = arith.constant 37 : index
    %1478 = memref.load %arg6[%c37_296] : memref<200xf32, #tpu.memory_space<smem>>
    %1479 = vector.broadcast %1478 : f32 to vector<8x128xf32>
    %1480 = arith.mulf %1257, %1479 : vector<8x128xf32>
    %1481 = arith.addf %1441, %1480 : vector<8x128xf32>
    %c38_297 = arith.constant 38 : index
    %1482 = memref.load %arg6[%c38_297] : memref<200xf32, #tpu.memory_space<smem>>
    %1483 = vector.broadcast %1482 : f32 to vector<8x128xf32>
    %1484 = arith.mulf %1257, %1483 : vector<8x128xf32>
    %1485 = arith.addf %1445, %1484 : vector<8x128xf32>
    %c39_298 = arith.constant 39 : index
    %1486 = memref.load %arg6[%c39_298] : memref<200xf32, #tpu.memory_space<smem>>
    %1487 = vector.broadcast %1486 : f32 to vector<8x128xf32>
    %1488 = arith.mulf %1257, %1487 : vector<8x128xf32>
    %1489 = arith.addf %1449, %1488 : vector<8x128xf32>
    %c40_299 = arith.constant 40 : index
    %1490 = memref.load %arg6[%c40_299] : memref<200xf32, #tpu.memory_space<smem>>
    %1491 = vector.broadcast %1490 : f32 to vector<8x128xf32>
    %1492 = arith.mulf %1259, %1491 : vector<8x128xf32>
    %1493 = arith.addf %1453, %1492 : vector<8x128xf32>
    %c41_300 = arith.constant 41 : index
    %1494 = memref.load %arg6[%c41_300] : memref<200xf32, #tpu.memory_space<smem>>
    %1495 = vector.broadcast %1494 : f32 to vector<8x128xf32>
    %1496 = arith.mulf %1259, %1495 : vector<8x128xf32>
    %1497 = arith.addf %1457, %1496 : vector<8x128xf32>
    %c42_301 = arith.constant 42 : index
    %1498 = memref.load %arg6[%c42_301] : memref<200xf32, #tpu.memory_space<smem>>
    %1499 = vector.broadcast %1498 : f32 to vector<8x128xf32>
    %1500 = arith.mulf %1259, %1499 : vector<8x128xf32>
    %1501 = arith.addf %1461, %1500 : vector<8x128xf32>
    %c43_302 = arith.constant 43 : index
    %1502 = memref.load %arg6[%c43_302] : memref<200xf32, #tpu.memory_space<smem>>
    %1503 = vector.broadcast %1502 : f32 to vector<8x128xf32>
    %1504 = arith.mulf %1259, %1503 : vector<8x128xf32>
    %1505 = arith.addf %1465, %1504 : vector<8x128xf32>
    %c44_303 = arith.constant 44 : index
    %1506 = memref.load %arg6[%c44_303] : memref<200xf32, #tpu.memory_space<smem>>
    %1507 = vector.broadcast %1506 : f32 to vector<8x128xf32>
    %1508 = arith.mulf %1259, %1507 : vector<8x128xf32>
    %1509 = arith.addf %1469, %1508 : vector<8x128xf32>
    %c45_304 = arith.constant 45 : index
    %1510 = memref.load %arg6[%c45_304] : memref<200xf32, #tpu.memory_space<smem>>
    %1511 = vector.broadcast %1510 : f32 to vector<8x128xf32>
    %1512 = arith.mulf %1259, %1511 : vector<8x128xf32>
    %1513 = arith.addf %1473, %1512 : vector<8x128xf32>
    %c46_305 = arith.constant 46 : index
    %1514 = memref.load %arg6[%c46_305] : memref<200xf32, #tpu.memory_space<smem>>
    %1515 = vector.broadcast %1514 : f32 to vector<8x128xf32>
    %1516 = arith.mulf %1259, %1515 : vector<8x128xf32>
    %1517 = arith.addf %1477, %1516 : vector<8x128xf32>
    %c47_306 = arith.constant 47 : index
    %1518 = memref.load %arg6[%c47_306] : memref<200xf32, #tpu.memory_space<smem>>
    %1519 = vector.broadcast %1518 : f32 to vector<8x128xf32>
    %1520 = arith.mulf %1259, %1519 : vector<8x128xf32>
    %1521 = arith.addf %1481, %1520 : vector<8x128xf32>
    %c48_307 = arith.constant 48 : index
    %1522 = memref.load %arg6[%c48_307] : memref<200xf32, #tpu.memory_space<smem>>
    %1523 = vector.broadcast %1522 : f32 to vector<8x128xf32>
    %1524 = arith.mulf %1259, %1523 : vector<8x128xf32>
    %1525 = arith.addf %1485, %1524 : vector<8x128xf32>
    %c49_308 = arith.constant 49 : index
    %1526 = memref.load %arg6[%c49_308] : memref<200xf32, #tpu.memory_space<smem>>
    %1527 = vector.broadcast %1526 : f32 to vector<8x128xf32>
    %1528 = arith.mulf %1259, %1527 : vector<8x128xf32>
    %1529 = arith.addf %1489, %1528 : vector<8x128xf32>
    %c50_309 = arith.constant 50 : index
    %1530 = memref.load %arg6[%c50_309] : memref<200xf32, #tpu.memory_space<smem>>
    %1531 = vector.broadcast %1530 : f32 to vector<8x128xf32>
    %1532 = arith.mulf %1261, %1531 : vector<8x128xf32>
    %1533 = arith.addf %1493, %1532 : vector<8x128xf32>
    %c51_310 = arith.constant 51 : index
    %1534 = memref.load %arg6[%c51_310] : memref<200xf32, #tpu.memory_space<smem>>
    %1535 = vector.broadcast %1534 : f32 to vector<8x128xf32>
    %1536 = arith.mulf %1261, %1535 : vector<8x128xf32>
    %1537 = arith.addf %1497, %1536 : vector<8x128xf32>
    %c52_311 = arith.constant 52 : index
    %1538 = memref.load %arg6[%c52_311] : memref<200xf32, #tpu.memory_space<smem>>
    %1539 = vector.broadcast %1538 : f32 to vector<8x128xf32>
    %1540 = arith.mulf %1261, %1539 : vector<8x128xf32>
    %1541 = arith.addf %1501, %1540 : vector<8x128xf32>
    %c53_312 = arith.constant 53 : index
    %1542 = memref.load %arg6[%c53_312] : memref<200xf32, #tpu.memory_space<smem>>
    %1543 = vector.broadcast %1542 : f32 to vector<8x128xf32>
    %1544 = arith.mulf %1261, %1543 : vector<8x128xf32>
    %1545 = arith.addf %1505, %1544 : vector<8x128xf32>
    %c54_313 = arith.constant 54 : index
    %1546 = memref.load %arg6[%c54_313] : memref<200xf32, #tpu.memory_space<smem>>
    %1547 = vector.broadcast %1546 : f32 to vector<8x128xf32>
    %1548 = arith.mulf %1261, %1547 : vector<8x128xf32>
    %1549 = arith.addf %1509, %1548 : vector<8x128xf32>
    %c55_314 = arith.constant 55 : index
    %1550 = memref.load %arg6[%c55_314] : memref<200xf32, #tpu.memory_space<smem>>
    %1551 = vector.broadcast %1550 : f32 to vector<8x128xf32>
    %1552 = arith.mulf %1261, %1551 : vector<8x128xf32>
    %1553 = arith.addf %1513, %1552 : vector<8x128xf32>
    %c56_315 = arith.constant 56 : index
    %1554 = memref.load %arg6[%c56_315] : memref<200xf32, #tpu.memory_space<smem>>
    %1555 = vector.broadcast %1554 : f32 to vector<8x128xf32>
    %1556 = arith.mulf %1261, %1555 : vector<8x128xf32>
    %1557 = arith.addf %1517, %1556 : vector<8x128xf32>
    %c57_316 = arith.constant 57 : index
    %1558 = memref.load %arg6[%c57_316] : memref<200xf32, #tpu.memory_space<smem>>
    %1559 = vector.broadcast %1558 : f32 to vector<8x128xf32>
    %1560 = arith.mulf %1261, %1559 : vector<8x128xf32>
    %1561 = arith.addf %1521, %1560 : vector<8x128xf32>
    %c58_317 = arith.constant 58 : index
    %1562 = memref.load %arg6[%c58_317] : memref<200xf32, #tpu.memory_space<smem>>
    %1563 = vector.broadcast %1562 : f32 to vector<8x128xf32>
    %1564 = arith.mulf %1261, %1563 : vector<8x128xf32>
    %1565 = arith.addf %1525, %1564 : vector<8x128xf32>
    %c59_318 = arith.constant 59 : index
    %1566 = memref.load %arg6[%c59_318] : memref<200xf32, #tpu.memory_space<smem>>
    %1567 = vector.broadcast %1566 : f32 to vector<8x128xf32>
    %1568 = arith.mulf %1261, %1567 : vector<8x128xf32>
    %1569 = arith.addf %1529, %1568 : vector<8x128xf32>
    %c60_319 = arith.constant 60 : index
    %1570 = memref.load %arg6[%c60_319] : memref<200xf32, #tpu.memory_space<smem>>
    %1571 = vector.broadcast %1570 : f32 to vector<8x128xf32>
    %1572 = arith.mulf %1263, %1571 : vector<8x128xf32>
    %1573 = arith.addf %1533, %1572 : vector<8x128xf32>
    %c61_320 = arith.constant 61 : index
    %1574 = memref.load %arg6[%c61_320] : memref<200xf32, #tpu.memory_space<smem>>
    %1575 = vector.broadcast %1574 : f32 to vector<8x128xf32>
    %1576 = arith.mulf %1263, %1575 : vector<8x128xf32>
    %1577 = arith.addf %1537, %1576 : vector<8x128xf32>
    %c62_321 = arith.constant 62 : index
    %1578 = memref.load %arg6[%c62_321] : memref<200xf32, #tpu.memory_space<smem>>
    %1579 = vector.broadcast %1578 : f32 to vector<8x128xf32>
    %1580 = arith.mulf %1263, %1579 : vector<8x128xf32>
    %1581 = arith.addf %1541, %1580 : vector<8x128xf32>
    %c63_322 = arith.constant 63 : index
    %1582 = memref.load %arg6[%c63_322] : memref<200xf32, #tpu.memory_space<smem>>
    %1583 = vector.broadcast %1582 : f32 to vector<8x128xf32>
    %1584 = arith.mulf %1263, %1583 : vector<8x128xf32>
    %1585 = arith.addf %1545, %1584 : vector<8x128xf32>
    %c64_323 = arith.constant 64 : index
    %1586 = memref.load %arg6[%c64_323] : memref<200xf32, #tpu.memory_space<smem>>
    %1587 = vector.broadcast %1586 : f32 to vector<8x128xf32>
    %1588 = arith.mulf %1263, %1587 : vector<8x128xf32>
    %1589 = arith.addf %1549, %1588 : vector<8x128xf32>
    %c65_324 = arith.constant 65 : index
    %1590 = memref.load %arg6[%c65_324] : memref<200xf32, #tpu.memory_space<smem>>
    %1591 = vector.broadcast %1590 : f32 to vector<8x128xf32>
    %1592 = arith.mulf %1263, %1591 : vector<8x128xf32>
    %1593 = arith.addf %1553, %1592 : vector<8x128xf32>
    %c66_325 = arith.constant 66 : index
    %1594 = memref.load %arg6[%c66_325] : memref<200xf32, #tpu.memory_space<smem>>
    %1595 = vector.broadcast %1594 : f32 to vector<8x128xf32>
    %1596 = arith.mulf %1263, %1595 : vector<8x128xf32>
    %1597 = arith.addf %1557, %1596 : vector<8x128xf32>
    %c67_326 = arith.constant 67 : index
    %1598 = memref.load %arg6[%c67_326] : memref<200xf32, #tpu.memory_space<smem>>
    %1599 = vector.broadcast %1598 : f32 to vector<8x128xf32>
    %1600 = arith.mulf %1263, %1599 : vector<8x128xf32>
    %1601 = arith.addf %1561, %1600 : vector<8x128xf32>
    %c68_327 = arith.constant 68 : index
    %1602 = memref.load %arg6[%c68_327] : memref<200xf32, #tpu.memory_space<smem>>
    %1603 = vector.broadcast %1602 : f32 to vector<8x128xf32>
    %1604 = arith.mulf %1263, %1603 : vector<8x128xf32>
    %1605 = arith.addf %1565, %1604 : vector<8x128xf32>
    %c69_328 = arith.constant 69 : index
    %1606 = memref.load %arg6[%c69_328] : memref<200xf32, #tpu.memory_space<smem>>
    %1607 = vector.broadcast %1606 : f32 to vector<8x128xf32>
    %1608 = arith.mulf %1263, %1607 : vector<8x128xf32>
    %1609 = arith.addf %1569, %1608 : vector<8x128xf32>
    %c70_329 = arith.constant 70 : index
    %1610 = memref.load %arg6[%c70_329] : memref<200xf32, #tpu.memory_space<smem>>
    %1611 = vector.broadcast %1610 : f32 to vector<8x128xf32>
    %1612 = arith.mulf %1265, %1611 : vector<8x128xf32>
    %1613 = arith.addf %1573, %1612 : vector<8x128xf32>
    %c71_330 = arith.constant 71 : index
    %1614 = memref.load %arg6[%c71_330] : memref<200xf32, #tpu.memory_space<smem>>
    %1615 = vector.broadcast %1614 : f32 to vector<8x128xf32>
    %1616 = arith.mulf %1265, %1615 : vector<8x128xf32>
    %1617 = arith.addf %1577, %1616 : vector<8x128xf32>
    %c72_331 = arith.constant 72 : index
    %1618 = memref.load %arg6[%c72_331] : memref<200xf32, #tpu.memory_space<smem>>
    %1619 = vector.broadcast %1618 : f32 to vector<8x128xf32>
    %1620 = arith.mulf %1265, %1619 : vector<8x128xf32>
    %1621 = arith.addf %1581, %1620 : vector<8x128xf32>
    %c73_332 = arith.constant 73 : index
    %1622 = memref.load %arg6[%c73_332] : memref<200xf32, #tpu.memory_space<smem>>
    %1623 = vector.broadcast %1622 : f32 to vector<8x128xf32>
    %1624 = arith.mulf %1265, %1623 : vector<8x128xf32>
    %1625 = arith.addf %1585, %1624 : vector<8x128xf32>
    %c74_333 = arith.constant 74 : index
    %1626 = memref.load %arg6[%c74_333] : memref<200xf32, #tpu.memory_space<smem>>
    %1627 = vector.broadcast %1626 : f32 to vector<8x128xf32>
    %1628 = arith.mulf %1265, %1627 : vector<8x128xf32>
    %1629 = arith.addf %1589, %1628 : vector<8x128xf32>
    %c75_334 = arith.constant 75 : index
    %1630 = memref.load %arg6[%c75_334] : memref<200xf32, #tpu.memory_space<smem>>
    %1631 = vector.broadcast %1630 : f32 to vector<8x128xf32>
    %1632 = arith.mulf %1265, %1631 : vector<8x128xf32>
    %1633 = arith.addf %1593, %1632 : vector<8x128xf32>
    %c76_335 = arith.constant 76 : index
    %1634 = memref.load %arg6[%c76_335] : memref<200xf32, #tpu.memory_space<smem>>
    %1635 = vector.broadcast %1634 : f32 to vector<8x128xf32>
    %1636 = arith.mulf %1265, %1635 : vector<8x128xf32>
    %1637 = arith.addf %1597, %1636 : vector<8x128xf32>
    %c77_336 = arith.constant 77 : index
    %1638 = memref.load %arg6[%c77_336] : memref<200xf32, #tpu.memory_space<smem>>
    %1639 = vector.broadcast %1638 : f32 to vector<8x128xf32>
    %1640 = arith.mulf %1265, %1639 : vector<8x128xf32>
    %1641 = arith.addf %1601, %1640 : vector<8x128xf32>
    %c78_337 = arith.constant 78 : index
    %1642 = memref.load %arg6[%c78_337] : memref<200xf32, #tpu.memory_space<smem>>
    %1643 = vector.broadcast %1642 : f32 to vector<8x128xf32>
    %1644 = arith.mulf %1265, %1643 : vector<8x128xf32>
    %1645 = arith.addf %1605, %1644 : vector<8x128xf32>
    %c79_338 = arith.constant 79 : index
    %1646 = memref.load %arg6[%c79_338] : memref<200xf32, #tpu.memory_space<smem>>
    %1647 = vector.broadcast %1646 : f32 to vector<8x128xf32>
    %1648 = arith.mulf %1265, %1647 : vector<8x128xf32>
    %1649 = arith.addf %1609, %1648 : vector<8x128xf32>
    %c80_339 = arith.constant 80 : index
    %1650 = memref.load %arg6[%c80_339] : memref<200xf32, #tpu.memory_space<smem>>
    %1651 = vector.broadcast %1650 : f32 to vector<8x128xf32>
    %1652 = arith.mulf %1267, %1651 : vector<8x128xf32>
    %1653 = arith.addf %1613, %1652 : vector<8x128xf32>
    %c81_340 = arith.constant 81 : index
    %1654 = memref.load %arg6[%c81_340] : memref<200xf32, #tpu.memory_space<smem>>
    %1655 = vector.broadcast %1654 : f32 to vector<8x128xf32>
    %1656 = arith.mulf %1267, %1655 : vector<8x128xf32>
    %1657 = arith.addf %1617, %1656 : vector<8x128xf32>
    %c82_341 = arith.constant 82 : index
    %1658 = memref.load %arg6[%c82_341] : memref<200xf32, #tpu.memory_space<smem>>
    %1659 = vector.broadcast %1658 : f32 to vector<8x128xf32>
    %1660 = arith.mulf %1267, %1659 : vector<8x128xf32>
    %1661 = arith.addf %1621, %1660 : vector<8x128xf32>
    %c83_342 = arith.constant 83 : index
    %1662 = memref.load %arg6[%c83_342] : memref<200xf32, #tpu.memory_space<smem>>
    %1663 = vector.broadcast %1662 : f32 to vector<8x128xf32>
    %1664 = arith.mulf %1267, %1663 : vector<8x128xf32>
    %1665 = arith.addf %1625, %1664 : vector<8x128xf32>
    %c84_343 = arith.constant 84 : index
    %1666 = memref.load %arg6[%c84_343] : memref<200xf32, #tpu.memory_space<smem>>
    %1667 = vector.broadcast %1666 : f32 to vector<8x128xf32>
    %1668 = arith.mulf %1267, %1667 : vector<8x128xf32>
    %1669 = arith.addf %1629, %1668 : vector<8x128xf32>
    %c85_344 = arith.constant 85 : index
    %1670 = memref.load %arg6[%c85_344] : memref<200xf32, #tpu.memory_space<smem>>
    %1671 = vector.broadcast %1670 : f32 to vector<8x128xf32>
    %1672 = arith.mulf %1267, %1671 : vector<8x128xf32>
    %1673 = arith.addf %1633, %1672 : vector<8x128xf32>
    %c86_345 = arith.constant 86 : index
    %1674 = memref.load %arg6[%c86_345] : memref<200xf32, #tpu.memory_space<smem>>
    %1675 = vector.broadcast %1674 : f32 to vector<8x128xf32>
    %1676 = arith.mulf %1267, %1675 : vector<8x128xf32>
    %1677 = arith.addf %1637, %1676 : vector<8x128xf32>
    %c87_346 = arith.constant 87 : index
    %1678 = memref.load %arg6[%c87_346] : memref<200xf32, #tpu.memory_space<smem>>
    %1679 = vector.broadcast %1678 : f32 to vector<8x128xf32>
    %1680 = arith.mulf %1267, %1679 : vector<8x128xf32>
    %1681 = arith.addf %1641, %1680 : vector<8x128xf32>
    %c88_347 = arith.constant 88 : index
    %1682 = memref.load %arg6[%c88_347] : memref<200xf32, #tpu.memory_space<smem>>
    %1683 = vector.broadcast %1682 : f32 to vector<8x128xf32>
    %1684 = arith.mulf %1267, %1683 : vector<8x128xf32>
    %1685 = arith.addf %1645, %1684 : vector<8x128xf32>
    %c89_348 = arith.constant 89 : index
    %1686 = memref.load %arg6[%c89_348] : memref<200xf32, #tpu.memory_space<smem>>
    %1687 = vector.broadcast %1686 : f32 to vector<8x128xf32>
    %1688 = arith.mulf %1267, %1687 : vector<8x128xf32>
    %1689 = arith.addf %1649, %1688 : vector<8x128xf32>
    %c90_349 = arith.constant 90 : index
    %1690 = memref.load %arg6[%c90_349] : memref<200xf32, #tpu.memory_space<smem>>
    %1691 = vector.broadcast %1690 : f32 to vector<8x128xf32>
    %1692 = arith.mulf %1269, %1691 : vector<8x128xf32>
    %1693 = arith.addf %1653, %1692 : vector<8x128xf32>
    %c91_350 = arith.constant 91 : index
    %1694 = memref.load %arg6[%c91_350] : memref<200xf32, #tpu.memory_space<smem>>
    %1695 = vector.broadcast %1694 : f32 to vector<8x128xf32>
    %1696 = arith.mulf %1269, %1695 : vector<8x128xf32>
    %1697 = arith.addf %1657, %1696 : vector<8x128xf32>
    %c92_351 = arith.constant 92 : index
    %1698 = memref.load %arg6[%c92_351] : memref<200xf32, #tpu.memory_space<smem>>
    %1699 = vector.broadcast %1698 : f32 to vector<8x128xf32>
    %1700 = arith.mulf %1269, %1699 : vector<8x128xf32>
    %1701 = arith.addf %1661, %1700 : vector<8x128xf32>
    %c93_352 = arith.constant 93 : index
    %1702 = memref.load %arg6[%c93_352] : memref<200xf32, #tpu.memory_space<smem>>
    %1703 = vector.broadcast %1702 : f32 to vector<8x128xf32>
    %1704 = arith.mulf %1269, %1703 : vector<8x128xf32>
    %1705 = arith.addf %1665, %1704 : vector<8x128xf32>
    %c94_353 = arith.constant 94 : index
    %1706 = memref.load %arg6[%c94_353] : memref<200xf32, #tpu.memory_space<smem>>
    %1707 = vector.broadcast %1706 : f32 to vector<8x128xf32>
    %1708 = arith.mulf %1269, %1707 : vector<8x128xf32>
    %1709 = arith.addf %1669, %1708 : vector<8x128xf32>
    %c95_354 = arith.constant 95 : index
    %1710 = memref.load %arg6[%c95_354] : memref<200xf32, #tpu.memory_space<smem>>
    %1711 = vector.broadcast %1710 : f32 to vector<8x128xf32>
    %1712 = arith.mulf %1269, %1711 : vector<8x128xf32>
    %1713 = arith.addf %1673, %1712 : vector<8x128xf32>
    %c96_355 = arith.constant 96 : index
    %1714 = memref.load %arg6[%c96_355] : memref<200xf32, #tpu.memory_space<smem>>
    %1715 = vector.broadcast %1714 : f32 to vector<8x128xf32>
    %1716 = arith.mulf %1269, %1715 : vector<8x128xf32>
    %1717 = arith.addf %1677, %1716 : vector<8x128xf32>
    %c97_356 = arith.constant 97 : index
    %1718 = memref.load %arg6[%c97_356] : memref<200xf32, #tpu.memory_space<smem>>
    %1719 = vector.broadcast %1718 : f32 to vector<8x128xf32>
    %1720 = arith.mulf %1269, %1719 : vector<8x128xf32>
    %1721 = arith.addf %1681, %1720 : vector<8x128xf32>
    %c98_357 = arith.constant 98 : index
    %1722 = memref.load %arg6[%c98_357] : memref<200xf32, #tpu.memory_space<smem>>
    %1723 = vector.broadcast %1722 : f32 to vector<8x128xf32>
    %1724 = arith.mulf %1269, %1723 : vector<8x128xf32>
    %1725 = arith.addf %1685, %1724 : vector<8x128xf32>
    %c99_358 = arith.constant 99 : index
    %1726 = memref.load %arg6[%c99_358] : memref<200xf32, #tpu.memory_space<smem>>
    %1727 = vector.broadcast %1726 : f32 to vector<8x128xf32>
    %1728 = arith.mulf %1269, %1727 : vector<8x128xf32>
    %1729 = arith.addf %1689, %1728 : vector<8x128xf32>
    %c100_359 = arith.constant 100 : index
    %1730 = memref.load %arg6[%c100_359] : memref<200xf32, #tpu.memory_space<smem>>
    %1731 = vector.broadcast %1730 : f32 to vector<8x128xf32>
    %1732 = arith.mulf %1271, %1731 : vector<8x128xf32>
    %1733 = arith.addf %1693, %1732 : vector<8x128xf32>
    %c101_360 = arith.constant 101 : index
    %1734 = memref.load %arg6[%c101_360] : memref<200xf32, #tpu.memory_space<smem>>
    %1735 = vector.broadcast %1734 : f32 to vector<8x128xf32>
    %1736 = arith.mulf %1271, %1735 : vector<8x128xf32>
    %1737 = arith.addf %1697, %1736 : vector<8x128xf32>
    %c102_361 = arith.constant 102 : index
    %1738 = memref.load %arg6[%c102_361] : memref<200xf32, #tpu.memory_space<smem>>
    %1739 = vector.broadcast %1738 : f32 to vector<8x128xf32>
    %1740 = arith.mulf %1271, %1739 : vector<8x128xf32>
    %1741 = arith.addf %1701, %1740 : vector<8x128xf32>
    %c103_362 = arith.constant 103 : index
    %1742 = memref.load %arg6[%c103_362] : memref<200xf32, #tpu.memory_space<smem>>
    %1743 = vector.broadcast %1742 : f32 to vector<8x128xf32>
    %1744 = arith.mulf %1271, %1743 : vector<8x128xf32>
    %1745 = arith.addf %1705, %1744 : vector<8x128xf32>
    %c104_363 = arith.constant 104 : index
    %1746 = memref.load %arg6[%c104_363] : memref<200xf32, #tpu.memory_space<smem>>
    %1747 = vector.broadcast %1746 : f32 to vector<8x128xf32>
    %1748 = arith.mulf %1271, %1747 : vector<8x128xf32>
    %1749 = arith.addf %1709, %1748 : vector<8x128xf32>
    %c105_364 = arith.constant 105 : index
    %1750 = memref.load %arg6[%c105_364] : memref<200xf32, #tpu.memory_space<smem>>
    %1751 = vector.broadcast %1750 : f32 to vector<8x128xf32>
    %1752 = arith.mulf %1271, %1751 : vector<8x128xf32>
    %1753 = arith.addf %1713, %1752 : vector<8x128xf32>
    %c106_365 = arith.constant 106 : index
    %1754 = memref.load %arg6[%c106_365] : memref<200xf32, #tpu.memory_space<smem>>
    %1755 = vector.broadcast %1754 : f32 to vector<8x128xf32>
    %1756 = arith.mulf %1271, %1755 : vector<8x128xf32>
    %1757 = arith.addf %1717, %1756 : vector<8x128xf32>
    %c107_366 = arith.constant 107 : index
    %1758 = memref.load %arg6[%c107_366] : memref<200xf32, #tpu.memory_space<smem>>
    %1759 = vector.broadcast %1758 : f32 to vector<8x128xf32>
    %1760 = arith.mulf %1271, %1759 : vector<8x128xf32>
    %1761 = arith.addf %1721, %1760 : vector<8x128xf32>
    %c108_367 = arith.constant 108 : index
    %1762 = memref.load %arg6[%c108_367] : memref<200xf32, #tpu.memory_space<smem>>
    %1763 = vector.broadcast %1762 : f32 to vector<8x128xf32>
    %1764 = arith.mulf %1271, %1763 : vector<8x128xf32>
    %1765 = arith.addf %1725, %1764 : vector<8x128xf32>
    %c109_368 = arith.constant 109 : index
    %1766 = memref.load %arg6[%c109_368] : memref<200xf32, #tpu.memory_space<smem>>
    %1767 = vector.broadcast %1766 : f32 to vector<8x128xf32>
    %1768 = arith.mulf %1271, %1767 : vector<8x128xf32>
    %1769 = arith.addf %1729, %1768 : vector<8x128xf32>
    %c110_369 = arith.constant 110 : index
    %1770 = memref.load %arg6[%c110_369] : memref<200xf32, #tpu.memory_space<smem>>
    %1771 = vector.broadcast %1770 : f32 to vector<8x128xf32>
    %1772 = arith.mulf %1273, %1771 : vector<8x128xf32>
    %1773 = arith.addf %1733, %1772 : vector<8x128xf32>
    %c111_370 = arith.constant 111 : index
    %1774 = memref.load %arg6[%c111_370] : memref<200xf32, #tpu.memory_space<smem>>
    %1775 = vector.broadcast %1774 : f32 to vector<8x128xf32>
    %1776 = arith.mulf %1273, %1775 : vector<8x128xf32>
    %1777 = arith.addf %1737, %1776 : vector<8x128xf32>
    %c112_371 = arith.constant 112 : index
    %1778 = memref.load %arg6[%c112_371] : memref<200xf32, #tpu.memory_space<smem>>
    %1779 = vector.broadcast %1778 : f32 to vector<8x128xf32>
    %1780 = arith.mulf %1273, %1779 : vector<8x128xf32>
    %1781 = arith.addf %1741, %1780 : vector<8x128xf32>
    %c113_372 = arith.constant 113 : index
    %1782 = memref.load %arg6[%c113_372] : memref<200xf32, #tpu.memory_space<smem>>
    %1783 = vector.broadcast %1782 : f32 to vector<8x128xf32>
    %1784 = arith.mulf %1273, %1783 : vector<8x128xf32>
    %1785 = arith.addf %1745, %1784 : vector<8x128xf32>
    %c114_373 = arith.constant 114 : index
    %1786 = memref.load %arg6[%c114_373] : memref<200xf32, #tpu.memory_space<smem>>
    %1787 = vector.broadcast %1786 : f32 to vector<8x128xf32>
    %1788 = arith.mulf %1273, %1787 : vector<8x128xf32>
    %1789 = arith.addf %1749, %1788 : vector<8x128xf32>
    %c115_374 = arith.constant 115 : index
    %1790 = memref.load %arg6[%c115_374] : memref<200xf32, #tpu.memory_space<smem>>
    %1791 = vector.broadcast %1790 : f32 to vector<8x128xf32>
    %1792 = arith.mulf %1273, %1791 : vector<8x128xf32>
    %1793 = arith.addf %1753, %1792 : vector<8x128xf32>
    %c116_375 = arith.constant 116 : index
    %1794 = memref.load %arg6[%c116_375] : memref<200xf32, #tpu.memory_space<smem>>
    %1795 = vector.broadcast %1794 : f32 to vector<8x128xf32>
    %1796 = arith.mulf %1273, %1795 : vector<8x128xf32>
    %1797 = arith.addf %1757, %1796 : vector<8x128xf32>
    %c117_376 = arith.constant 117 : index
    %1798 = memref.load %arg6[%c117_376] : memref<200xf32, #tpu.memory_space<smem>>
    %1799 = vector.broadcast %1798 : f32 to vector<8x128xf32>
    %1800 = arith.mulf %1273, %1799 : vector<8x128xf32>
    %1801 = arith.addf %1761, %1800 : vector<8x128xf32>
    %c118_377 = arith.constant 118 : index
    %1802 = memref.load %arg6[%c118_377] : memref<200xf32, #tpu.memory_space<smem>>
    %1803 = vector.broadcast %1802 : f32 to vector<8x128xf32>
    %1804 = arith.mulf %1273, %1803 : vector<8x128xf32>
    %1805 = arith.addf %1765, %1804 : vector<8x128xf32>
    %c119_378 = arith.constant 119 : index
    %1806 = memref.load %arg6[%c119_378] : memref<200xf32, #tpu.memory_space<smem>>
    %1807 = vector.broadcast %1806 : f32 to vector<8x128xf32>
    %1808 = arith.mulf %1273, %1807 : vector<8x128xf32>
    %1809 = arith.addf %1769, %1808 : vector<8x128xf32>
    %c120_379 = arith.constant 120 : index
    %1810 = memref.load %arg6[%c120_379] : memref<200xf32, #tpu.memory_space<smem>>
    %1811 = vector.broadcast %1810 : f32 to vector<8x128xf32>
    %1812 = arith.mulf %1275, %1811 : vector<8x128xf32>
    %1813 = arith.addf %1773, %1812 : vector<8x128xf32>
    %c121_380 = arith.constant 121 : index
    %1814 = memref.load %arg6[%c121_380] : memref<200xf32, #tpu.memory_space<smem>>
    %1815 = vector.broadcast %1814 : f32 to vector<8x128xf32>
    %1816 = arith.mulf %1275, %1815 : vector<8x128xf32>
    %1817 = arith.addf %1777, %1816 : vector<8x128xf32>
    %c122_381 = arith.constant 122 : index
    %1818 = memref.load %arg6[%c122_381] : memref<200xf32, #tpu.memory_space<smem>>
    %1819 = vector.broadcast %1818 : f32 to vector<8x128xf32>
    %1820 = arith.mulf %1275, %1819 : vector<8x128xf32>
    %1821 = arith.addf %1781, %1820 : vector<8x128xf32>
    %c123_382 = arith.constant 123 : index
    %1822 = memref.load %arg6[%c123_382] : memref<200xf32, #tpu.memory_space<smem>>
    %1823 = vector.broadcast %1822 : f32 to vector<8x128xf32>
    %1824 = arith.mulf %1275, %1823 : vector<8x128xf32>
    %1825 = arith.addf %1785, %1824 : vector<8x128xf32>
    %c124_383 = arith.constant 124 : index
    %1826 = memref.load %arg6[%c124_383] : memref<200xf32, #tpu.memory_space<smem>>
    %1827 = vector.broadcast %1826 : f32 to vector<8x128xf32>
    %1828 = arith.mulf %1275, %1827 : vector<8x128xf32>
    %1829 = arith.addf %1789, %1828 : vector<8x128xf32>
    %c125_384 = arith.constant 125 : index
    %1830 = memref.load %arg6[%c125_384] : memref<200xf32, #tpu.memory_space<smem>>
    %1831 = vector.broadcast %1830 : f32 to vector<8x128xf32>
    %1832 = arith.mulf %1275, %1831 : vector<8x128xf32>
    %1833 = arith.addf %1793, %1832 : vector<8x128xf32>
    %c126_385 = arith.constant 126 : index
    %1834 = memref.load %arg6[%c126_385] : memref<200xf32, #tpu.memory_space<smem>>
    %1835 = vector.broadcast %1834 : f32 to vector<8x128xf32>
    %1836 = arith.mulf %1275, %1835 : vector<8x128xf32>
    %1837 = arith.addf %1797, %1836 : vector<8x128xf32>
    %c127_386 = arith.constant 127 : index
    %1838 = memref.load %arg6[%c127_386] : memref<200xf32, #tpu.memory_space<smem>>
    %1839 = vector.broadcast %1838 : f32 to vector<8x128xf32>
    %1840 = arith.mulf %1275, %1839 : vector<8x128xf32>
    %1841 = arith.addf %1801, %1840 : vector<8x128xf32>
    %c128_387 = arith.constant 128 : index
    %1842 = memref.load %arg6[%c128_387] : memref<200xf32, #tpu.memory_space<smem>>
    %1843 = vector.broadcast %1842 : f32 to vector<8x128xf32>
    %1844 = arith.mulf %1275, %1843 : vector<8x128xf32>
    %1845 = arith.addf %1805, %1844 : vector<8x128xf32>
    %c129_388 = arith.constant 129 : index
    %1846 = memref.load %arg6[%c129_388] : memref<200xf32, #tpu.memory_space<smem>>
    %1847 = vector.broadcast %1846 : f32 to vector<8x128xf32>
    %1848 = arith.mulf %1275, %1847 : vector<8x128xf32>
    %1849 = arith.addf %1809, %1848 : vector<8x128xf32>
    %c130_389 = arith.constant 130 : index
    %1850 = memref.load %arg6[%c130_389] : memref<200xf32, #tpu.memory_space<smem>>
    %1851 = vector.broadcast %1850 : f32 to vector<8x128xf32>
    %1852 = arith.mulf %1277, %1851 : vector<8x128xf32>
    %1853 = arith.addf %1813, %1852 : vector<8x128xf32>
    %c131_390 = arith.constant 131 : index
    %1854 = memref.load %arg6[%c131_390] : memref<200xf32, #tpu.memory_space<smem>>
    %1855 = vector.broadcast %1854 : f32 to vector<8x128xf32>
    %1856 = arith.mulf %1277, %1855 : vector<8x128xf32>
    %1857 = arith.addf %1817, %1856 : vector<8x128xf32>
    %c132_391 = arith.constant 132 : index
    %1858 = memref.load %arg6[%c132_391] : memref<200xf32, #tpu.memory_space<smem>>
    %1859 = vector.broadcast %1858 : f32 to vector<8x128xf32>
    %1860 = arith.mulf %1277, %1859 : vector<8x128xf32>
    %1861 = arith.addf %1821, %1860 : vector<8x128xf32>
    %c133_392 = arith.constant 133 : index
    %1862 = memref.load %arg6[%c133_392] : memref<200xf32, #tpu.memory_space<smem>>
    %1863 = vector.broadcast %1862 : f32 to vector<8x128xf32>
    %1864 = arith.mulf %1277, %1863 : vector<8x128xf32>
    %1865 = arith.addf %1825, %1864 : vector<8x128xf32>
    %c134_393 = arith.constant 134 : index
    %1866 = memref.load %arg6[%c134_393] : memref<200xf32, #tpu.memory_space<smem>>
    %1867 = vector.broadcast %1866 : f32 to vector<8x128xf32>
    %1868 = arith.mulf %1277, %1867 : vector<8x128xf32>
    %1869 = arith.addf %1829, %1868 : vector<8x128xf32>
    %c135_394 = arith.constant 135 : index
    %1870 = memref.load %arg6[%c135_394] : memref<200xf32, #tpu.memory_space<smem>>
    %1871 = vector.broadcast %1870 : f32 to vector<8x128xf32>
    %1872 = arith.mulf %1277, %1871 : vector<8x128xf32>
    %1873 = arith.addf %1833, %1872 : vector<8x128xf32>
    %c136_395 = arith.constant 136 : index
    %1874 = memref.load %arg6[%c136_395] : memref<200xf32, #tpu.memory_space<smem>>
    %1875 = vector.broadcast %1874 : f32 to vector<8x128xf32>
    %1876 = arith.mulf %1277, %1875 : vector<8x128xf32>
    %1877 = arith.addf %1837, %1876 : vector<8x128xf32>
    %c137_396 = arith.constant 137 : index
    %1878 = memref.load %arg6[%c137_396] : memref<200xf32, #tpu.memory_space<smem>>
    %1879 = vector.broadcast %1878 : f32 to vector<8x128xf32>
    %1880 = arith.mulf %1277, %1879 : vector<8x128xf32>
    %1881 = arith.addf %1841, %1880 : vector<8x128xf32>
    %c138_397 = arith.constant 138 : index
    %1882 = memref.load %arg6[%c138_397] : memref<200xf32, #tpu.memory_space<smem>>
    %1883 = vector.broadcast %1882 : f32 to vector<8x128xf32>
    %1884 = arith.mulf %1277, %1883 : vector<8x128xf32>
    %1885 = arith.addf %1845, %1884 : vector<8x128xf32>
    %c139_398 = arith.constant 139 : index
    %1886 = memref.load %arg6[%c139_398] : memref<200xf32, #tpu.memory_space<smem>>
    %1887 = vector.broadcast %1886 : f32 to vector<8x128xf32>
    %1888 = arith.mulf %1277, %1887 : vector<8x128xf32>
    %1889 = arith.addf %1849, %1888 : vector<8x128xf32>
    %c140_399 = arith.constant 140 : index
    %1890 = memref.load %arg6[%c140_399] : memref<200xf32, #tpu.memory_space<smem>>
    %1891 = vector.broadcast %1890 : f32 to vector<8x128xf32>
    %1892 = arith.mulf %1279, %1891 : vector<8x128xf32>
    %1893 = arith.addf %1853, %1892 : vector<8x128xf32>
    %c141_400 = arith.constant 141 : index
    %1894 = memref.load %arg6[%c141_400] : memref<200xf32, #tpu.memory_space<smem>>
    %1895 = vector.broadcast %1894 : f32 to vector<8x128xf32>
    %1896 = arith.mulf %1279, %1895 : vector<8x128xf32>
    %1897 = arith.addf %1857, %1896 : vector<8x128xf32>
    %c142_401 = arith.constant 142 : index
    %1898 = memref.load %arg6[%c142_401] : memref<200xf32, #tpu.memory_space<smem>>
    %1899 = vector.broadcast %1898 : f32 to vector<8x128xf32>
    %1900 = arith.mulf %1279, %1899 : vector<8x128xf32>
    %1901 = arith.addf %1861, %1900 : vector<8x128xf32>
    %c143_402 = arith.constant 143 : index
    %1902 = memref.load %arg6[%c143_402] : memref<200xf32, #tpu.memory_space<smem>>
    %1903 = vector.broadcast %1902 : f32 to vector<8x128xf32>
    %1904 = arith.mulf %1279, %1903 : vector<8x128xf32>
    %1905 = arith.addf %1865, %1904 : vector<8x128xf32>
    %c144_403 = arith.constant 144 : index
    %1906 = memref.load %arg6[%c144_403] : memref<200xf32, #tpu.memory_space<smem>>
    %1907 = vector.broadcast %1906 : f32 to vector<8x128xf32>
    %1908 = arith.mulf %1279, %1907 : vector<8x128xf32>
    %1909 = arith.addf %1869, %1908 : vector<8x128xf32>
    %c145_404 = arith.constant 145 : index
    %1910 = memref.load %arg6[%c145_404] : memref<200xf32, #tpu.memory_space<smem>>
    %1911 = vector.broadcast %1910 : f32 to vector<8x128xf32>
    %1912 = arith.mulf %1279, %1911 : vector<8x128xf32>
    %1913 = arith.addf %1873, %1912 : vector<8x128xf32>
    %c146_405 = arith.constant 146 : index
    %1914 = memref.load %arg6[%c146_405] : memref<200xf32, #tpu.memory_space<smem>>
    %1915 = vector.broadcast %1914 : f32 to vector<8x128xf32>
    %1916 = arith.mulf %1279, %1915 : vector<8x128xf32>
    %1917 = arith.addf %1877, %1916 : vector<8x128xf32>
    %c147_406 = arith.constant 147 : index
    %1918 = memref.load %arg6[%c147_406] : memref<200xf32, #tpu.memory_space<smem>>
    %1919 = vector.broadcast %1918 : f32 to vector<8x128xf32>
    %1920 = arith.mulf %1279, %1919 : vector<8x128xf32>
    %1921 = arith.addf %1881, %1920 : vector<8x128xf32>
    %c148_407 = arith.constant 148 : index
    %1922 = memref.load %arg6[%c148_407] : memref<200xf32, #tpu.memory_space<smem>>
    %1923 = vector.broadcast %1922 : f32 to vector<8x128xf32>
    %1924 = arith.mulf %1279, %1923 : vector<8x128xf32>
    %1925 = arith.addf %1885, %1924 : vector<8x128xf32>
    %c149_408 = arith.constant 149 : index
    %1926 = memref.load %arg6[%c149_408] : memref<200xf32, #tpu.memory_space<smem>>
    %1927 = vector.broadcast %1926 : f32 to vector<8x128xf32>
    %1928 = arith.mulf %1279, %1927 : vector<8x128xf32>
    %1929 = arith.addf %1889, %1928 : vector<8x128xf32>
    %c150_409 = arith.constant 150 : index
    %1930 = memref.load %arg6[%c150_409] : memref<200xf32, #tpu.memory_space<smem>>
    %1931 = vector.broadcast %1930 : f32 to vector<8x128xf32>
    %1932 = arith.mulf %1281, %1931 : vector<8x128xf32>
    %1933 = arith.addf %1893, %1932 : vector<8x128xf32>
    %c151_410 = arith.constant 151 : index
    %1934 = memref.load %arg6[%c151_410] : memref<200xf32, #tpu.memory_space<smem>>
    %1935 = vector.broadcast %1934 : f32 to vector<8x128xf32>
    %1936 = arith.mulf %1281, %1935 : vector<8x128xf32>
    %1937 = arith.addf %1897, %1936 : vector<8x128xf32>
    %c152_411 = arith.constant 152 : index
    %1938 = memref.load %arg6[%c152_411] : memref<200xf32, #tpu.memory_space<smem>>
    %1939 = vector.broadcast %1938 : f32 to vector<8x128xf32>
    %1940 = arith.mulf %1281, %1939 : vector<8x128xf32>
    %1941 = arith.addf %1901, %1940 : vector<8x128xf32>
    %c153_412 = arith.constant 153 : index
    %1942 = memref.load %arg6[%c153_412] : memref<200xf32, #tpu.memory_space<smem>>
    %1943 = vector.broadcast %1942 : f32 to vector<8x128xf32>
    %1944 = arith.mulf %1281, %1943 : vector<8x128xf32>
    %1945 = arith.addf %1905, %1944 : vector<8x128xf32>
    %c154_413 = arith.constant 154 : index
    %1946 = memref.load %arg6[%c154_413] : memref<200xf32, #tpu.memory_space<smem>>
    %1947 = vector.broadcast %1946 : f32 to vector<8x128xf32>
    %1948 = arith.mulf %1281, %1947 : vector<8x128xf32>
    %1949 = arith.addf %1909, %1948 : vector<8x128xf32>
    %c155_414 = arith.constant 155 : index
    %1950 = memref.load %arg6[%c155_414] : memref<200xf32, #tpu.memory_space<smem>>
    %1951 = vector.broadcast %1950 : f32 to vector<8x128xf32>
    %1952 = arith.mulf %1281, %1951 : vector<8x128xf32>
    %1953 = arith.addf %1913, %1952 : vector<8x128xf32>
    %c156_415 = arith.constant 156 : index
    %1954 = memref.load %arg6[%c156_415] : memref<200xf32, #tpu.memory_space<smem>>
    %1955 = vector.broadcast %1954 : f32 to vector<8x128xf32>
    %1956 = arith.mulf %1281, %1955 : vector<8x128xf32>
    %1957 = arith.addf %1917, %1956 : vector<8x128xf32>
    %c157_416 = arith.constant 157 : index
    %1958 = memref.load %arg6[%c157_416] : memref<200xf32, #tpu.memory_space<smem>>
    %1959 = vector.broadcast %1958 : f32 to vector<8x128xf32>
    %1960 = arith.mulf %1281, %1959 : vector<8x128xf32>
    %1961 = arith.addf %1921, %1960 : vector<8x128xf32>
    %c158_417 = arith.constant 158 : index
    %1962 = memref.load %arg6[%c158_417] : memref<200xf32, #tpu.memory_space<smem>>
    %1963 = vector.broadcast %1962 : f32 to vector<8x128xf32>
    %1964 = arith.mulf %1281, %1963 : vector<8x128xf32>
    %1965 = arith.addf %1925, %1964 : vector<8x128xf32>
    %c159_418 = arith.constant 159 : index
    %1966 = memref.load %arg6[%c159_418] : memref<200xf32, #tpu.memory_space<smem>>
    %1967 = vector.broadcast %1966 : f32 to vector<8x128xf32>
    %1968 = arith.mulf %1281, %1967 : vector<8x128xf32>
    %1969 = arith.addf %1929, %1968 : vector<8x128xf32>
    %c160 = arith.constant 160 : index
    %1970 = memref.load %arg6[%c160] : memref<200xf32, #tpu.memory_space<smem>>
    %1971 = vector.broadcast %1970 : f32 to vector<8x128xf32>
    %1972 = arith.mulf %1283, %1971 : vector<8x128xf32>
    %1973 = arith.addf %1933, %1972 : vector<8x128xf32>
    %c161 = arith.constant 161 : index
    %1974 = memref.load %arg6[%c161] : memref<200xf32, #tpu.memory_space<smem>>
    %1975 = vector.broadcast %1974 : f32 to vector<8x128xf32>
    %1976 = arith.mulf %1283, %1975 : vector<8x128xf32>
    %1977 = arith.addf %1937, %1976 : vector<8x128xf32>
    %c162 = arith.constant 162 : index
    %1978 = memref.load %arg6[%c162] : memref<200xf32, #tpu.memory_space<smem>>
    %1979 = vector.broadcast %1978 : f32 to vector<8x128xf32>
    %1980 = arith.mulf %1283, %1979 : vector<8x128xf32>
    %1981 = arith.addf %1941, %1980 : vector<8x128xf32>
    %c163 = arith.constant 163 : index
    %1982 = memref.load %arg6[%c163] : memref<200xf32, #tpu.memory_space<smem>>
    %1983 = vector.broadcast %1982 : f32 to vector<8x128xf32>
    %1984 = arith.mulf %1283, %1983 : vector<8x128xf32>
    %1985 = arith.addf %1945, %1984 : vector<8x128xf32>
    %c164 = arith.constant 164 : index
    %1986 = memref.load %arg6[%c164] : memref<200xf32, #tpu.memory_space<smem>>
    %1987 = vector.broadcast %1986 : f32 to vector<8x128xf32>
    %1988 = arith.mulf %1283, %1987 : vector<8x128xf32>
    %1989 = arith.addf %1949, %1988 : vector<8x128xf32>
    %c165 = arith.constant 165 : index
    %1990 = memref.load %arg6[%c165] : memref<200xf32, #tpu.memory_space<smem>>
    %1991 = vector.broadcast %1990 : f32 to vector<8x128xf32>
    %1992 = arith.mulf %1283, %1991 : vector<8x128xf32>
    %1993 = arith.addf %1953, %1992 : vector<8x128xf32>
    %c166 = arith.constant 166 : index
    %1994 = memref.load %arg6[%c166] : memref<200xf32, #tpu.memory_space<smem>>
    %1995 = vector.broadcast %1994 : f32 to vector<8x128xf32>
    %1996 = arith.mulf %1283, %1995 : vector<8x128xf32>
    %1997 = arith.addf %1957, %1996 : vector<8x128xf32>
    %c167 = arith.constant 167 : index
    %1998 = memref.load %arg6[%c167] : memref<200xf32, #tpu.memory_space<smem>>
    %1999 = vector.broadcast %1998 : f32 to vector<8x128xf32>
    %2000 = arith.mulf %1283, %1999 : vector<8x128xf32>
    %2001 = arith.addf %1961, %2000 : vector<8x128xf32>
    %c168 = arith.constant 168 : index
    %2002 = memref.load %arg6[%c168] : memref<200xf32, #tpu.memory_space<smem>>
    %2003 = vector.broadcast %2002 : f32 to vector<8x128xf32>
    %2004 = arith.mulf %1283, %2003 : vector<8x128xf32>
    %2005 = arith.addf %1965, %2004 : vector<8x128xf32>
    %c169 = arith.constant 169 : index
    %2006 = memref.load %arg6[%c169] : memref<200xf32, #tpu.memory_space<smem>>
    %2007 = vector.broadcast %2006 : f32 to vector<8x128xf32>
    %2008 = arith.mulf %1283, %2007 : vector<8x128xf32>
    %2009 = arith.addf %1969, %2008 : vector<8x128xf32>
    %c170 = arith.constant 170 : index
    %2010 = memref.load %arg6[%c170] : memref<200xf32, #tpu.memory_space<smem>>
    %2011 = vector.broadcast %2010 : f32 to vector<8x128xf32>
    %2012 = arith.mulf %1285, %2011 : vector<8x128xf32>
    %2013 = arith.addf %1973, %2012 : vector<8x128xf32>
    %c171 = arith.constant 171 : index
    %2014 = memref.load %arg6[%c171] : memref<200xf32, #tpu.memory_space<smem>>
    %2015 = vector.broadcast %2014 : f32 to vector<8x128xf32>
    %2016 = arith.mulf %1285, %2015 : vector<8x128xf32>
    %2017 = arith.addf %1977, %2016 : vector<8x128xf32>
    %c172 = arith.constant 172 : index
    %2018 = memref.load %arg6[%c172] : memref<200xf32, #tpu.memory_space<smem>>
    %2019 = vector.broadcast %2018 : f32 to vector<8x128xf32>
    %2020 = arith.mulf %1285, %2019 : vector<8x128xf32>
    %2021 = arith.addf %1981, %2020 : vector<8x128xf32>
    %c173 = arith.constant 173 : index
    %2022 = memref.load %arg6[%c173] : memref<200xf32, #tpu.memory_space<smem>>
    %2023 = vector.broadcast %2022 : f32 to vector<8x128xf32>
    %2024 = arith.mulf %1285, %2023 : vector<8x128xf32>
    %2025 = arith.addf %1985, %2024 : vector<8x128xf32>
    %c174 = arith.constant 174 : index
    %2026 = memref.load %arg6[%c174] : memref<200xf32, #tpu.memory_space<smem>>
    %2027 = vector.broadcast %2026 : f32 to vector<8x128xf32>
    %2028 = arith.mulf %1285, %2027 : vector<8x128xf32>
    %2029 = arith.addf %1989, %2028 : vector<8x128xf32>
    %c175 = arith.constant 175 : index
    %2030 = memref.load %arg6[%c175] : memref<200xf32, #tpu.memory_space<smem>>
    %2031 = vector.broadcast %2030 : f32 to vector<8x128xf32>
    %2032 = arith.mulf %1285, %2031 : vector<8x128xf32>
    %2033 = arith.addf %1993, %2032 : vector<8x128xf32>
    %c176 = arith.constant 176 : index
    %2034 = memref.load %arg6[%c176] : memref<200xf32, #tpu.memory_space<smem>>
    %2035 = vector.broadcast %2034 : f32 to vector<8x128xf32>
    %2036 = arith.mulf %1285, %2035 : vector<8x128xf32>
    %2037 = arith.addf %1997, %2036 : vector<8x128xf32>
    %c177 = arith.constant 177 : index
    %2038 = memref.load %arg6[%c177] : memref<200xf32, #tpu.memory_space<smem>>
    %2039 = vector.broadcast %2038 : f32 to vector<8x128xf32>
    %2040 = arith.mulf %1285, %2039 : vector<8x128xf32>
    %2041 = arith.addf %2001, %2040 : vector<8x128xf32>
    %c178 = arith.constant 178 : index
    %2042 = memref.load %arg6[%c178] : memref<200xf32, #tpu.memory_space<smem>>
    %2043 = vector.broadcast %2042 : f32 to vector<8x128xf32>
    %2044 = arith.mulf %1285, %2043 : vector<8x128xf32>
    %2045 = arith.addf %2005, %2044 : vector<8x128xf32>
    %c179 = arith.constant 179 : index
    %2046 = memref.load %arg6[%c179] : memref<200xf32, #tpu.memory_space<smem>>
    %2047 = vector.broadcast %2046 : f32 to vector<8x128xf32>
    %2048 = arith.mulf %1285, %2047 : vector<8x128xf32>
    %2049 = arith.addf %2009, %2048 : vector<8x128xf32>
    %c180 = arith.constant 180 : index
    %2050 = memref.load %arg6[%c180] : memref<200xf32, #tpu.memory_space<smem>>
    %2051 = vector.broadcast %2050 : f32 to vector<8x128xf32>
    %2052 = arith.mulf %1287, %2051 : vector<8x128xf32>
    %2053 = arith.addf %2013, %2052 : vector<8x128xf32>
    %c181 = arith.constant 181 : index
    %2054 = memref.load %arg6[%c181] : memref<200xf32, #tpu.memory_space<smem>>
    %2055 = vector.broadcast %2054 : f32 to vector<8x128xf32>
    %2056 = arith.mulf %1287, %2055 : vector<8x128xf32>
    %2057 = arith.addf %2017, %2056 : vector<8x128xf32>
    %c182 = arith.constant 182 : index
    %2058 = memref.load %arg6[%c182] : memref<200xf32, #tpu.memory_space<smem>>
    %2059 = vector.broadcast %2058 : f32 to vector<8x128xf32>
    %2060 = arith.mulf %1287, %2059 : vector<8x128xf32>
    %2061 = arith.addf %2021, %2060 : vector<8x128xf32>
    %c183 = arith.constant 183 : index
    %2062 = memref.load %arg6[%c183] : memref<200xf32, #tpu.memory_space<smem>>
    %2063 = vector.broadcast %2062 : f32 to vector<8x128xf32>
    %2064 = arith.mulf %1287, %2063 : vector<8x128xf32>
    %2065 = arith.addf %2025, %2064 : vector<8x128xf32>
    %c184 = arith.constant 184 : index
    %2066 = memref.load %arg6[%c184] : memref<200xf32, #tpu.memory_space<smem>>
    %2067 = vector.broadcast %2066 : f32 to vector<8x128xf32>
    %2068 = arith.mulf %1287, %2067 : vector<8x128xf32>
    %2069 = arith.addf %2029, %2068 : vector<8x128xf32>
    %c185 = arith.constant 185 : index
    %2070 = memref.load %arg6[%c185] : memref<200xf32, #tpu.memory_space<smem>>
    %2071 = vector.broadcast %2070 : f32 to vector<8x128xf32>
    %2072 = arith.mulf %1287, %2071 : vector<8x128xf32>
    %2073 = arith.addf %2033, %2072 : vector<8x128xf32>
    %c186 = arith.constant 186 : index
    %2074 = memref.load %arg6[%c186] : memref<200xf32, #tpu.memory_space<smem>>
    %2075 = vector.broadcast %2074 : f32 to vector<8x128xf32>
    %2076 = arith.mulf %1287, %2075 : vector<8x128xf32>
    %2077 = arith.addf %2037, %2076 : vector<8x128xf32>
    %c187 = arith.constant 187 : index
    %2078 = memref.load %arg6[%c187] : memref<200xf32, #tpu.memory_space<smem>>
    %2079 = vector.broadcast %2078 : f32 to vector<8x128xf32>
    %2080 = arith.mulf %1287, %2079 : vector<8x128xf32>
    %2081 = arith.addf %2041, %2080 : vector<8x128xf32>
    %c188 = arith.constant 188 : index
    %2082 = memref.load %arg6[%c188] : memref<200xf32, #tpu.memory_space<smem>>
    %2083 = vector.broadcast %2082 : f32 to vector<8x128xf32>
    %2084 = arith.mulf %1287, %2083 : vector<8x128xf32>
    %2085 = arith.addf %2045, %2084 : vector<8x128xf32>
    %c189 = arith.constant 189 : index
    %2086 = memref.load %arg6[%c189] : memref<200xf32, #tpu.memory_space<smem>>
    %2087 = vector.broadcast %2086 : f32 to vector<8x128xf32>
    %2088 = arith.mulf %1287, %2087 : vector<8x128xf32>
    %2089 = arith.addf %2049, %2088 : vector<8x128xf32>
    %c190 = arith.constant 190 : index
    %2090 = memref.load %arg6[%c190] : memref<200xf32, #tpu.memory_space<smem>>
    %2091 = vector.broadcast %2090 : f32 to vector<8x128xf32>
    %2092 = arith.mulf %1289, %2091 : vector<8x128xf32>
    %2093 = arith.addf %2053, %2092 : vector<8x128xf32>
    %c191 = arith.constant 191 : index
    %2094 = memref.load %arg6[%c191] : memref<200xf32, #tpu.memory_space<smem>>
    %2095 = vector.broadcast %2094 : f32 to vector<8x128xf32>
    %2096 = arith.mulf %1289, %2095 : vector<8x128xf32>
    %2097 = arith.addf %2057, %2096 : vector<8x128xf32>
    %c192 = arith.constant 192 : index
    %2098 = memref.load %arg6[%c192] : memref<200xf32, #tpu.memory_space<smem>>
    %2099 = vector.broadcast %2098 : f32 to vector<8x128xf32>
    %2100 = arith.mulf %1289, %2099 : vector<8x128xf32>
    %2101 = arith.addf %2061, %2100 : vector<8x128xf32>
    %c193 = arith.constant 193 : index
    %2102 = memref.load %arg6[%c193] : memref<200xf32, #tpu.memory_space<smem>>
    %2103 = vector.broadcast %2102 : f32 to vector<8x128xf32>
    %2104 = arith.mulf %1289, %2103 : vector<8x128xf32>
    %2105 = arith.addf %2065, %2104 : vector<8x128xf32>
    %c194 = arith.constant 194 : index
    %2106 = memref.load %arg6[%c194] : memref<200xf32, #tpu.memory_space<smem>>
    %2107 = vector.broadcast %2106 : f32 to vector<8x128xf32>
    %2108 = arith.mulf %1289, %2107 : vector<8x128xf32>
    %2109 = arith.addf %2069, %2108 : vector<8x128xf32>
    %c195 = arith.constant 195 : index
    %2110 = memref.load %arg6[%c195] : memref<200xf32, #tpu.memory_space<smem>>
    %2111 = vector.broadcast %2110 : f32 to vector<8x128xf32>
    %2112 = arith.mulf %1289, %2111 : vector<8x128xf32>
    %2113 = arith.addf %2073, %2112 : vector<8x128xf32>
    %c196 = arith.constant 196 : index
    %2114 = memref.load %arg6[%c196] : memref<200xf32, #tpu.memory_space<smem>>
    %2115 = vector.broadcast %2114 : f32 to vector<8x128xf32>
    %2116 = arith.mulf %1289, %2115 : vector<8x128xf32>
    %2117 = arith.addf %2077, %2116 : vector<8x128xf32>
    %c197 = arith.constant 197 : index
    %2118 = memref.load %arg6[%c197] : memref<200xf32, #tpu.memory_space<smem>>
    %2119 = vector.broadcast %2118 : f32 to vector<8x128xf32>
    %2120 = arith.mulf %1289, %2119 : vector<8x128xf32>
    %2121 = arith.addf %2081, %2120 : vector<8x128xf32>
    %c198 = arith.constant 198 : index
    %2122 = memref.load %arg6[%c198] : memref<200xf32, #tpu.memory_space<smem>>
    %2123 = vector.broadcast %2122 : f32 to vector<8x128xf32>
    %2124 = arith.mulf %1289, %2123 : vector<8x128xf32>
    %2125 = arith.addf %2085, %2124 : vector<8x128xf32>
    %c199 = arith.constant 199 : index
    %2126 = memref.load %arg6[%c199] : memref<200xf32, #tpu.memory_space<smem>>
    %2127 = vector.broadcast %2126 : f32 to vector<8x128xf32>
    %2128 = arith.mulf %1289, %2127 : vector<8x128xf32>
    %2129 = arith.addf %2089, %2128 : vector<8x128xf32>
    %2130 = arith.maximumf %2093, %2097 : vector<8x128xf32>
    %2131 = arith.maximumf %2130, %2101 : vector<8x128xf32>
    %2132 = arith.maximumf %2131, %2105 : vector<8x128xf32>
    %2133 = arith.maximumf %2132, %2109 : vector<8x128xf32>
    %2134 = arith.maximumf %2133, %2113 : vector<8x128xf32>
    %2135 = arith.maximumf %2134, %2117 : vector<8x128xf32>
    %2136 = arith.maximumf %2135, %2121 : vector<8x128xf32>
    %2137 = arith.maximumf %2136, %2125 : vector<8x128xf32>
    %2138 = arith.maximumf %2137, %2129 : vector<8x128xf32>
    %2139 = arith.subf %2093, %2138 : vector<8x128xf32>
    %2140 = math.exp %2139 : vector<8x128xf32>
    %2141 = arith.subf %2097, %2138 : vector<8x128xf32>
    %2142 = math.exp %2141 : vector<8x128xf32>
    %2143 = arith.subf %2101, %2138 : vector<8x128xf32>
    %2144 = math.exp %2143 : vector<8x128xf32>
    %2145 = arith.subf %2105, %2138 : vector<8x128xf32>
    %2146 = math.exp %2145 : vector<8x128xf32>
    %2147 = arith.subf %2109, %2138 : vector<8x128xf32>
    %2148 = math.exp %2147 : vector<8x128xf32>
    %2149 = arith.subf %2113, %2138 : vector<8x128xf32>
    %2150 = math.exp %2149 : vector<8x128xf32>
    %2151 = arith.subf %2117, %2138 : vector<8x128xf32>
    %2152 = math.exp %2151 : vector<8x128xf32>
    %2153 = arith.subf %2121, %2138 : vector<8x128xf32>
    %2154 = math.exp %2153 : vector<8x128xf32>
    %2155 = arith.subf %2125, %2138 : vector<8x128xf32>
    %2156 = math.exp %2155 : vector<8x128xf32>
    %2157 = arith.subf %2129, %2138 : vector<8x128xf32>
    %2158 = math.exp %2157 : vector<8x128xf32>
    %2159 = arith.addf %2140, %2142 : vector<8x128xf32>
    %2160 = arith.addf %2159, %2144 : vector<8x128xf32>
    %2161 = arith.addf %2160, %2146 : vector<8x128xf32>
    %2162 = arith.addf %2161, %2148 : vector<8x128xf32>
    %2163 = arith.addf %2162, %2150 : vector<8x128xf32>
    %2164 = arith.addf %2163, %2152 : vector<8x128xf32>
    %2165 = arith.addf %2164, %2154 : vector<8x128xf32>
    %2166 = arith.addf %2165, %2156 : vector<8x128xf32>
    %2167 = arith.addf %2166, %2158 : vector<8x128xf32>
    %cst_419 = arith.constant 1.000000e+00 : f32
    %2168 = vector.broadcast %cst_419 : f32 to vector<8x128xf32>
    %2169 = arith.divf %2168, %2167 : vector<8x128xf32>
    %2170 = arith.mulf %2140, %2169 : vector<8x128xf32>
    %c0_420 = arith.constant 0 : index
    %2171 = arith.index_cast %3 : i32 to index
    %c0_421 = arith.constant 0 : index
    %2172 = vector.load %arg8[%c0_420, %2171, %c0_421] : memref<10x8x128xf32, #tpu.memory_space<vmem>>, vector<1x8x128xf32>
    %2173 = vector.shape_cast %2172 : vector<1x8x128xf32> to vector<8x128xf32>
    %2174 = vector.shape_cast %2170 : vector<8x128xf32> to vector<1x8x128xf32>
    tpu.vector_store %arg8[%c0_420, %2171, %c0_421], %2174 {strides = array<i32>} : memref<10x8x128xf32, #tpu.memory_space<vmem>>, vector<1x8x128xf32>,
    %2175 = arith.mulf %2142, %2169 : vector<8x128xf32>
    %c1_422 = arith.constant 1 : index
    %2176 = arith.index_cast %3 : i32 to index
    %c0_423 = arith.constant 0 : index
    %2177 = vector.load %arg8[%c1_422, %2176, %c0_423] : memref<10x8x128xf32, #tpu.memory_space<vmem>>, vector<1x8x128xf32>
    %2178 = vector.shape_cast %2177 : vector<1x8x128xf32> to vector<8x128xf32>
    %2179 = vector.shape_cast %2175 : vector<8x128xf32> to vector<1x8x128xf32>
    tpu.vector_store %arg8[%c1_422, %2176, %c0_423], %2179 {strides = array<i32>} : memref<10x8x128xf32, #tpu.memory_space<vmem>>, vector<1x8x128xf32>,
    %2180 = arith.mulf %2144, %2169 : vector<8x128xf32>
    %c2_424 = arith.constant 2 : index
    %2181 = arith.index_cast %3 : i32 to index
    %c0_425 = arith.constant 0 : index
    %2182 = vector.load %arg8[%c2_424, %2181, %c0_425] : memref<10x8x128xf32, #tpu.memory_space<vmem>>, vector<1x8x128xf32>
    %2183 = vector.shape_cast %2182 : vector<1x8x128xf32> to vector<8x128xf32>
    %2184 = vector.shape_cast %2180 : vector<8x128xf32> to vector<1x8x128xf32>
    tpu.vector_store %arg8[%c2_424, %2181, %c0_425], %2184 {strides = array<i32>} : memref<10x8x128xf32, #tpu.memory_space<vmem>>, vector<1x8x128xf32>,
    %2185 = arith.mulf %2146, %2169 : vector<8x128xf32>
    %c3_426 = arith.constant 3 : index
    %2186 = arith.index_cast %3 : i32 to index
    %c0_427 = arith.constant 0 : index
    %2187 = vector.load %arg8[%c3_426, %2186, %c0_427] : memref<10x8x128xf32, #tpu.memory_space<vmem>>, vector<1x8x128xf32>
    %2188 = vector.shape_cast %2187 : vector<1x8x128xf32> to vector<8x128xf32>
    %2189 = vector.shape_cast %2185 : vector<8x128xf32> to vector<1x8x128xf32>
    tpu.vector_store %arg8[%c3_426, %2186, %c0_427], %2189 {strides = array<i32>} : memref<10x8x128xf32, #tpu.memory_space<vmem>>, vector<1x8x128xf32>,
    %2190 = arith.mulf %2148, %2169 : vector<8x128xf32>
    %c4_428 = arith.constant 4 : index
    %2191 = arith.index_cast %3 : i32 to index
    %c0_429 = arith.constant 0 : index
    %2192 = vector.load %arg8[%c4_428, %2191, %c0_429] : memref<10x8x128xf32, #tpu.memory_space<vmem>>, vector<1x8x128xf32>
    %2193 = vector.shape_cast %2192 : vector<1x8x128xf32> to vector<8x128xf32>
    %2194 = vector.shape_cast %2190 : vector<8x128xf32> to vector<1x8x128xf32>
    tpu.vector_store %arg8[%c4_428, %2191, %c0_429], %2194 {strides = array<i32>} : memref<10x8x128xf32, #tpu.memory_space<vmem>>, vector<1x8x128xf32>,
    %2195 = arith.mulf %2150, %2169 : vector<8x128xf32>
    %c5_430 = arith.constant 5 : index
    %2196 = arith.index_cast %3 : i32 to index
    %c0_431 = arith.constant 0 : index
    %2197 = vector.load %arg8[%c5_430, %2196, %c0_431] : memref<10x8x128xf32, #tpu.memory_space<vmem>>, vector<1x8x128xf32>
    %2198 = vector.shape_cast %2197 : vector<1x8x128xf32> to vector<8x128xf32>
    %2199 = vector.shape_cast %2195 : vector<8x128xf32> to vector<1x8x128xf32>
    tpu.vector_store %arg8[%c5_430, %2196, %c0_431], %2199 {strides = array<i32>} : memref<10x8x128xf32, #tpu.memory_space<vmem>>, vector<1x8x128xf32>,
    %2200 = arith.mulf %2152, %2169 : vector<8x128xf32>
    %c6_432 = arith.constant 6 : index
    %2201 = arith.index_cast %3 : i32 to index
    %c0_433 = arith.constant 0 : index
    %2202 = vector.load %arg8[%c6_432, %2201, %c0_433] : memref<10x8x128xf32, #tpu.memory_space<vmem>>, vector<1x8x128xf32>
    %2203 = vector.shape_cast %2202 : vector<1x8x128xf32> to vector<8x128xf32>
    %2204 = vector.shape_cast %2200 : vector<8x128xf32> to vector<1x8x128xf32>
    tpu.vector_store %arg8[%c6_432, %2201, %c0_433], %2204 {strides = array<i32>} : memref<10x8x128xf32, #tpu.memory_space<vmem>>, vector<1x8x128xf32>,
    %2205 = arith.mulf %2154, %2169 : vector<8x128xf32>
    %c7_434 = arith.constant 7 : index
    %2206 = arith.index_cast %3 : i32 to index
    %c0_435 = arith.constant 0 : index
    %2207 = vector.load %arg8[%c7_434, %2206, %c0_435] : memref<10x8x128xf32, #tpu.memory_space<vmem>>, vector<1x8x128xf32>
    %2208 = vector.shape_cast %2207 : vector<1x8x128xf32> to vector<8x128xf32>
    %2209 = vector.shape_cast %2205 : vector<8x128xf32> to vector<1x8x128xf32>
    tpu.vector_store %arg8[%c7_434, %2206, %c0_435], %2209 {strides = array<i32>} : memref<10x8x128xf32, #tpu.memory_space<vmem>>, vector<1x8x128xf32>,
    %2210 = arith.mulf %2156, %2169 : vector<8x128xf32>
    %c8_436 = arith.constant 8 : index
    %2211 = arith.index_cast %3 : i32 to index
    %c0_437 = arith.constant 0 : index
    %2212 = vector.load %arg8[%c8_436, %2211, %c0_437] : memref<10x8x128xf32, #tpu.memory_space<vmem>>, vector<1x8x128xf32>
    %2213 = vector.shape_cast %2212 : vector<1x8x128xf32> to vector<8x128xf32>
    %2214 = vector.shape_cast %2210 : vector<8x128xf32> to vector<1x8x128xf32>
    tpu.vector_store %arg8[%c8_436, %2211, %c0_437], %2214 {strides = array<i32>} : memref<10x8x128xf32, #tpu.memory_space<vmem>>, vector<1x8x128xf32>,
    %2215 = arith.mulf %2158, %2169 : vector<8x128xf32>
    %c9_438 = arith.constant 9 : index
    %2216 = arith.index_cast %3 : i32 to index
    %c0_439 = arith.constant 0 : index
    %2217 = vector.load %arg8[%c9_438, %2216, %c0_439] : memref<10x8x128xf32, #tpu.memory_space<vmem>>, vector<1x8x128xf32>
    %2218 = vector.shape_cast %2217 : vector<1x8x128xf32> to vector<8x128xf32>
    %2219 = vector.shape_cast %2215 : vector<8x128xf32> to vector<1x8x128xf32>
    tpu.vector_store %arg8[%c9_438, %2216, %c0_439], %2219 {strides = array<i32>} : memref<10x8x128xf32, #tpu.memory_space<vmem>>, vector<1x8x128xf32>,
    %c1_i32_440 = arith.constant 1 : i32
    return
  }
  func.func @transform_0(%arg0: i32) -> (i32, i32, i32) {
    %c0_i32 = arith.constant 0 : i32
    %c0_i32_0 = arith.constant 0 : i32
    %c0_i32_1 = arith.constant 0 : i32
    return %c0_i32, %arg0, %c0_i32_0 : i32, i32, i32
  }
  func.func @transform_1(%arg0: i32) -> i32 {
    %c0_i32 = arith.constant 0 : i32
    %c0_i32_0 = arith.constant 0 : i32
    return %c0_i32 : i32
  }
  func.func @transform_2(%arg0: i32) -> i32 {
    %c0_i32 = arith.constant 0 : i32
    %c0_i32_0 = arith.constant 0 : i32
    return %c0_i32 : i32
  }
  func.func @transform_3(%arg0: i32) -> i32 {
    %c0_i32 = arith.constant 0 : i32
    %c0_i32_0 = arith.constant 0 : i32
    return %c0_i32 : i32
  }
  func.func @transform_4(%arg0: i32) -> i32 {
    %c0_i32 = arith.constant 0 : i32
    %c0_i32_0 = arith.constant 0 : i32
    return %c0_i32 : i32
  }
  func.func @transform_5(%arg0: i32) -> i32 {
    %c0_i32 = arith.constant 0 : i32
    %c0_i32_0 = arith.constant 0 : i32
    return %c0_i32 : i32
  }
  func.func @transform_6(%arg0: i32) -> i32 {
    %c0_i32 = arith.constant 0 : i32
    %c0_i32_0 = arith.constant 0 : i32
    return %c0_i32 : i32
  }
  func.func @transform_7(%arg0: i32) -> (i32, i32, i32) {
    %c0_i32 = arith.constant 0 : i32
    %c0_i32_0 = arith.constant 0 : i32
    %c0_i32_1 = arith.constant 0 : i32
    return %c0_i32, %arg0, %c0_i32_0 : i32, i32, i32
  }
}

</mosaic_0001>

<llo_original>
// kernel: tpu_custom_call.1
$region0: #{tpu_custom_call.1}
  #allocation0 [shape = 'u32[]', space=smem, size = 0x4, offset = 0x4, fixed_abs, tag = 'smem constant byte address 0x4 - core index']
  #allocation1 [shape = 'u32[144,128]{1,0:T(1,128)}', space=vmem, size = 0x12000, scoped, tag = 'internal scratch']
  %s0 = inlined_call_operand.hbm [shape: f32[32,8,128], index: 0, kind: input, shape index: {}]
  %s1 = inlined_call_operand.vmem [shape: f32[160], index: 1, kind: input, shape index: {}]
  %s2 = inlined_call_operand.vmem [shape: f32[5], index: 2, kind: input, shape index: {}]
  %s3 = inlined_call_operand.vmem [shape: f32[100], index: 3, kind: input, shape index: {}]
  %s4 = inlined_call_operand.vmem [shape: f32[20], index: 4, kind: input, shape index: {}]
  %s5 = inlined_call_operand.vmem [shape: f32[200], index: 5, kind: input, shape index: {}]
  %s6 = inlined_call_operand.vmem [shape: f32[10], index: 6, kind: input, shape index: {}]
  %s7 = inlined_call_operand.hbm [shape: f32[10,8,128], index: 7, kind: output, shape index: {}]
  %s8 = sld [smem:[#allocation0]]
  $region66: #{tpu_custom_call.1} parent=0
    _
  %s10 = ssub.s32 1, %s8
  %s11 = scalar_select 0, %s10, %s8
  $region1: #{tpu_custom_call.1} parent=0
    #allocation2 [shape = 'u8[131072]{0}', space=vmem, size = 0x20000, scoped, tag = 'input window, operand 0, single buffered']
    #allocation3 [shape = 's32[1]{0}', space=sflag, size = 0x4, scoped, tag = 'scoped memory for tpu_custom_call.1']
    #allocation4 [shape = 's32[1]{0}', space=sflag, size = 0x4, scoped, tag = 'scoped memory for tpu_custom_call.1']
    #allocation5 [shape = 's32[1]{0}', space=sflag, size = 0x4, scoped, tag = 'scoped memory for tpu_custom_call.1']
    #allocation6 [shape = 'u8[1024]{0}', space=smem, size = 0x400, scoped, tag = 'input window, operand 1, single buffered']
    #allocation7 [shape = 'u8[512]{0}', space=smem, size = 0x200, scoped, tag = 'input window, operand 2, single buffered']
    #allocation8 [shape = 's32[1]{0}', space=sflag, size = 0x4, scoped, tag = 'scoped memory for tpu_custom_call.1']
    #allocation9 [shape = 'u8[512]{0}', space=smem, size = 0x200, scoped, tag = 'input window, operand 3, single buffered']
    #allocation10 [shape = 'u8[512]{0}', space=smem, size = 0x200, scoped, tag = 'input window, operand 4, single buffered']
    #allocation11 [shape = 's32[1]{0}', space=sflag, size = 0x4, scoped, tag = 'scoped memory for tpu_custom_call.1']
    #allocation12 [shape = 'u8[1024]{0}', space=smem, size = 0x400, scoped, tag = 'input window, operand 5, single buffered']
    #allocation13 [shape = 'u8[512]{0}', space=smem, size = 0x200, scoped, tag = 'input window, operand 6, single buffered']
    #allocation14 [shape = 's32[1]{0}', space=sflag, size = 0x4, scoped, tag = 'scoped memory for tpu_custom_call.1']
    #allocation15 [shape = 'u8[40960]{0}', space=vmem, size = 0xa000, scoped, tag = 'output window, operand 0, single buffered']
    %12 = vsyncpa [#allocation3], 0
    %13 = vsyncpa [#allocation5], 0
    %14 = vsyncpa [#allocation8], 0
    %15 = vsyncpa [#allocation11], 0
    %16 = vsyncpa [#allocation14], 0
    %17 = vsyncpa [#allocation4], 0
    // Predicated region
    $region2: #{tpu_custom_call.1} parent=1 // pred_check
      _
    $region3: #{tpu_custom_call.1} parent=1 // pred_check_branch
      %19 = sbr.rel (0) target = $region5
    $region4: #{tpu_custom_call.1} parent=1 // pred_region
      %s21 = ssub.s32 4096, 4096
      %22 = vsyncadd [#allocation3], %s21
      %s23 = sshll.u32 [#allocation2], 4
      %s24 = int_to_ptr.vmem [resolvable:$true] %s23
      %29 = dma.hbm_to_vmem [thread:$0]  %s0, 4096, %s24, [#allocation3], 128, 128, 8
    $region5: #{tpu_custom_call.1} parent=1 // pred_fallthru
      _
    // Predicated region
    $region6: #{tpu_custom_call.1} parent=1 // pred_check
      _
    $region7: #{tpu_custom_call.1} parent=1 // pred_check_branch
      %31 = sbr.rel (0) target = $region9
    $region8: #{tpu_custom_call.1} parent=1 // pred_region
      %s33 = ssub.s32 32, 32
      %34 = vsyncadd [#allocation5], %s33
      %s36 = sshll.u32 %s1, 4
      %s37 = int_to_ptr.vmem [resolvable:$true] %s36
      %39 = dma.vmem_to_smem %s37, 32, [#allocation6], [#allocation5]
    $region9: #{tpu_custom_call.1} parent=1 // pred_fallthru
      _
    // Predicated region
    $region10: #{tpu_custom_call.1} parent=1 // pred_check
      _
    $region11: #{tpu_custom_call.1} parent=1 // pred_check_branch
      %41 = sbr.rel (0) target = $region13
    $region12: #{tpu_custom_call.1} parent=1 // pred_region
      %s43 = ssub.s32 16, 16
      %44 = vsyncadd [#allocation8], %s43
      %s46 = sshll.u32 %s2, 4
      %s47 = int_to_ptr.vmem [resolvable:$true] %s46
      %49 = dma.vmem_to_smem %s47, 16, [#allocation7], [#allocation8]
    $region13: #{tpu_custom_call.1} parent=1 // pred_fallthru
      _
    // Predicated region
    $region14: #{tpu_custom_call.1} parent=1 // pred_check
      _
    $region15: #{tpu_custom_call.1} parent=1 // pred_check_branch
      %51 = sbr.rel (0) target = $region17
    $region16: #{tpu_custom_call.1} parent=1 // pred_region
      %s53 = ssub.s32 16, 16
      %54 = vsyncadd [#allocation8], %s53
      %s56 = sshll.u32 %s3, 4
      %s57 = int_to_ptr.vmem [resolvable:$true] %s56
      %59 = dma.vmem_to_smem %s57, 16, [#allocation9], [#allocation8]
    $region17: #{tpu_custom_call.1} parent=1 // pred_fallthru
      _
    // Predicated region
    $region18: #{tpu_custom_call.1} parent=1 // pred_check
      _
    $region19: #{tpu_custom_call.1} parent=1 // pred_check_branch
      %61 = sbr.rel (0) target = $region21
    $region20: #{tpu_custom_call.1} parent=1 // pred_region
      %s63 = ssub.s32 16, 16
      %64 = vsyncadd [#allocation11], %s63
      %s66 = sshll.u32 %s4, 4
      %s67 = int_to_ptr.vmem [resolvable:$true] %s66
      %69 = dma.vmem_to_smem %s67, 16, [#allocation10], [#allocation11]
    $region21: #{tpu_custom_call.1} parent=1 // pred_fallthru
      _
    // Predicated region
    $region22: #{tpu_custom_call.1} parent=1 // pred_check
      _
    $region23: #{tpu_custom_call.1} parent=1 // pred_check_branch
      %71 = sbr.rel (0) target = $region25
    $region24: #{tpu_custom_call.1} parent=1 // pred_region
      %s73 = ssub.s32 32, 32
      %74 = vsyncadd [#allocation11], %s73
      %s76 = sshll.u32 %s5, 4
      %s77 = int_to_ptr.vmem [resolvable:$true] %s76
      %79 = dma.vmem_to_smem %s77, 32, [#allocation12], [#allocation11]
    $region25: #{tpu_custom_call.1} parent=1 // pred_fallthru
      _
    // Predicated region
    $region26: #{tpu_custom_call.1} parent=1 // pred_check
      _
    $region27: #{tpu_custom_call.1} parent=1 // pred_check_branch
      %81 = sbr.rel (0) target = $region29
    $region28: #{tpu_custom_call.1} parent=1 // pred_region
      %s83 = ssub.s32 16, 16
      %84 = vsyncadd [#allocation14], %s83
      %s86 = sshll.u32 %s6, 4
      %s87 = int_to_ptr.vmem [resolvable:$true] %s86
      %89 = dma.vmem_to_smem %s87, 16, [#allocation13], [#allocation14]
    $region29: #{tpu_custom_call.1} parent=1 // pred_fallthru
      _
    // Predicated region
    $region30: #{tpu_custom_call.1} parent=1 // pred_check
      _
    $region31: #{tpu_custom_call.1} parent=1 // pred_check_branch
      %91 = sbr.rel (0) target = $region33
    $region32: #{tpu_custom_call.1} parent=1 // pred_region
      %92 = dma.done [#allocation3], 4096
    $region33: #{tpu_custom_call.1} parent=1 // pred_fallthru
      _
    // Predicated region
    $region34: #{tpu_custom_call.1} parent=1 // pred_check
      _
    $region35: #{tpu_custom_call.1} parent=1 // pred_check_branch
      %94 = sbr.rel (0) target = $region37
    $region36: #{tpu_custom_call.1} parent=1 // pred_region
      %95 = dma.done [#allocation5], 32
    $region37: #{tpu_custom_call.1} parent=1 // pred_fallthru
      _
    // Predicated region
    $region38: #{tpu_custom_call.1} parent=1 // pred_check
      _
    $region39: #{tpu_custom_call.1} parent=1 // pred_check_branch
      %97 = sbr.rel (0) target = $region41
    $region40: #{tpu_custom_call.1} parent=1 // pred_region
      %98 = dma.done [#allocation8], 16
    $region41: #{tpu_custom_call.1} parent=1 // pred_fallthru
      _
    // Predicated region
    $region42: #{tpu_custom_call.1} parent=1 // pred_check
      _
    $region43: #{tpu_custom_call.1} parent=1 // pred_check_branch
      %100 = sbr.rel (0) target = $region45
    $region44: #{tpu_custom_call.1} parent=1 // pred_region
      %101 = dma.done [#allocation8], 16
    $region45: #{tpu_custom_call.1} parent=1 // pred_fallthru
      _
    // Predicated region
    $region46: #{tpu_custom_call.1} parent=1 // pred_check
      _
    $region47: #{tpu_custom_call.1} parent=1 // pred_check_branch
      %103 = sbr.rel (0) target = $region49
    $region48: #{tpu_custom_call.1} parent=1 // pred_region
      %104 = dma.done [#allocation11], 16
    $region49: #{tpu_custom_call.1} parent=1 // pred_fallthru
      _
    // Predicated region
    $region50: #{tpu_custom_call.1} parent=1 // pred_check
      _
    $region51: #{tpu_custom_call.1} parent=1 // pred_check_branch
      %106 = sbr.rel (0) target = $region53
    $region52: #{tpu_custom_call.1} parent=1 // pred_region
      %107 = dma.done [#allocation11], 32
    $region53: #{tpu_custom_call.1} parent=1 // pred_fallthru
      _
    // Predicated region
    $region54: #{tpu_custom_call.1} parent=1 // pred_check
      _
    $region55: #{tpu_custom_call.1} parent=1 // pred_check_branch
      %109 = sbr.rel (0) target = $region57
    $region56: #{tpu_custom_call.1} parent=1 // pred_region
      %110 = dma.done [#allocation14], 16
    $region57: #{tpu_custom_call.1} parent=1 // pred_fallthru
      _
    %111 = sfence
    %s112 = sld [smem:[#allocation7]]
    %v113 = vstv %s112
    %v114 = vadd.f32 %v113, 0.0
    %s115 = sld [smem:[#allocation7 + $0x1]]
    %v116 = vstv %s115
    %v117 = vadd.f32 %v116, 0.0
    %s118 = sld [smem:[#allocation7 + $0x2]]
    %v119 = vstv %s118
    %v120 = vadd.f32 %v119, 0.0
    %s121 = sld [smem:[#allocation7 + $0x3]]
    %v122 = vstv %s121
    %v123 = vadd.f32 %v122, 0.0
    %s124 = sld [smem:[#allocation7 + $0x4]]
    %v125 = vstv %s124
    %v126 = vadd.f32 %v125, 0.0
    %v127 = vld [vmem:[#allocation2] sm:$0xff]
    %s128 = sld [smem:[#allocation6]]
    %v129 = vstv %s128
    %v130 = vmul.f32 %v127, %v129
    %v131 = vadd.f32 %v114, %v130
    %s132 = sld [smem:[#allocation6 + $0x1]]
    %v133 = vstv %s132
    %v134 = vmul.f32 %v127, %v133
    %v135 = vadd.f32 %v117, %v134
    %s136 = sld [smem:[#allocation6 + $0x2]]
    %v137 = vstv %s136
    %v138 = vmul.f32 %v127, %v137
    %v139 = vadd.f32 %v120, %v138
    %s140 = sld [smem:[#allocation6 + $0x3]]
    %v141 = vstv %s140
    %v142 = vmul.f32 %v127, %v141
    %v143 = vadd.f32 %v123, %v142
    %s144 = sld [smem:[#allocation6 + $0x4]]
    %v145 = vstv %s144
    %v146 = vmul.f32 %v127, %v145
    %v147 = vadd.f32 %v126, %v146
    %s148 = sadd.s32 0, 8
    %s149 = scalar_lea.vmem [#allocation2], %s148
    %v150 = vld [vmem:[%s149] sm:$0xff]
    %s151 = sld [smem:[#allocation6 + $0x5]]
    %v152 = vstv %s151
    %v153 = vmul.f32 %v150, %v152
    %v154 = vadd.f32 %v131, %v153
    %s155 = sld [smem:[#allocation6 + $0x6]]
    %v156 = vstv %s155
    %v157 = vmul.f32 %v150, %v156
    %v158 = vadd.f32 %v135, %v157
    %s159 = sld [smem:[#allocation6 + $0x7]]
    %v160 = vstv %s159
    %v161 = vmul.f32 %v150, %v160
    %v162 = vadd.f32 %v139, %v161
    %s163 = sld [smem:[#allocation6 + $0x8]]
    %v164 = vstv %s163
    %v165 = vmul.f32 %v150, %v164
    %v166 = vadd.f32 %v143, %v165
    %s167 = sld [smem:[#allocation6 + $0x9]]
    %v168 = vstv %s167
    %v169 = vmul.f32 %v150, %v168
    %v170 = vadd.f32 %v147, %v169
    %s171 = sadd.s32 0, 16
    %s172 = scalar_lea.vmem [#allocation2], %s171
    %v173 = vld [vmem:[%s172] sm:$0xff]
    %s174 = sld [smem:[#allocation6 + $0xa]]
    %v175 = vstv %s174
    %v176 = vmul.f32 %v173, %v175
    %v177 = vadd.f32 %v154, %v176
    %s178 = sld [smem:[#allocation6 + $0xb]]
    %v179 = vstv %s178
    %v180 = vmul.f32 %v173, %v179
    %v181 = vadd.f32 %v158, %v180
    %s182 = sld [smem:[#allocation6 + $0xc]]
    %v183 = vstv %s182
    %v184 = vmul.f32 %v173, %v183
    %v185 = vadd.f32 %v162, %v184
    %s186 = sld [smem:[#allocation6 + $0xd]]
    %v187 = vstv %s186
    %v188 = vmul.f32 %v173, %v187
    %v189 = vadd.f32 %v166, %v188
    %s190 = sld [smem:[#allocation6 + $0xe]]
    %v191 = vstv %s190
    %v192 = vmul.f32 %v173, %v191
    %v193 = vadd.f32 %v170, %v192
    %s194 = sadd.s32 0, 24
    %s195 = scalar_lea.vmem [#allocation2], %s194
    %v196 = vld [vmem:[%s195] sm:$0xff]
    %s197 = sld [smem:[#allocation6 + $0xf]]
    %v198 = vstv %s197
    %v199 = vmul.f32 %v196, %v198
    %v200 = vadd.f32 %v177, %v199
    %s201 = sld [smem:[#allocation6 + $0x10]]
    %v202 = vstv %s201
    %v203 = vmul.f32 %v196, %v202
    %v204 = vadd.f32 %v181, %v203
    %s205 = sld [smem:[#allocation6 + $0x11]]
    %v206 = vstv %s205
    %v207 = vmul.f32 %v196, %v206
    %v208 = vadd.f32 %v185, %v207
    %s209 = sld [smem:[#allocation6 + $0x12]]
    %v210 = vstv %s209
    %v211 = vmul.f32 %v196, %v210
    %v212 = vadd.f32 %v189, %v211
    %s213 = sld [smem:[#allocation6 + $0x13]]
    %v214 = vstv %s213
    %v215 = vmul.f32 %v196, %v214
    %v216 = vadd.f32 %v193, %v215
    %s217 = sadd.s32 0, 32
    %s218 = scalar_lea.vmem [#allocation2], %s217
    %v219 = vld [vmem:[%s218] sm:$0xff]
    %s220 = sld [smem:[#allocation6 + $0x14]]
    %v221 = vstv %s220
    %v222 = vmul.f32 %v219, %v221
    %v223 = vadd.f32 %v200, %v222
    %s224 = sld [smem:[#allocation6 + $0x15]]
    %v225 = vstv %s224
    %v226 = vmul.f32 %v219, %v225
    %v227 = vadd.f32 %v204, %v226
    %s228 = sld [smem:[#allocation6 + $0x16]]
    %v229 = vstv %s228
    %v230 = vmul.f32 %v219, %v229
    %v231 = vadd.f32 %v208, %v230
    %s232 = sld [smem:[#allocation6 + $0x17]]
    %v233 = vstv %s232
    %v234 = vmul.f32 %v219, %v233
    %v235 = vadd.f32 %v212, %v234
    %s236 = sld [smem:[#allocation6 + $0x18]]
    %v237 = vstv %s236
    %v238 = vmul.f32 %v219, %v237
    %v239 = vadd.f32 %v216, %v238
    %s240 = sadd.s32 0, 40
    %s241 = scalar_lea.vmem [#allocation2], %s240
    %v242 = vld [vmem:[%s241] sm:$0xff]
    %s243 = sld [smem:[#allocation6 + $0x19]]
    %v244 = vstv %s243
    %v245 = vmul.f32 %v242, %v244
    %v246 = vadd.f32 %v223, %v245
    %s247 = sld [smem:[#allocation6 + $0x1a]]
    %v248 = vstv %s247
    %v249 = vmul.f32 %v242, %v248
    %v250 = vadd.f32 %v227, %v249
    %s251 = sld [smem:[#allocation6 + $0x1b]]
    %v252 = vstv %s251
    %v253 = vmul.f32 %v242, %v252
    %v254 = vadd.f32 %v231, %v253
    %s255 = sld [smem:[#allocation6 + $0x1c]]
    %v256 = vstv %s255
    %v257 = vmul.f32 %v242, %v256
    %v258 = vadd.f32 %v235, %v257
    %s259 = sld [smem:[#allocation6 + $0x1d]]
    %v260 = vstv %s259
    %v261 = vmul.f32 %v242, %v260
    %v262 = vadd.f32 %v239, %v261
    %s263 = sadd.s32 0, 48
    %s264 = scalar_lea.vmem [#allocation2], %s263
    %v265 = vld [vmem:[%s264] sm:$0xff]
    %s266 = sld [smem:[#allocation6 + $0x1e]]
    %v267 = vstv %s266
    %v268 = vmul.f32 %v265, %v267
    %v269 = vadd.f32 %v246, %v268
    %s270 = sld [smem:[#allocation6 + $0x1f]]
    %v271 = vstv %s270
    %v272 = vmul.f32 %v265, %v271
    %v273 = vadd.f32 %v250, %v272
    %s274 = sld [smem:[#allocation6 + $0x20]]
    %v275 = vstv %s274
    %v276 = vmul.f32 %v265, %v275
    %v277 = vadd.f32 %v254, %v276
    %s278 = sld [smem:[#allocation6 + $0x21]]
    %v279 = vstv %s278
    %v280 = vmul.f32 %v265, %v279
    %v281 = vadd.f32 %v258, %v280
    %s282 = sld [smem:[#allocation6 + $0x22]]
    %v283 = vstv %s282
    %v284 = vmul.f32 %v265, %v283
    %v285 = vadd.f32 %v262, %v284
    %s286 = sadd.s32 0, 56
    %s287 = scalar_lea.vmem [#allocation2], %s286
    %v288 = vld [vmem:[%s287] sm:$0xff]
    %s289 = sld [smem:[#allocation6 + $0x23]]
    %v290 = vstv %s289
    %v291 = vmul.f32 %v288, %v290
    %v292 = vadd.f32 %v269, %v291
    %s293 = sld [smem:[#allocation6 + $0x24]]
    %v294 = vstv %s293
    %v295 = vmul.f32 %v288, %v294
    %v296 = vadd.f32 %v273, %v295
    %s297 = sld [smem:[#allocation6 + $0x25]]
    %v298 = vstv %s297
    %v299 = vmul.f32 %v288, %v298
    %v300 = vadd.f32 %v277, %v299
    %s301 = sld [smem:[#allocation6 + $0x26]]
    %v302 = vstv %s301
    %v303 = vmul.f32 %v288, %v302
    %v304 = vadd.f32 %v281, %v303
    %s305 = sld [smem:[#allocation6 + $0x27]]
    %v306 = vstv %s305
    %v307 = vmul.f32 %v288, %v306
    %v308 = vadd.f32 %v285, %v307
    %s309 = sadd.s32 0, 64
    %s310 = scalar_lea.vmem [#allocation2], %s309
    %v311 = vld [vmem:[%s310] sm:$0xff]
    %s312 = sld [smem:[#allocation6 + $0x28]]
    %v313 = vstv %s312
    %v314 = vmul.f32 %v311, %v313
    %v315 = vadd.f32 %v292, %v314
    %s316 = sld [smem:[#allocation6 + $0x29]]
    %v317 = vstv %s316
    %v318 = vmul.f32 %v311, %v317
    %v319 = vadd.f32 %v296, %v318
    %s320 = sld [smem:[#allocation6 + $0x2a]]
    %v321 = vstv %s320
    %v322 = vmul.f32 %v311, %v321
    %v323 = vadd.f32 %v300, %v322
    %s324 = sld [smem:[#allocation6 + $0x2b]]
    %v325 = vstv %s324
    %v326 = vmul.f32 %v311, %v325
    %v327 = vadd.f32 %v304, %v326
    %s328 = sld [smem:[#allocation6 + $0x2c]]
    %v329 = vstv %s328
    %v330 = vmul.f32 %v311, %v329
    %v331 = vadd.f32 %v308, %v330
    %s332 = sadd.s32 0, 72
    %s333 = scalar_lea.vmem [#allocation2], %s332
    %v334 = vld [vmem:[%s333] sm:$0xff]
    %s335 = sld [smem:[#allocation6 + $0x2d]]
    %v336 = vstv %s335
    %v337 = vmul.f32 %v334, %v336
    %v338 = vadd.f32 %v315, %v337
    %s339 = sld [smem:[#allocation6 + $0x2e]]
    %v340 = vstv %s339
    %v341 = vmul.f32 %v334, %v340
    %v342 = vadd.f32 %v319, %v341
    %s343 = sld [smem:[#allocation6 + $0x2f]]
    %v344 = vstv %s343
    %v345 = vmul.f32 %v334, %v344
    %v346 = vadd.f32 %v323, %v345
    %s347 = sld [smem:[#allocation6 + $0x30]]
    %v348 = vstv %s347
    %v349 = vmul.f32 %v334, %v348
    %v350 = vadd.f32 %v327, %v349
    %s351 = sld [smem:[#allocation6 + $0x31]]
    %v352 = vstv %s351
    %v353 = vmul.f32 %v334, %v352
    %v354 = vadd.f32 %v331, %v353
    %s355 = sadd.s32 0, 80
    %s356 = scalar_lea.vmem [#allocation2], %s355
    %v357 = vld [vmem:[%s356] sm:$0xff]
    %s358 = sld [smem:[#allocation6 + $0x32]]
    %v359 = vstv %s358
    %v360 = vmul.f32 %v357, %v359
    %v361 = vadd.f32 %v338, %v360
    %s362 = sld [smem:[#allocation6 + $0x33]]
    %v363 = vstv %s362
    %v364 = vmul.f32 %v357, %v363
    %v365 = vadd.f32 %v342, %v364
    %s366 = sld [smem:[#allocation6 + $0x34]]
    %v367 = vstv %s366
    %v368 = vmul.f32 %v357, %v367
    %v369 = vadd.f32 %v346, %v368
    %s370 = sld [smem:[#allocation6 + $0x35]]
    %v371 = vstv %s370
    %v372 = vmul.f32 %v357, %v371
    %v373 = vadd.f32 %v350, %v372
    %s374 = sld [smem:[#allocation6 + $0x36]]
    %v375 = vstv %s374
    %v376 = vmul.f32 %v357, %v375
    %v377 = vadd.f32 %v354, %v376
    %s378 = sadd.s32 0, 88
    %s379 = scalar_lea.vmem [#allocation2], %s378
    %v380 = vld [vmem:[%s379] sm:$0xff]
    %s381 = sld [smem:[#allocation6 + $0x37]]
    %v382 = vstv %s381
    %v383 = vmul.f32 %v380, %v382
    %v384 = vadd.f32 %v361, %v383
    %s385 = sld [smem:[#allocation6 + $0x38]]
    %v386 = vstv %s385
    %v387 = vmul.f32 %v380, %v386
    %v388 = vadd.f32 %v365, %v387
    %s389 = sld [smem:[#allocation6 + $0x39]]
    %v390 = vstv %s389
    %v391 = vmul.f32 %v380, %v390
    %v392 = vadd.f32 %v369, %v391
    %s393 = sld [smem:[#allocation6 + $0x3a]]
    %v394 = vstv %s393
    %v395 = vmul.f32 %v380, %v394
    %v396 = vadd.f32 %v373, %v395
    %s397 = sld [smem:[#allocation6 + $0x3b]]
    %v398 = vstv %s397
    %v399 = vmul.f32 %v380, %v398
    %v400 = vadd.f32 %v377, %v399
    %s401 = sadd.s32 0, 96
    %s402 = scalar_lea.vmem [#allocation2], %s401
    %v403 = vld [vmem:[%s402] sm:$0xff]
    %s404 = sld [smem:[#allocation6 + $0x3c]]
    %v405 = vstv %s404
    %v406 = vmul.f32 %v403, %v405
    %v407 = vadd.f32 %v384, %v406
    %s408 = sld [smem:[#allocation6 + $0x3d]]
    %v409 = vstv %s408
    %v410 = vmul.f32 %v403, %v409
    %v411 = vadd.f32 %v388, %v410
    %s412 = sld [smem:[#allocation6 + $0x3e]]
    %v413 = vstv %s412
    %v414 = vmul.f32 %v403, %v413
    %v415 = vadd.f32 %v392, %v414
    %s416 = sld [smem:[#allocation6 + $0x3f]]
    %v417 = vstv %s416
    %v418 = vmul.f32 %v403, %v417
    %v419 = vadd.f32 %v396, %v418
    %s420 = sld [smem:[#allocation6 + $0x40]]
    %v421 = vstv %s420
    %v422 = vmul.f32 %v403, %v421
    %v423 = vadd.f32 %v400, %v422
    %s424 = sadd.s32 0, 104
    %s425 = scalar_lea.vmem [#allocation2], %s424
    %v426 = vld [vmem:[%s425] sm:$0xff]
    %s427 = sld [smem:[#allocation6 + $0x41]]
    %v428 = vstv %s427
    %v429 = vmul.f32 %v426, %v428
    %v430 = vadd.f32 %v407, %v429
    %s431 = sld [smem:[#allocation6 + $0x42]]
    %v432 = vstv %s431
    %v433 = vmul.f32 %v426, %v432
    %v434 = vadd.f32 %v411, %v433
    %s435 = sld [smem:[#allocation6 + $0x43]]
    %v436 = vstv %s435
    %v437 = vmul.f32 %v426, %v436
    %v438 = vadd.f32 %v415, %v437
    %s439 = sld [smem:[#allocation6 + $0x44]]
    %v440 = vstv %s439
    %v441 = vmul.f32 %v426, %v440
    %v442 = vadd.f32 %v419, %v441
    %s443 = sld [smem:[#allocation6 + $0x45]]
    %v444 = vstv %s443
    %v445 = vmul.f32 %v426, %v444
    %v446 = vadd.f32 %v423, %v445
    %s447 = sadd.s32 0, 112
    %s448 = scalar_lea.vmem [#allocation2], %s447
    %v449 = vld [vmem:[%s448] sm:$0xff]
    %s450 = sld [smem:[#allocation6 + $0x46]]
    %v451 = vstv %s450
    %v452 = vmul.f32 %v449, %v451
    %v453 = vadd.f32 %v430, %v452
    %s454 = sld [smem:[#allocation6 + $0x47]]
    %v455 = vstv %s454
    %v456 = vmul.f32 %v449, %v455
    %v457 = vadd.f32 %v434, %v456
    %s458 = sld [smem:[#allocation6 + $0x48]]
    %v459 = vstv %s458
    %v460 = vmul.f32 %v449, %v459
    %v461 = vadd.f32 %v438, %v460
    %s462 = sld [smem:[#allocation6 + $0x49]]
    %v463 = vstv %s462
    %v464 = vmul.f32 %v449, %v463
    %v465 = vadd.f32 %v442, %v464
    %s466 = sld [smem:[#allocation6 + $0x4a]]
    %v467 = vstv %s466
    %v468 = vmul.f32 %v449, %v467
    %v469 = vadd.f32 %v446, %v468
    %s470 = sadd.s32 0, 120
    %s471 = scalar_lea.vmem [#allocation2], %s470
    %v472 = vld [vmem:[%s471] sm:$0xff]
    %s473 = sld [smem:[#allocation6 + $0x4b]]
    %v474 = vstv %s473
    %v475 = vmul.f32 %v472, %v474
    %v476 = vadd.f32 %v453, %v475
    %s477 = sld [smem:[#allocation6 + $0x4c]]
    %v478 = vstv %s477
    %v479 = vmul.f32 %v472, %v478
    %v480 = vadd.f32 %v457, %v479
    %s481 = sld [smem:[#allocation6 + $0x4d]]
    %v482 = vstv %s481
    %v483 = vmul.f32 %v472, %v482
    %v484 = vadd.f32 %v461, %v483
    %s485 = sld [smem:[#allocation6 + $0x4e]]
    %v486 = vstv %s485
    %v487 = vmul.f32 %v472, %v486
    %v488 = vadd.f32 %v465, %v487
    %s489 = sld [smem:[#allocation6 + $0x4f]]
    %v490 = vstv %s489
    %v491 = vmul.f32 %v472, %v490
    %v492 = vadd.f32 %v469, %v491
    %s493 = sadd.s32 0, 128
    %s494 = scalar_lea.vmem [#allocation2], %s493
    %v495 = vld [vmem:[%s494] sm:$0xff]
    %s496 = sld [smem:[#allocation6 + $0x50]]
    %v497 = vstv %s496
    %v498 = vmul.f32 %v495, %v497
    %v499 = vadd.f32 %v476, %v498
    %s500 = sld [smem:[#allocation6 + $0x51]]
    %v501 = vstv %s500
    %v502 = vmul.f32 %v495, %v501
    %v503 = vadd.f32 %v480, %v502
    %s504 = sld [smem:[#allocation6 + $0x52]]
    %v505 = vstv %s504
    %v506 = vmul.f32 %v495, %v505
    %v507 = vadd.f32 %v484, %v506
    %s508 = sld [smem:[#allocation6 + $0x53]]
    %v509 = vstv %s508
    %v510 = vmul.f32 %v495, %v509
    %v511 = vadd.f32 %v488, %v510
    %s512 = sld [smem:[#allocation6 + $0x54]]
    %v513 = vstv %s512
    %v514 = vmul.f32 %v495, %v513
    %v515 = vadd.f32 %v492, %v514
    %s516 = sadd.s32 0, 136
    %s517 = scalar_lea.vmem [#allocation2], %s516
    %v518 = vld [vmem:[%s517] sm:$0xff]
    %s519 = sld [smem:[#allocation6 + $0x55]]
    %v520 = vstv %s519
    %v521 = vmul.f32 %v518, %v520
    %v522 = vadd.f32 %v499, %v521
    %s523 = sld [smem:[#allocation6 + $0x56]]
    %v524 = vstv %s523
    %v525 = vmul.f32 %v518, %v524
    %v526 = vadd.f32 %v503, %v525
    %s527 = sld [smem:[#allocation6 + $0x57]]
    %v528 = vstv %s527
    %v529 = vmul.f32 %v518, %v528
    %v530 = vadd.f32 %v507, %v529
    %s531 = sld [smem:[#allocation6 + $0x58]]
    %v532 = vstv %s531
    %v533 = vmul.f32 %v518, %v532
    %v534 = vadd.f32 %v511, %v533
    %s535 = sld [smem:[#allocation6 + $0x59]]
    %v536 = vstv %s535
    %v537 = vmul.f32 %v518, %v536
    %v538 = vadd.f32 %v515, %v537
    %s539 = sadd.s32 0, 144
    %s540 = scalar_lea.vmem [#allocation2], %s539
    %v541 = vld [vmem:[%s540] sm:$0xff]
    %s542 = sld [smem:[#allocation6 + $0x5a]]
    %v543 = vstv %s542
    %v544 = vmul.f32 %v541, %v543
    %v545 = vadd.f32 %v522, %v544
    %s546 = sld [smem:[#allocation6 + $0x5b]]
    %v547 = vstv %s546
    %v548 = vmul.f32 %v541, %v547
    %v549 = vadd.f32 %v526, %v548
    %s550 = sld [smem:[#allocation6 + $0x5c]]
    %v551 = vstv %s550
    %v552 = vmul.f32 %v541, %v551
    %v553 = vadd.f32 %v530, %v552
    %s554 = sld [smem:[#allocation6 + $0x5d]]
    %v555 = vstv %s554
    %v556 = vmul.f32 %v541, %v555
    %v557 = vadd.f32 %v534, %v556
    %s558 = sld [smem:[#allocation6 + $0x5e]]
    %v559 = vstv %s558
    %v560 = vmul.f32 %v541, %v559
    %v561 = vadd.f32 %v538, %v560
    %s562 = sadd.s32 0, 152
    %s563 = scalar_lea.vmem [#allocation2], %s562
    %v564 = vld [vmem:[%s563] sm:$0xff]
    %s565 = sld [smem:[#allocation6 + $0x5f]]
    %v566 = vstv %s565
    %v567 = vmul.f32 %v564, %v566
    %v568 = vadd.f32 %v545, %v567
    %s569 = sld [smem:[#allocation6 + $0x60]]
    %v570 = vstv %s569
    %v571 = vmul.f32 %v564, %v570
    %v572 = vadd.f32 %v549, %v571
    %s573 = sld [smem:[#allocation6 + $0x61]]
    %v574 = vstv %s573
    %v575 = vmul.f32 %v564, %v574
    %v576 = vadd.f32 %v553, %v575
    %s577 = sld [smem:[#allocation6 + $0x62]]
    %v578 = vstv %s577
    %v579 = vmul.f32 %v564, %v578
    %v580 = vadd.f32 %v557, %v579
    %s581 = sld [smem:[#allocation6 + $0x63]]
    %v582 = vstv %s581
    %v583 = vmul.f32 %v564, %v582
    %v584 = vadd.f32 %v561, %v583
    %s585 = sadd.s32 0, 160
    %s586 = scalar_lea.vmem [#allocation2], %s585
    %v587 = vld [vmem:[%s586] sm:$0xff]
    %s588 = sld [smem:[#allocation6 + $0x64]]
    %v589 = vstv %s588
    %v590 = vmul.f32 %v587, %v589
    %v591 = vadd.f32 %v568, %v590
    %s592 = sld [smem:[#allocation6 + $0x65]]
    %v593 = vstv %s592
    %v594 = vmul.f32 %v587, %v593
    %v595 = vadd.f32 %v572, %v594
    %s596 = sld [smem:[#allocation6 + $0x66]]
    %v597 = vstv %s596
    %v598 = vmul.f32 %v587, %v597
    %v599 = vadd.f32 %v576, %v598
    %s600 = sld [smem:[#allocation6 + $0x67]]
    %v601 = vstv %s600
    %v602 = vmul.f32 %v587, %v601
    %v603 = vadd.f32 %v580, %v602
    %s604 = sld [smem:[#allocation6 + $0x68]]
    %v605 = vstv %s604
    %v606 = vmul.f32 %v587, %v605
    %v607 = vadd.f32 %v584, %v606
    %s608 = sadd.s32 0, 168
    %s609 = scalar_lea.vmem [#allocation2], %s608
    %v610 = vld [vmem:[%s609] sm:$0xff]
    %s611 = sld [smem:[#allocation6 + $0x69]]
    %v612 = vstv %s611
    %v613 = vmul.f32 %v610, %v612
    %v614 = vadd.f32 %v591, %v613
    %s615 = sld [smem:[#allocation6 + $0x6a]]
    %v616 = vstv %s615
    %v617 = vmul.f32 %v610, %v616
    %v618 = vadd.f32 %v595, %v617
    %s619 = sld [smem:[#allocation6 + $0x6b]]
    %v620 = vstv %s619
    %v621 = vmul.f32 %v610, %v620
    %v622 = vadd.f32 %v599, %v621
    %s623 = sld [smem:[#allocation6 + $0x6c]]
    %v624 = vstv %s623
    %v625 = vmul.f32 %v610, %v624
    %v626 = vadd.f32 %v603, %v625
    %s627 = sld [smem:[#allocation6 + $0x6d]]
    %v628 = vstv %s627
    %v629 = vmul.f32 %v610, %v628
    %v630 = vadd.f32 %v607, %v629
    %s631 = sadd.s32 0, 176
    %s632 = scalar_lea.vmem [#allocation2], %s631
    %v633 = vld [vmem:[%s632] sm:$0xff]
    %s634 = sld [smem:[#allocation6 + $0x6e]]
    %v635 = vstv %s634
    %v636 = vmul.f32 %v633, %v635
    %v637 = vadd.f32 %v614, %v636
    %s638 = sld [smem:[#allocation6 + $0x6f]]
    %v639 = vstv %s638
    %v640 = vmul.f32 %v633, %v639
    %v641 = vadd.f32 %v618, %v640
    %s642 = sld [smem:[#allocation6 + $0x70]]
    %v643 = vstv %s642
    %v644 = vmul.f32 %v633, %v643
    %v645 = vadd.f32 %v622, %v644
    %s646 = sld [smem:[#allocation6 + $0x71]]
    %v647 = vstv %s646
    %v648 = vmul.f32 %v633, %v647
    %v649 = vadd.f32 %v626, %v648
    %s650 = sld [smem:[#allocation6 + $0x72]]
    %v651 = vstv %s650
    %v652 = vmul.f32 %v633, %v651
    %v653 = vadd.f32 %v630, %v652
    %s654 = sadd.s32 0, 184
    %s655 = scalar_lea.vmem [#allocation2], %s654
    %v656 = vld [vmem:[%s655] sm:$0xff]
    %s657 = sld [smem:[#allocation6 + $0x73]]
    %v658 = vstv %s657
    %v659 = vmul.f32 %v656, %v658
    %v660 = vadd.f32 %v637, %v659
    %s661 = sld [smem:[#allocation6 + $0x74]]
    %v662 = vstv %s661
    %v663 = vmul.f32 %v656, %v662
    %v664 = vadd.f32 %v641, %v663
    %s665 = sld [smem:[#allocation6 + $0x75]]
    %v666 = vstv %s665
    %v667 = vmul.f32 %v656, %v666
    %v668 = vadd.f32 %v645, %v667
    %s669 = sld [smem:[#allocation6 + $0x76]]
    %v670 = vstv %s669
    %v671 = vmul.f32 %v656, %v670
    %v672 = vadd.f32 %v649, %v671
    %s673 = sld [smem:[#allocation6 + $0x77]]
    %v674 = vstv %s673
    %v675 = vmul.f32 %v656, %v674
    %v676 = vadd.f32 %v653, %v675
    %s677 = sadd.s32 0, 192
    %s678 = scalar_lea.vmem [#allocation2], %s677
    %v679 = vld [vmem:[%s678] sm:$0xff]
    %s680 = sld [smem:[#allocation6 + $0x78]]
    %v681 = vstv %s680
    %v682 = vmul.f32 %v679, %v681
    %v683 = vadd.f32 %v660, %v682
    %s684 = sld [smem:[#allocation6 + $0x79]]
    %v685 = vstv %s684
    %v686 = vmul.f32 %v679, %v685
    %v687 = vadd.f32 %v664, %v686
    %s688 = sld [smem:[#allocation6 + $0x7a]]
    %v689 = vstv %s688
    %v690 = vmul.f32 %v679, %v689
    %v691 = vadd.f32 %v668, %v690
    %s692 = sld [smem:[#allocation6 + $0x7b]]
    %v693 = vstv %s692
    %v694 = vmul.f32 %v679, %v693
    %v695 = vadd.f32 %v672, %v694
    %s696 = sld [smem:[#allocation6 + $0x7c]]
    %v697 = vstv %s696
    %v698 = vmul.f32 %v679, %v697
    %v699 = vadd.f32 %v676, %v698
    %s700 = sadd.s32 0, 200
    %s701 = scalar_lea.vmem [#allocation2], %s700
    %v702 = vld [vmem:[%s701] sm:$0xff]
    %s703 = sld [smem:[#allocation6 + $0x7d]]
    %v704 = vstv %s703
    %v705 = vmul.f32 %v702, %v704
    %v706 = vadd.f32 %v683, %v705
    %s707 = sld [smem:[#allocation6 + $0x7e]]
    %v708 = vstv %s707
    %v709 = vmul.f32 %v702, %v708
    %v710 = vadd.f32 %v687, %v709
    %s711 = sld [smem:[#allocation6 + $0x7f]]
    %v712 = vstv %s711
    %v713 = vmul.f32 %v702, %v712
    %v714 = vadd.f32 %v691, %v713
    %s715 = sld [smem:[#allocation6 + $0x80]]
    %v716 = vstv %s715
    %v717 = vmul.f32 %v702, %v716
    %v718 = vadd.f32 %v695, %v717
    %s719 = sld [smem:[#allocation6 + $0x81]]
    %v720 = vstv %s719
    %v721 = vmul.f32 %v702, %v720
    %v722 = vadd.f32 %v699, %v721
    %s723 = sadd.s32 0, 208
    %s724 = scalar_lea.vmem [#allocation2], %s723
    %v725 = vld [vmem:[%s724] sm:$0xff]
    %s726 = sld [smem:[#allocation6 + $0x82]]
    %v727 = vstv %s726
    %v728 = vmul.f32 %v725, %v727
    %v729 = vadd.f32 %v706, %v728
    %s730 = sld [smem:[#allocation6 + $0x83]]
    %v731 = vstv %s730
    %v732 = vmul.f32 %v725, %v731
    %v733 = vadd.f32 %v710, %v732
    %s734 = sld [smem:[#allocation6 + $0x84]]
    %v735 = vstv %s734
    %v736 = vmul.f32 %v725, %v735
    %v737 = vadd.f32 %v714, %v736
    %s738 = sld [smem:[#allocation6 + $0x85]]
    %v739 = vstv %s738
    %v740 = vmul.f32 %v725, %v739
    %v741 = vadd.f32 %v718, %v740
    %s742 = sld [smem:[#allocation6 + $0x86]]
    %v743 = vstv %s742
    %v744 = vmul.f32 %v725, %v743
    %v745 = vadd.f32 %v722, %v744
    %s746 = sadd.s32 0, 216
    %s747 = scalar_lea.vmem [#allocation2], %s746
    %v748 = vld [vmem:[%s747] sm:$0xff]
    %s749 = sld [smem:[#allocation6 + $0x87]]
    %v750 = vstv %s749
    %v751 = vmul.f32 %v748, %v750
    %v752 = vadd.f32 %v729, %v751
    %s753 = sld [smem:[#allocation6 + $0x88]]
    %v754 = vstv %s753
    %v755 = vmul.f32 %v748, %v754
    %v756 = vadd.f32 %v733, %v755
    %s757 = sld [smem:[#allocation6 + $0x89]]
    %v758 = vstv %s757
    %v759 = vmul.f32 %v748, %v758
    %v760 = vadd.f32 %v737, %v759
    %s761 = sld [smem:[#allocation6 + $0x8a]]
    %v762 = vstv %s761
    %v763 = vmul.f32 %v748, %v762
    %v764 = vadd.f32 %v741, %v763
    %s765 = sld [smem:[#allocation6 + $0x8b]]
    %v766 = vstv %s765
    %v767 = vmul.f32 %v748, %v766
    %v768 = vadd.f32 %v745, %v767
    %s769 = sadd.s32 0, 224
    %s770 = scalar_lea.vmem [#allocation2], %s769
    %v771 = vld [vmem:[%s770] sm:$0xff]
    %s772 = sld [smem:[#allocation6 + $0x8c]]
    %v773 = vstv %s772
    %v774 = vmul.f32 %v771, %v773
    %v775 = vadd.f32 %v752, %v774
    %s776 = sld [smem:[#allocation6 + $0x8d]]
    %v777 = vstv %s776
    %v778 = vmul.f32 %v771, %v777
    %v779 = vadd.f32 %v756, %v778
    %s780 = sld [smem:[#allocation6 + $0x8e]]
    %v781 = vstv %s780
    %v782 = vmul.f32 %v771, %v781
    %v783 = vadd.f32 %v760, %v782
    %s784 = sld [smem:[#allocation6 + $0x8f]]
    %v785 = vstv %s784
    %v786 = vmul.f32 %v771, %v785
    %v787 = vadd.f32 %v764, %v786
    %s788 = sld [smem:[#allocation6 + $0x90]]
    %v789 = vstv %s788
    %v790 = vmul.f32 %v771, %v789
    %v791 = vadd.f32 %v768, %v790
    %s792 = sadd.s32 0, 232
    %s793 = scalar_lea.vmem [#allocation2], %s792
    %v794 = vld [vmem:[%s793] sm:$0xff]
    %s795 = sld [smem:[#allocation6 + $0x91]]
    %v796 = vstv %s795
    %v797 = vmul.f32 %v794, %v796
    %v798 = vadd.f32 %v775, %v797
    %s799 = sld [smem:[#allocation6 + $0x92]]
    %v800 = vstv %s799
    %v801 = vmul.f32 %v794, %v800
    %v802 = vadd.f32 %v779, %v801
    %s803 = sld [smem:[#allocation6 + $0x93]]
    %v804 = vstv %s803
    %v805 = vmul.f32 %v794, %v804
    %v806 = vadd.f32 %v783, %v805
    %s807 = sld [smem:[#allocation6 + $0x94]]
    %v808 = vstv %s807
    %v809 = vmul.f32 %v794, %v808
    %v810 = vadd.f32 %v787, %v809
    %s811 = sld [smem:[#allocation6 + $0x95]]
    %v812 = vstv %s811
    %v813 = vmul.f32 %v794, %v812
    %v814 = vadd.f32 %v791, %v813
    %s815 = sadd.s32 0, 240
    %s816 = scalar_lea.vmem [#allocation2], %s815
    %v817 = vld [vmem:[%s816] sm:$0xff]
    %s818 = sld [smem:[#allocation6 + $0x96]]
    %v819 = vstv %s818
    %v820 = vmul.f32 %v817, %v819
    %v821 = vadd.f32 %v798, %v820
    %s822 = sld [smem:[#allocation6 + $0x97]]
    %v823 = vstv %s822
    %v824 = vmul.f32 %v817, %v823
    %v825 = vadd.f32 %v802, %v824
    %s826 = sld [smem:[#allocation6 + $0x98]]
    %v827 = vstv %s826
    %v828 = vmul.f32 %v817, %v827
    %v829 = vadd.f32 %v806, %v828
    %s830 = sld [smem:[#allocation6 + $0x99]]
    %v831 = vstv %s830
    %v832 = vmul.f32 %v817, %v831
    %v833 = vadd.f32 %v810, %v832
    %s834 = sld [smem:[#allocation6 + $0x9a]]
    %v835 = vstv %s834
    %v836 = vmul.f32 %v817, %v835
    %v837 = vadd.f32 %v814, %v836
    %s838 = sadd.s32 0, 248
    %s839 = scalar_lea.vmem [#allocation2], %s838
    %v840 = vld [vmem:[%s839] sm:$0xff]
    %s841 = sld [smem:[#allocation6 + $0x9b]]
    %v842 = vstv %s841
    %v843 = vmul.f32 %v840, %v842
    %v844 = vadd.f32 %v821, %v843
    %s845 = sld [smem:[#allocation6 + $0x9c]]
    %v846 = vstv %s845
    %v847 = vmul.f32 %v840, %v846
    %v848 = vadd.f32 %v825, %v847
    %s849 = sld [smem:[#allocation6 + $0x9d]]
    %v850 = vstv %s849
    %v851 = vmul.f32 %v840, %v850
    %v852 = vadd.f32 %v829, %v851
    %s853 = sld [smem:[#allocation6 + $0x9e]]
    %v854 = vstv %s853
    %v855 = vmul.f32 %v840, %v854
    %v856 = vadd.f32 %v833, %v855
    %s857 = sld [smem:[#allocation6 + $0x9f]]
    %v858 = vstv %s857
    %v859 = vmul.f32 %v840, %v858
    %v860 = vadd.f32 %v837, %v859
    %v861 = vmax.f32 %v844, 0.0
    %v862 = vmax.f32 %v848, 0.0
    %v863 = vmax.f32 %v852, 0.0
    %v864 = vmax.f32 %v856, 0.0
    %v865 = vmax.f32 %v860, 0.0
    %s866 = sld [smem:[#allocation10]]
    %v867 = vstv %s866
    %v868 = vadd.f32 %v867, 0.0
    %s869 = sld [smem:[#allocation10 + $0x1]]
    %v870 = vstv %s869
    %v871 = vadd.f32 %v870, 0.0
    %s872 = sld [smem:[#allocation10 + $0x2]]
    %v873 = vstv %s872
    %v874 = vadd.f32 %v873, 0.0
    %s875 = sld [smem:[#allocation10 + $0x3]]
    %v876 = vstv %s875
    %v877 = vadd.f32 %v876, 0.0
    %s878 = sld [smem:[#allocation10 + $0x4]]
    %v879 = vstv %s878
    %v880 = vadd.f32 %v879, 0.0
    %s881 = sld [smem:[#allocation10 + $0x5]]
    %v882 = vstv %s881
    %v883 = vadd.f32 %v882, 0.0
    %s884 = sld [smem:[#allocation10 + $0x6]]
    %v885 = vstv %s884
    %v886 = vadd.f32 %v885, 0.0
    %s887 = sld [smem:[#allocation10 + $0x7]]
    %v888 = vstv %s887
    %v889 = vadd.f32 %v888, 0.0
    %s890 = sld [smem:[#allocation10 + $0x8]]
    %v891 = vstv %s890
    %v892 = vadd.f32 %v891, 0.0
    %s893 = sld [smem:[#allocation10 + $0x9]]
    %v894 = vstv %s893
    %v895 = vadd.f32 %v894, 0.0
    %s896 = sld [smem:[#allocation10 + $0xa]]
    %v897 = vstv %s896
    %v898 = vadd.f32 %v897, 0.0
    %s899 = sld [smem:[#allocation10 + $0xb]]
    %v900 = vstv %s899
    %v901 = vadd.f32 %v900, 0.0
    %s902 = sld [smem:[#allocation10 + $0xc]]
    %v903 = vstv %s902
    %v904 = vadd.f32 %v903, 0.0
    %s905 = sld [smem:[#allocation10 + $0xd]]
    %v906 = vstv %s905
    %v907 = vadd.f32 %v906, 0.0
    %s908 = sld [smem:[#allocation10 + $0xe]]
    %v909 = vstv %s908
    %v910 = vadd.f32 %v909, 0.0
    %s911 = sld [smem:[#allocation10 + $0xf]]
    %v912 = vstv %s911
    %v913 = vadd.f32 %v912, 0.0
    %s914 = sld [smem:[#allocation10 + $0x10]]
    %v915 = vstv %s914
    %v916 = vadd.f32 %v915, 0.0
    %s917 = sld [smem:[#allocation10 + $0x11]]
    %v918 = vstv %s917
    %v919 = vadd.f32 %v918, 0.0
    %s920 = sld [smem:[#allocation10 + $0x12]]
    %v921 = vstv %s920
    %v922 = vadd.f32 %v921, 0.0
    %s923 = sld [smem:[#allocation10 + $0x13]]
    %v924 = vstv %s923
    %v925 = vadd.f32 %v924, 0.0
    %s926 = sld [smem:[#allocation9]]
    %v927 = vstv %s926
    %v928 = vmul.f32 %v861, %v927
    %v929 = vadd.f32 %v868, %v928
    %s930 = sld [smem:[#allocation9 + $0x1]]
    %v931 = vstv %s930
    %v932 = vmul.f32 %v861, %v931
    %v933 = vadd.f32 %v871, %v932
    %s934 = sld [smem:[#allocation9 + $0x2]]
    %v935 = vstv %s934
    %v936 = vmul.f32 %v861, %v935
    %v937 = vadd.f32 %v874, %v936
    %s938 = sld [smem:[#allocation9 + $0x3]]
    %v939 = vstv %s938
    %v940 = vmul.f32 %v861, %v939
    %v941 = vadd.f32 %v877, %v940
    %s942 = sld [smem:[#allocation9 + $0x4]]
    %v943 = vstv %s942
    %v944 = vmul.f32 %v861, %v943
    %v945 = vadd.f32 %v880, %v944
    %s946 = sld [smem:[#allocation9 + $0x5]]
    %v947 = vstv %s946
    %v948 = vmul.f32 %v861, %v947
    %v949 = vadd.f32 %v883, %v948
    %s950 = sld [smem:[#allocation9 + $0x6]]
    %v951 = vstv %s950
    %v952 = vmul.f32 %v861, %v951
    %v953 = vadd.f32 %v886, %v952
    %s954 = sld [smem:[#allocation9 + $0x7]]
    %v955 = vstv %s954
    %v956 = vmul.f32 %v861, %v955
    %v957 = vadd.f32 %v889, %v956
    %s958 = sld [smem:[#allocation9 + $0x8]]
    %v959 = vstv %s958
    %v960 = vmul.f32 %v861, %v959
    %v961 = vadd.f32 %v892, %v960
    %s962 = sld [smem:[#allocation9 + $0x9]]
    %v963 = vstv %s962
    %v964 = vmul.f32 %v861, %v963
    %v965 = vadd.f32 %v895, %v964
    %s966 = sld [smem:[#allocation9 + $0xa]]
    %v967 = vstv %s966
    %v968 = vmul.f32 %v861, %v967
    %v969 = vadd.f32 %v898, %v968
    %s970 = sld [smem:[#allocation9 + $0xb]]
    %v971 = vstv %s970
    %v972 = vmul.f32 %v861, %v971
    %v973 = vadd.f32 %v901, %v972
    %s974 = sld [smem:[#allocation9 + $0xc]]
    %v975 = vstv %s974
    %v976 = vmul.f32 %v861, %v975
    %v977 = vadd.f32 %v904, %v976
    %s978 = sld [smem:[#allocation9 + $0xd]]
    %v979 = vstv %s978
    %v980 = vmul.f32 %v861, %v979
    %v981 = vadd.f32 %v907, %v980
    %s982 = sld [smem:[#allocation9 + $0xe]]
    %v983 = vstv %s982
    %v984 = vmul.f32 %v861, %v983
    %v985 = vadd.f32 %v910, %v984
    %s986 = sld [smem:[#allocation9 + $0xf]]
    %v987 = vstv %s986
    %v988 = vmul.f32 %v861, %v987
    %v989 = vadd.f32 %v913, %v988
    %s990 = sld [smem:[#allocation9 + $0x10]]
    %v991 = vstv %s990
    %v992 = vmul.f32 %v861, %v991
    %v993 = vadd.f32 %v916, %v992
    %s994 = sld [smem:[#allocation9 + $0x11]]
    %v995 = vstv %s994
    %v996 = vmul.f32 %v861, %v995
    %v997 = vadd.f32 %v919, %v996
    %s998 = sld [smem:[#allocation9 + $0x12]]
    %v999 = vstv %s998
    %v1000 = vmul.f32 %v861, %v999
    %v1001 = vadd.f32 %v922, %v1000
    %s1002 = sld [smem:[#allocation9 + $0x13]]
    %v1003 = vstv %s1002
    %v1004 = vmul.f32 %v861, %v1003
    %v1005 = vadd.f32 %v925, %v1004
    %s1006 = sld [smem:[#allocation9 + $0x14]]
    %v1007 = vstv %s1006
    %v1008 = vmul.f32 %v862, %v1007
    %v1009 = vadd.f32 %v929, %v1008
    %s1010 = sld [smem:[#allocation9 + $0x15]]
    %v1011 = vstv %s1010
    %v1012 = vmul.f32 %v862, %v1011
    %v1013 = vadd.f32 %v933, %v1012
    %s1014 = sld [smem:[#allocation9 + $0x16]]
    %v1015 = vstv %s1014
    %v1016 = vmul.f32 %v862, %v1015
    %v1017 = vadd.f32 %v937, %v1016
    %s1018 = sld [smem:[#allocation9 + $0x17]]
    %v1019 = vstv %s1018
    %v1020 = vmul.f32 %v862, %v1019
    %v1021 = vadd.f32 %v941, %v1020
    %s1022 = sld [smem:[#allocation9 + $0x18]]
    %v1023 = vstv %s1022
    %v1024 = vmul.f32 %v862, %v1023
    %v1025 = vadd.f32 %v945, %v1024
    %s1026 = sld [smem:[#allocation9 + $0x19]]
    %v1027 = vstv %s1026
    %v1028 = vmul.f32 %v862, %v1027
    %v1029 = vadd.f32 %v949, %v1028
    %s1030 = sld [smem:[#allocation9 + $0x1a]]
    %v1031 = vstv %s1030
    %v1032 = vmul.f32 %v862, %v1031
    %v1033 = vadd.f32 %v953, %v1032
    %s1034 = sld [smem:[#allocation9 + $0x1b]]
    %v1035 = vstv %s1034
    %v1036 = vmul.f32 %v862, %v1035
    %v1037 = vadd.f32 %v957, %v1036
    %s1038 = sld [smem:[#allocation9 + $0x1c]]
    %v1039 = vstv %s1038
    %v1040 = vmul.f32 %v862, %v1039
    %v1041 = vadd.f32 %v961, %v1040
    %s1042 = sld [smem:[#allocation9 + $0x1d]]
    %v1043 = vstv %s1042
    %v1044 = vmul.f32 %v862, %v1043
    %v1045 = vadd.f32 %v965, %v1044
    %s1046 = sld [smem:[#allocation9 + $0x1e]]
    %v1047 = vstv %s1046
    %v1048 = vmul.f32 %v862, %v1047
    %v1049 = vadd.f32 %v969, %v1048
    %s1050 = sld [smem:[#allocation9 + $0x1f]]
    %v1051 = vstv %s1050
    %v1052 = vmul.f32 %v862, %v1051
    %v1053 = vadd.f32 %v973, %v1052
    %s1054 = sld [smem:[#allocation9 + $0x20]]
    %v1055 = vstv %s1054
    %v1056 = vmul.f32 %v862, %v1055
    %v1057 = vadd.f32 %v977, %v1056
    %s1058 = sld [smem:[#allocation9 + $0x21]]
    %v1059 = vstv %s1058
    %v1060 = vmul.f32 %v862, %v1059
    %v1061 = vadd.f32 %v981, %v1060
    %s1062 = sld [smem:[#allocation9 + $0x22]]
    %v1063 = vstv %s1062
    %v1064 = vmul.f32 %v862, %v1063
    %v1065 = vadd.f32 %v985, %v1064
    %s1066 = sld [smem:[#allocation9 + $0x23]]
    %v1067 = vstv %s1066
    %v1068 = vmul.f32 %v862, %v1067
    %v1069 = vadd.f32 %v989, %v1068
    %s1070 = sld [smem:[#allocation9 + $0x24]]
    %v1071 = vstv %s1070
    %v1072 = vmul.f32 %v862, %v1071
    %v1073 = vadd.f32 %v993, %v1072
    %s1074 = sld [smem:[#allocation9 + $0x25]]
    %v1075 = vstv %s1074
    %v1076 = vmul.f32 %v862, %v1075
    %v1077 = vadd.f32 %v997, %v1076
    %s1078 = sld [smem:[#allocation9 + $0x26]]
    %v1079 = vstv %s1078
    %v1080 = vmul.f32 %v862, %v1079
    %v1081 = vadd.f32 %v1001, %v1080
    %s1082 = sld [smem:[#allocation9 + $0x27]]
    %v1083 = vstv %s1082
    %v1084 = vmul.f32 %v862, %v1083
    %v1085 = vadd.f32 %v1005, %v1084
    %s1086 = sld [smem:[#allocation9 + $0x28]]
    %v1087 = vstv %s1086
    %v1088 = vmul.f32 %v863, %v1087
    %v1089 = vadd.f32 %v1009, %v1088
    %s1090 = sld [smem:[#allocation9 + $0x29]]
    %v1091 = vstv %s1090
    %v1092 = vmul.f32 %v863, %v1091
    %v1093 = vadd.f32 %v1013, %v1092
    %s1094 = sld [smem:[#allocation9 + $0x2a]]
    %v1095 = vstv %s1094
    %v1096 = vmul.f32 %v863, %v1095
    %v1097 = vadd.f32 %v1017, %v1096
    %s1098 = sld [smem:[#allocation9 + $0x2b]]
    %v1099 = vstv %s1098
    %v1100 = vmul.f32 %v863, %v1099
    %v1101 = vadd.f32 %v1021, %v1100
    %s1102 = sld [smem:[#allocation9 + $0x2c]]
    %v1103 = vstv %s1102
    %v1104 = vmul.f32 %v863, %v1103
    %v1105 = vadd.f32 %v1025, %v1104
    %s1106 = sld [smem:[#allocation9 + $0x2d]]
    %v1107 = vstv %s1106
    %v1108 = vmul.f32 %v863, %v1107
    %v1109 = vadd.f32 %v1029, %v1108
    %s1110 = sld [smem:[#allocation9 + $0x2e]]
    %v1111 = vstv %s1110
    %v1112 = vmul.f32 %v863, %v1111
    %v1113 = vadd.f32 %v1033, %v1112
    %s1114 = sld [smem:[#allocation9 + $0x2f]]
    %v1115 = vstv %s1114
    %v1116 = vmul.f32 %v863, %v1115
    %v1117 = vadd.f32 %v1037, %v1116
    %s1118 = sld [smem:[#allocation9 + $0x30]]
    %v1119 = vstv %s1118
    %v1120 = vmul.f32 %v863, %v1119
    %v1121 = vadd.f32 %v1041, %v1120
    %s1122 = sld [smem:[#allocation9 + $0x31]]
    %v1123 = vstv %s1122
    %v1124 = vmul.f32 %v863, %v1123
    %v1125 = vadd.f32 %v1045, %v1124
    %s1126 = sld [smem:[#allocation9 + $0x32]]
    %v1127 = vstv %s1126
    %v1128 = vmul.f32 %v863, %v1127
    %v1129 = vadd.f32 %v1049, %v1128
    %s1130 = sld [smem:[#allocation9 + $0x33]]
    %v1131 = vstv %s1130
    %v1132 = vmul.f32 %v863, %v1131
    %v1133 = vadd.f32 %v1053, %v1132
    %s1134 = sld [smem:[#allocation9 + $0x34]]
    %v1135 = vstv %s1134
    %v1136 = vmul.f32 %v863, %v1135
    %v1137 = vadd.f32 %v1057, %v1136
    %s1138 = sld [smem:[#allocation9 + $0x35]]
    %v1139 = vstv %s1138
    %v1140 = vmul.f32 %v863, %v1139
    %v1141 = vadd.f32 %v1061, %v1140
    %s1142 = sld [smem:[#allocation9 + $0x36]]
    %v1143 = vstv %s1142
    %v1144 = vmul.f32 %v863, %v1143
    %v1145 = vadd.f32 %v1065, %v1144
    %s1146 = sld [smem:[#allocation9 + $0x37]]
    %v1147 = vstv %s1146
    %v1148 = vmul.f32 %v863, %v1147
    %v1149 = vadd.f32 %v1069, %v1148
    %s1150 = sld [smem:[#allocation9 + $0x38]]
    %v1151 = vstv %s1150
    %v1152 = vmul.f32 %v863, %v1151
    %v1153 = vadd.f32 %v1073, %v1152
    %s1154 = sld [smem:[#allocation9 + $0x39]]
    %v1155 = vstv %s1154
    %v1156 = vmul.f32 %v863, %v1155
    %v1157 = vadd.f32 %v1077, %v1156
    %s1158 = sld [smem:[#allocation9 + $0x3a]]
    %v1159 = vstv %s1158
    %v1160 = vmul.f32 %v863, %v1159
    %v1161 = vadd.f32 %v1081, %v1160
    %s1162 = sld [smem:[#allocation9 + $0x3b]]
    %v1163 = vstv %s1162
    %v1164 = vmul.f32 %v863, %v1163
    %v1165 = vadd.f32 %v1085, %v1164
    %s1166 = sld [smem:[#allocation9 + $0x3c]]
    %v1167 = vstv %s1166
    %v1168 = vmul.f32 %v864, %v1167
    %v1169 = vadd.f32 %v1089, %v1168
    %s1170 = sld [smem:[#allocation9 + $0x3d]]
    %v1171 = vstv %s1170
    %v1172 = vmul.f32 %v864, %v1171
    %v1173 = vadd.f32 %v1093, %v1172
    %s1174 = sld [smem:[#allocation9 + $0x3e]]
    %v1175 = vstv %s1174
    %v1176 = vmul.f32 %v864, %v1175
    %v1177 = vadd.f32 %v1097, %v1176
    %s1178 = sld [smem:[#allocation9 + $0x3f]]
    %v1179 = vstv %s1178
    %v1180 = vmul.f32 %v864, %v1179
    %v1181 = vadd.f32 %v1101, %v1180
    %s1182 = sld [smem:[#allocation9 + $0x40]]
    %v1183 = vstv %s1182
    %v1184 = vmul.f32 %v864, %v1183
    %v1185 = vadd.f32 %v1105, %v1184
    %s1186 = sld [smem:[#allocation9 + $0x41]]
    %v1187 = vstv %s1186
    %v1188 = vmul.f32 %v864, %v1187
    %v1189 = vadd.f32 %v1109, %v1188
    %s1190 = sld [smem:[#allocation9 + $0x42]]
    %v1191 = vstv %s1190
    %v1192 = vmul.f32 %v864, %v1191
    %v1193 = vadd.f32 %v1113, %v1192
    %s1194 = sld [smem:[#allocation9 + $0x43]]
    %v1195 = vstv %s1194
    %v1196 = vmul.f32 %v864, %v1195
    %v1197 = vadd.f32 %v1117, %v1196
    %s1198 = sld [smem:[#allocation9 + $0x44]]
    %v1199 = vstv %s1198
    %v1200 = vmul.f32 %v864, %v1199
    %v1201 = vadd.f32 %v1121, %v1200
    %s1202 = sld [smem:[#allocation9 + $0x45]]
    %v1203 = vstv %s1202
    %v1204 = vmul.f32 %v864, %v1203
    %v1205 = vadd.f32 %v1125, %v1204
    %s1206 = sld [smem:[#allocation9 + $0x46]]
    %v1207 = vstv %s1206
    %v1208 = vmul.f32 %v864, %v1207
    %v1209 = vadd.f32 %v1129, %v1208
    %s1210 = sld [smem:[#allocation9 + $0x47]]
    %v1211 = vstv %s1210
    %v1212 = vmul.f32 %v864, %v1211
    %v1213 = vadd.f32 %v1133, %v1212
    %s1214 = sld [smem:[#allocation9 + $0x48]]
    %v1215 = vstv %s1214
    %v1216 = vmul.f32 %v864, %v1215
    %v1217 = vadd.f32 %v1137, %v1216
    %s1218 = sld [smem:[#allocation9 + $0x49]]
    %v1219 = vstv %s1218
    %v1220 = vmul.f32 %v864, %v1219
    %v1221 = vadd.f32 %v1141, %v1220
    %s1222 = sld [smem:[#allocation9 + $0x4a]]
    %v1223 = vstv %s1222
    %v1224 = vmul.f32 %v864, %v1223
    %v1225 = vadd.f32 %v1145, %v1224
    %s1226 = sld [smem:[#allocation9 + $0x4b]]
    %v1227 = vstv %s1226
    %v1228 = vmul.f32 %v864, %v1227
    %v1229 = vadd.f32 %v1149, %v1228
    %s1230 = sld [smem:[#allocation9 + $0x4c]]
    %v1231 = vstv %s1230
    %v1232 = vmul.f32 %v864, %v1231
    %v1233 = vadd.f32 %v1153, %v1232
    %s1234 = sld [smem:[#allocation9 + $0x4d]]
    %v1235 = vstv %s1234
    %v1236 = vmul.f32 %v864, %v1235
    %v1237 = vadd.f32 %v1157, %v1236
    %s1238 = sld [smem:[#allocation9 + $0x4e]]
    %v1239 = vstv %s1238
    %v1240 = vmul.f32 %v864, %v1239
    %v1241 = vadd.f32 %v1161, %v1240
    %s1242 = sld [smem:[#allocation9 + $0x4f]]
    %v1243 = vstv %s1242
    %v1244 = vmul.f32 %v864, %v1243
    %v1245 = vadd.f32 %v1165, %v1244
    %s1246 = sld [smem:[#allocation9 + $0x50]]
    %v1247 = vstv %s1246
    %v1248 = vmul.f32 %v865, %v1247
    %v1249 = vadd.f32 %v1169, %v1248
    %s1250 = sld [smem:[#allocation9 + $0x51]]
    %v1251 = vstv %s1250
    %v1252 = vmul.f32 %v865, %v1251
    %v1253 = vadd.f32 %v1173, %v1252
    %s1254 = sld [smem:[#allocation9 + $0x52]]
    %v1255 = vstv %s1254
    %v1256 = vmul.f32 %v865, %v1255
    %v1257 = vadd.f32 %v1177, %v1256
    %s1258 = sld [smem:[#allocation9 + $0x53]]
    %v1259 = vstv %s1258
    %v1260 = vmul.f32 %v865, %v1259
    %v1261 = vadd.f32 %v1181, %v1260
    %s1262 = sld [smem:[#allocation9 + $0x54]]
    %v1263 = vstv %s1262
    %v1264 = vmul.f32 %v865, %v1263
    %v1265 = vadd.f32 %v1185, %v1264
    %s1266 = sld [smem:[#allocation9 + $0x55]]
    %v1267 = vstv %s1266
    %v1268 = vmul.f32 %v865, %v1267
    %v1269 = vadd.f32 %v1189, %v1268
    %s1270 = sld [smem:[#allocation9 + $0x56]]
    %v1271 = vstv %s1270
    %v1272 = vmul.f32 %v865, %v1271
    %v1273 = vadd.f32 %v1193, %v1272
    %s1274 = sld [smem:[#allocation9 + $0x57]]
    %v1275 = vstv %s1274
    %v1276 = vmul.f32 %v865, %v1275
    %v1277 = vadd.f32 %v1197, %v1276
    %s1278 = sld [smem:[#allocation9 + $0x58]]
    %v1279 = vstv %s1278
    %v1280 = vmul.f32 %v865, %v1279
    %v1281 = vadd.f32 %v1201, %v1280
    %s1282 = sld [smem:[#allocation9 + $0x59]]
    %v1283 = vstv %s1282
    %v1284 = vmul.f32 %v865, %v1283
    %v1285 = vadd.f32 %v1205, %v1284
    %s1286 = sld [smem:[#allocation9 + $0x5a]]
    %v1287 = vstv %s1286
    %v1288 = vmul.f32 %v865, %v1287
    %v1289 = vadd.f32 %v1209, %v1288
    %s1290 = sld [smem:[#allocation9 + $0x5b]]
    %v1291 = vstv %s1290
    %v1292 = vmul.f32 %v865, %v1291
    %v1293 = vadd.f32 %v1213, %v1292
    %s1294 = sld [smem:[#allocation9 + $0x5c]]
    %v1295 = vstv %s1294
    %v1296 = vmul.f32 %v865, %v1295
    %v1297 = vadd.f32 %v1217, %v1296
    %s1298 = sld [smem:[#allocation9 + $0x5d]]
    %v1299 = vstv %s1298
    %v1300 = vmul.f32 %v865, %v1299
    %v1301 = vadd.f32 %v1221, %v1300
    %s1302 = sld [smem:[#allocation9 + $0x5e]]
    %v1303 = vstv %s1302
    %v1304 = vmul.f32 %v865, %v1303
    %v1305 = vadd.f32 %v1225, %v1304
    %s1306 = sld [smem:[#allocation9 + $0x5f]]
    %v1307 = vstv %s1306
    %v1308 = vmul.f32 %v865, %v1307
    %v1309 = vadd.f32 %v1229, %v1308
    %s1310 = sld [smem:[#allocation9 + $0x60]]
    %v1311 = vstv %s1310
    %v1312 = vmul.f32 %v865, %v1311
    %v1313 = vadd.f32 %v1233, %v1312
    %s1314 = sld [smem:[#allocation9 + $0x61]]
    %v1315 = vstv %s1314
    %v1316 = vmul.f32 %v865, %v1315
    %v1317 = vadd.f32 %v1237, %v1316
    %s1318 = sld [smem:[#allocation9 + $0x62]]
    %v1319 = vstv %s1318
    %v1320 = vmul.f32 %v865, %v1319
    %v1321 = vadd.f32 %v1241, %v1320
    %s1322 = sld [smem:[#allocation9 + $0x63]]
    %v1323 = vstv %s1322
    %v1324 = vmul.f32 %v865, %v1323
    %v1325 = vadd.f32 %v1245, %v1324
    %v1326 = vmax.f32 %v1249, 0.0
    %v1327 = vmax.f32 %v1253, 0.0
    %v1328 = vmax.f32 %v1257, 0.0
    %v1329 = vmax.f32 %v1261, 0.0
    %v1330 = vmax.f32 %v1265, 0.0
    %v1331 = vmax.f32 %v1269, 0.0
    %v1332 = vmax.f32 %v1273, 0.0
    %v1333 = vmax.f32 %v1277, 0.0
    %v1334 = vmax.f32 %v1281, 0.0
    %v1335 = vmax.f32 %v1285, 0.0
    %v1336 = vmax.f32 %v1289, 0.0
    %v1337 = vmax.f32 %v1293, 0.0
    %v1338 = vmax.f32 %v1297, 0.0
    %v1339 = vmax.f32 %v1301, 0.0
    %v1340 = vmax.f32 %v1305, 0.0
    %v1341 = vmax.f32 %v1309, 0.0
    %v1342 = vmax.f32 %v1313, 0.0
    %v1343 = vmax.f32 %v1317, 0.0
    %v1344 = vmax.f32 %v1321, 0.0
    %v1345 = vmax.f32 %v1325, 0.0
    %s1346 = sld [smem:[#allocation13]]
    %v1347 = vstv %s1346
    %v1348 = vadd.f32 %v1347, 0.0
    %s1349 = sld [smem:[#allocation13 + $0x1]]
    %v1350 = vstv %s1349
    %v1351 = vadd.f32 %v1350, 0.0
    %s1352 = sld [smem:[#allocation13 + $0x2]]
    %v1353 = vstv %s1352
    %v1354 = vadd.f32 %v1353, 0.0
    %s1355 = sld [smem:[#allocation13 + $0x3]]
    %v1356 = vstv %s1355
    %v1357 = vadd.f32 %v1356, 0.0
    %s1358 = sld [smem:[#allocation13 + $0x4]]
    %v1359 = vstv %s1358
    %v1360 = vadd.f32 %v1359, 0.0
    %s1361 = sld [smem:[#allocation13 + $0x5]]
    %v1362 = vstv %s1361
    %v1363 = vadd.f32 %v1362, 0.0
    %s1364 = sld [smem:[#allocation13 + $0x6]]
    %v1365 = vstv %s1364
    %v1366 = vadd.f32 %v1365, 0.0
    %s1367 = sld [smem:[#allocation13 + $0x7]]
    %v1368 = vstv %s1367
    %v1369 = vadd.f32 %v1368, 0.0
    %s1370 = sld [smem:[#allocation13 + $0x8]]
    %v1371 = vstv %s1370
    %v1372 = vadd.f32 %v1371, 0.0
    %s1373 = sld [smem:[#allocation13 + $0x9]]
    %v1374 = vstv %s1373
    %v1375 = vadd.f32 %v1374, 0.0
    %s1376 = sld [smem:[#allocation12]]
    %v1377 = vstv %s1376
    %v1378 = vmul.f32 %v1326, %v1377
    %v1379 = vadd.f32 %v1348, %v1378
    %s1380 = sld [smem:[#allocation12 + $0x1]]
    %v1381 = vstv %s1380
    %v1382 = vmul.f32 %v1326, %v1381
    %v1383 = vadd.f32 %v1351, %v1382
    %s1384 = sld [smem:[#allocation12 + $0x2]]
    %v1385 = vstv %s1384
    %v1386 = vmul.f32 %v1326, %v1385
    %v1387 = vadd.f32 %v1354, %v1386
    %s1388 = sld [smem:[#allocation12 + $0x3]]
    %v1389 = vstv %s1388
    %v1390 = vmul.f32 %v1326, %v1389
    %v1391 = vadd.f32 %v1357, %v1390
    %s1392 = sld [smem:[#allocation12 + $0x4]]
    %v1393 = vstv %s1392
    %v1394 = vmul.f32 %v1326, %v1393
    %v1395 = vadd.f32 %v1360, %v1394
    %s1396 = sld [smem:[#allocation12 + $0x5]]
    %v1397 = vstv %s1396
    %v1398 = vmul.f32 %v1326, %v1397
    %v1399 = vadd.f32 %v1363, %v1398
    %s1400 = sld [smem:[#allocation12 + $0x6]]
    %v1401 = vstv %s1400
    %v1402 = vmul.f32 %v1326, %v1401
    %v1403 = vadd.f32 %v1366, %v1402
    %s1404 = sld [smem:[#allocation12 + $0x7]]
    %v1405 = vstv %s1404
    %v1406 = vmul.f32 %v1326, %v1405
    %v1407 = vadd.f32 %v1369, %v1406
    %s1408 = sld [smem:[#allocation12 + $0x8]]
    %v1409 = vstv %s1408
    %v1410 = vmul.f32 %v1326, %v1409
    %v1411 = vadd.f32 %v1372, %v1410
    %s1412 = sld [smem:[#allocation12 + $0x9]]
    %v1413 = vstv %s1412
    %v1414 = vmul.f32 %v1326, %v1413
    %v1415 = vadd.f32 %v1375, %v1414
    %s1416 = sld [smem:[#allocation12 + $0xa]]
    %v1417 = vstv %s1416
    %v1418 = vmul.f32 %v1327, %v1417
    %v1419 = vadd.f32 %v1379, %v1418
    %s1420 = sld [smem:[#allocation12 + $0xb]]
    %v1421 = vstv %s1420
    %v1422 = vmul.f32 %v1327, %v1421
    %v1423 = vadd.f32 %v1383, %v1422
    %s1424 = sld [smem:[#allocation12 + $0xc]]
    %v1425 = vstv %s1424
    %v1426 = vmul.f32 %v1327, %v1425
    %v1427 = vadd.f32 %v1387, %v1426
    %s1428 = sld [smem:[#allocation12 + $0xd]]
    %v1429 = vstv %s1428
    %v1430 = vmul.f32 %v1327, %v1429
    %v1431 = vadd.f32 %v1391, %v1430
    %s1432 = sld [smem:[#allocation12 + $0xe]]
    %v1433 = vstv %s1432
    %v1434 = vmul.f32 %v1327, %v1433
    %v1435 = vadd.f32 %v1395, %v1434
    %s1436 = sld [smem:[#allocation12 + $0xf]]
    %v1437 = vstv %s1436
    %v1438 = vmul.f32 %v1327, %v1437
    %v1439 = vadd.f32 %v1399, %v1438
    %s1440 = sld [smem:[#allocation12 + $0x10]]
    %v1441 = vstv %s1440
    %v1442 = vmul.f32 %v1327, %v1441
    %v1443 = vadd.f32 %v1403, %v1442
    %s1444 = sld [smem:[#allocation12 + $0x11]]
    %v1445 = vstv %s1444
    %v1446 = vmul.f32 %v1327, %v1445
    %v1447 = vadd.f32 %v1407, %v1446
    %s1448 = sld [smem:[#allocation12 + $0x12]]
    %v1449 = vstv %s1448
    %v1450 = vmul.f32 %v1327, %v1449
    %v1451 = vadd.f32 %v1411, %v1450
    %s1452 = sld [smem:[#allocation12 + $0x13]]
    %v1453 = vstv %s1452
    %v1454 = vmul.f32 %v1327, %v1453
    %v1455 = vadd.f32 %v1415, %v1454
    %s1456 = sld [smem:[#allocation12 + $0x14]]
    %v1457 = vstv %s1456
    %v1458 = vmul.f32 %v1328, %v1457
    %v1459 = vadd.f32 %v1419, %v1458
    %s1460 = sld [smem:[#allocation12 + $0x15]]
    %v1461 = vstv %s1460
    %v1462 = vmul.f32 %v1328, %v1461
    %v1463 = vadd.f32 %v1423, %v1462
    %s1464 = sld [smem:[#allocation12 + $0x16]]
    %v1465 = vstv %s1464
    %v1466 = vmul.f32 %v1328, %v1465
    %v1467 = vadd.f32 %v1427, %v1466
    %s1468 = sld [smem:[#allocation12 + $0x17]]
    %v1469 = vstv %s1468
    %v1470 = vmul.f32 %v1328, %v1469
    %v1471 = vadd.f32 %v1431, %v1470
    %s1472 = sld [smem:[#allocation12 + $0x18]]
    %v1473 = vstv %s1472
    %v1474 = vmul.f32 %v1328, %v1473
    %v1475 = vadd.f32 %v1435, %v1474
    %s1476 = sld [smem:[#allocation12 + $0x19]]
    %v1477 = vstv %s1476
    %v1478 = vmul.f32 %v1328, %v1477
    %v1479 = vadd.f32 %v1439, %v1478
    %s1480 = sld [smem:[#allocation12 + $0x1a]]
    %v1481 = vstv %s1480
    %v1482 = vmul.f32 %v1328, %v1481
    %v1483 = vadd.f32 %v1443, %v1482
    %s1484 = sld [smem:[#allocation12 + $0x1b]]
    %v1485 = vstv %s1484
    %v1486 = vmul.f32 %v1328, %v1485
    %v1487 = vadd.f32 %v1447, %v1486
    %s1488 = sld [smem:[#allocation12 + $0x1c]]
    %v1489 = vstv %s1488
    %v1490 = vmul.f32 %v1328, %v1489
    %v1491 = vadd.f32 %v1451, %v1490
    %s1492 = sld [smem:[#allocation12 + $0x1d]]
    %v1493 = vstv %s1492
    %v1494 = vmul.f32 %v1328, %v1493
    %v1495 = vadd.f32 %v1455, %v1494
    %s1496 = sld [smem:[#allocation12 + $0x1e]]
    %v1497 = vstv %s1496
    %v1498 = vmul.f32 %v1329, %v1497
    %v1499 = vadd.f32 %v1459, %v1498
    %s1500 = sld [smem:[#allocation12 + $0x1f]]
    %v1501 = vstv %s1500
    %v1502 = vmul.f32 %v1329, %v1501
    %v1503 = vadd.f32 %v1463, %v1502
    %s1504 = sld [smem:[#allocation12 + $0x20]]
    %v1505 = vstv %s1504
    %v1506 = vmul.f32 %v1329, %v1505
    %v1507 = vadd.f32 %v1467, %v1506
    %s1508 = sld [smem:[#allocation12 + $0x21]]
    %v1509 = vstv %s1508
    %v1510 = vmul.f32 %v1329, %v1509
    %v1511 = vadd.f32 %v1471, %v1510
    %s1512 = sld [smem:[#allocation12 + $0x22]]
    %v1513 = vstv %s1512
    %v1514 = vmul.f32 %v1329, %v1513
    %v1515 = vadd.f32 %v1475, %v1514
    %s1516 = sld [smem:[#allocation12 + $0x23]]
    %v1517 = vstv %s1516
    %v1518 = vmul.f32 %v1329, %v1517
    %v1519 = vadd.f32 %v1479, %v1518
    %s1520 = sld [smem:[#allocation12 + $0x24]]
    %v1521 = vstv %s1520
    %v1522 = vmul.f32 %v1329, %v1521
    %v1523 = vadd.f32 %v1483, %v1522
    %s1524 = sld [smem:[#allocation12 + $0x25]]
    %v1525 = vstv %s1524
    %v1526 = vmul.f32 %v1329, %v1525
    %v1527 = vadd.f32 %v1487, %v1526
    %s1528 = sld [smem:[#allocation12 + $0x26]]
    %v1529 = vstv %s1528
    %v1530 = vmul.f32 %v1329, %v1529
    %v1531 = vadd.f32 %v1491, %v1530
    %s1532 = sld [smem:[#allocation12 + $0x27]]
    %v1533 = vstv %s1532
    %v1534 = vmul.f32 %v1329, %v1533
    %v1535 = vadd.f32 %v1495, %v1534
    %s1536 = sld [smem:[#allocation12 + $0x28]]
    %v1537 = vstv %s1536
    %v1538 = vmul.f32 %v1330, %v1537
    %v1539 = vadd.f32 %v1499, %v1538
    %s1540 = sld [smem:[#allocation12 + $0x29]]
    %v1541 = vstv %s1540
    %v1542 = vmul.f32 %v1330, %v1541
    %v1543 = vadd.f32 %v1503, %v1542
    %s1544 = sld [smem:[#allocation12 + $0x2a]]
    %v1545 = vstv %s1544
    %v1546 = vmul.f32 %v1330, %v1545
    %v1547 = vadd.f32 %v1507, %v1546
    %s1548 = sld [smem:[#allocation12 + $0x2b]]
    %v1549 = vstv %s1548
    %v1550 = vmul.f32 %v1330, %v1549
    %v1551 = vadd.f32 %v1511, %v1550
    %s1552 = sld [smem:[#allocation12 + $0x2c]]
    %v1553 = vstv %s1552
    %v1554 = vmul.f32 %v1330, %v1553
    %v1555 = vadd.f32 %v1515, %v1554
    %s1556 = sld [smem:[#allocation12 + $0x2d]]
    %v1557 = vstv %s1556
    %v1558 = vmul.f32 %v1330, %v1557
    %v1559 = vadd.f32 %v1519, %v1558
    %s1560 = sld [smem:[#allocation12 + $0x2e]]
    %v1561 = vstv %s1560
    %v1562 = vmul.f32 %v1330, %v1561
    %v1563 = vadd.f32 %v1523, %v1562
    %s1564 = sld [smem:[#allocation12 + $0x2f]]
    %v1565 = vstv %s1564
    %v1566 = vmul.f32 %v1330, %v1565
    %v1567 = vadd.f32 %v1527, %v1566
    %s1568 = sld [smem:[#allocation12 + $0x30]]
    %v1569 = vstv %s1568
    %v1570 = vmul.f32 %v1330, %v1569
    %v1571 = vadd.f32 %v1531, %v1570
    %s1572 = sld [smem:[#allocation12 + $0x31]]
    %v1573 = vstv %s1572
    %v1574 = vmul.f32 %v1330, %v1573
    %v1575 = vadd.f32 %v1535, %v1574
    %s1576 = sld [smem:[#allocation12 + $0x32]]
    %v1577 = vstv %s1576
    %v1578 = vmul.f32 %v1331, %v1577
    %v1579 = vadd.f32 %v1539, %v1578
    %s1580 = sld [smem:[#allocation12 + $0x33]]
    %v1581 = vstv %s1580
    %v1582 = vmul.f32 %v1331, %v1581
    %v1583 = vadd.f32 %v1543, %v1582
    %s1584 = sld [smem:[#allocation12 + $0x34]]
    %v1585 = vstv %s1584
    %v1586 = vmul.f32 %v1331, %v1585
    %v1587 = vadd.f32 %v1547, %v1586
    %s1588 = sld [smem:[#allocation12 + $0x35]]
    %v1589 = vstv %s1588
    %v1590 = vmul.f32 %v1331, %v1589
    %v1591 = vadd.f32 %v1551, %v1590
    %s1592 = sld [smem:[#allocation12 + $0x36]]
    %v1593 = vstv %s1592
    %v1594 = vmul.f32 %v1331, %v1593
    %v1595 = vadd.f32 %v1555, %v1594
    %s1596 = sld [smem:[#allocation12 + $0x37]]
    %v1597 = vstv %s1596
    %v1598 = vmul.f32 %v1331, %v1597
    %v1599 = vadd.f32 %v1559, %v1598
    %s1600 = sld [smem:[#allocation12 + $0x38]]
    %v1601 = vstv %s1600
    %v1602 = vmul.f32 %v1331, %v1601
    %v1603 = vadd.f32 %v1563, %v1602
    %s1604 = sld [smem:[#allocation12 + $0x39]]
    %v1605 = vstv %s1604
    %v1606 = vmul.f32 %v1331, %v1605
    %v1607 = vadd.f32 %v1567, %v1606
    %s1608 = sld [smem:[#allocation12 + $0x3a]]
    %v1609 = vstv %s1608
    %v1610 = vmul.f32 %v1331, %v1609
    %v1611 = vadd.f32 %v1571, %v1610
    %s1612 = sld [smem:[#allocation12 + $0x3b]]
    %v1613 = vstv %s1612
    %v1614 = vmul.f32 %v1331, %v1613
    %v1615 = vadd.f32 %v1575, %v1614
    %s1616 = sld [smem:[#allocation12 + $0x3c]]
    %v1617 = vstv %s1616
    %v1618 = vmul.f32 %v1332, %v1617
    %v1619 = vadd.f32 %v1579, %v1618
    %s1620 = sld [smem:[#allocation12 + $0x3d]]
    %v1621 = vstv %s1620
    %v1622 = vmul.f32 %v1332, %v1621
    %v1623 = vadd.f32 %v1583, %v1622
    %s1624 = sld [smem:[#allocation12 + $0x3e]]
    %v1625 = vstv %s1624
    %v1626 = vmul.f32 %v1332, %v1625
    %v1627 = vadd.f32 %v1587, %v1626
    %s1628 = sld [smem:[#allocation12 + $0x3f]]
    %v1629 = vstv %s1628
    %v1630 = vmul.f32 %v1332, %v1629
    %v1631 = vadd.f32 %v1591, %v1630
    %s1632 = sld [smem:[#allocation12 + $0x40]]
    %v1633 = vstv %s1632
    %v1634 = vmul.f32 %v1332, %v1633
    %v1635 = vadd.f32 %v1595, %v1634
    %s1636 = sld [smem:[#allocation12 + $0x41]]
    %v1637 = vstv %s1636
    %v1638 = vmul.f32 %v1332, %v1637
    %v1639 = vadd.f32 %v1599, %v1638
    %s1640 = sld [smem:[#allocation12 + $0x42]]
    %v1641 = vstv %s1640
    %v1642 = vmul.f32 %v1332, %v1641
    %v1643 = vadd.f32 %v1603, %v1642
    %s1644 = sld [smem:[#allocation12 + $0x43]]
    %v1645 = vstv %s1644
    %v1646 = vmul.f32 %v1332, %v1645
    %v1647 = vadd.f32 %v1607, %v1646
    %s1648 = sld [smem:[#allocation12 + $0x44]]
    %v1649 = vstv %s1648
    %v1650 = vmul.f32 %v1332, %v1649
    %v1651 = vadd.f32 %v1611, %v1650
    %s1652 = sld [smem:[#allocation12 + $0x45]]
    %v1653 = vstv %s1652
    %v1654 = vmul.f32 %v1332, %v1653
    %v1655 = vadd.f32 %v1615, %v1654
    %s1656 = sld [smem:[#allocation12 + $0x46]]
    %v1657 = vstv %s1656
    %v1658 = vmul.f32 %v1333, %v1657
    %v1659 = vadd.f32 %v1619, %v1658
    %s1660 = sld [smem:[#allocation12 + $0x47]]
    %v1661 = vstv %s1660
    %v1662 = vmul.f32 %v1333, %v1661
    %v1663 = vadd.f32 %v1623, %v1662
    %s1664 = sld [smem:[#allocation12 + $0x48]]
    %v1665 = vstv %s1664
    %v1666 = vmul.f32 %v1333, %v1665
    %v1667 = vadd.f32 %v1627, %v1666
    %s1668 = sld [smem:[#allocation12 + $0x49]]
    %v1669 = vstv %s1668
    %v1670 = vmul.f32 %v1333, %v1669
    %v1671 = vadd.f32 %v1631, %v1670
    %s1672 = sld [smem:[#allocation12 + $0x4a]]
    %v1673 = vstv %s1672
    %v1674 = vmul.f32 %v1333, %v1673
    %v1675 = vadd.f32 %v1635, %v1674
    %s1676 = sld [smem:[#allocation12 + $0x4b]]
    %v1677 = vstv %s1676
    %v1678 = vmul.f32 %v1333, %v1677
    %v1679 = vadd.f32 %v1639, %v1678
    %s1680 = sld [smem:[#allocation12 + $0x4c]]
    %v1681 = vstv %s1680
    %v1682 = vmul.f32 %v1333, %v1681
    %v1683 = vadd.f32 %v1643, %v1682
    %s1684 = sld [smem:[#allocation12 + $0x4d]]
    %v1685 = vstv %s1684
    %v1686 = vmul.f32 %v1333, %v1685
    %v1687 = vadd.f32 %v1647, %v1686
    %s1688 = sld [smem:[#allocation12 + $0x4e]]
    %v1689 = vstv %s1688
    %v1690 = vmul.f32 %v1333, %v1689
    %v1691 = vadd.f32 %v1651, %v1690
    %s1692 = sld [smem:[#allocation12 + $0x4f]]
    %v1693 = vstv %s1692
    %v1694 = vmul.f32 %v1333, %v1693
    %v1695 = vadd.f32 %v1655, %v1694
    %s1696 = sld [smem:[#allocation12 + $0x50]]
    %v1697 = vstv %s1696
    %v1698 = vmul.f32 %v1334, %v1697
    %v1699 = vadd.f32 %v1659, %v1698
    %s1700 = sld [smem:[#allocation12 + $0x51]]
    %v1701 = vstv %s1700
    %v1702 = vmul.f32 %v1334, %v1701
    %v1703 = vadd.f32 %v1663, %v1702
    %s1704 = sld [smem:[#allocation12 + $0x52]]
    %v1705 = vstv %s1704
    %v1706 = vmul.f32 %v1334, %v1705
    %v1707 = vadd.f32 %v1667, %v1706
    %s1708 = sld [smem:[#allocation12 + $0x53]]
    %v1709 = vstv %s1708
    %v1710 = vmul.f32 %v1334, %v1709
    %v1711 = vadd.f32 %v1671, %v1710
    %s1712 = sld [smem:[#allocation12 + $0x54]]
    %v1713 = vstv %s1712
    %v1714 = vmul.f32 %v1334, %v1713
    %v1715 = vadd.f32 %v1675, %v1714
    %s1716 = sld [smem:[#allocation12 + $0x55]]
    %v1717 = vstv %s1716
    %v1718 = vmul.f32 %v1334, %v1717
    %v1719 = vadd.f32 %v1679, %v1718
    %s1720 = sld [smem:[#allocation12 + $0x56]]
    %v1721 = vstv %s1720
    %v1722 = vmul.f32 %v1334, %v1721
    %v1723 = vadd.f32 %v1683, %v1722
    %s1724 = sld [smem:[#allocation12 + $0x57]]
    %v1725 = vstv %s1724
    %v1726 = vmul.f32 %v1334, %v1725
    %v1727 = vadd.f32 %v1687, %v1726
    %s1728 = sld [smem:[#allocation12 + $0x58]]
    %v1729 = vstv %s1728
    %v1730 = vmul.f32 %v1334, %v1729
    %v1731 = vadd.f32 %v1691, %v1730
    %s1732 = sld [smem:[#allocation12 + $0x59]]
    %v1733 = vstv %s1732
    %v1734 = vmul.f32 %v1334, %v1733
    %v1735 = vadd.f32 %v1695, %v1734
    %s1736 = sld [smem:[#allocation12 + $0x5a]]
    %v1737 = vstv %s1736
    %v1738 = vmul.f32 %v1335, %v1737
    %v1739 = vadd.f32 %v1699, %v1738
    %s1740 = sld [smem:[#allocation12 + $0x5b]]
    %v1741 = vstv %s1740
    %v1742 = vmul.f32 %v1335, %v1741
    %v1743 = vadd.f32 %v1703, %v1742
    %s1744 = sld [smem:[#allocation12 + $0x5c]]
    %v1745 = vstv %s1744
    %v1746 = vmul.f32 %v1335, %v1745
    %v1747 = vadd.f32 %v1707, %v1746
    %s1748 = sld [smem:[#allocation12 + $0x5d]]
    %v1749 = vstv %s1748
    %v1750 = vmul.f32 %v1335, %v1749
    %v1751 = vadd.f32 %v1711, %v1750
    %s1752 = sld [smem:[#allocation12 + $0x5e]]
    %v1753 = vstv %s1752
    %v1754 = vmul.f32 %v1335, %v1753
    %v1755 = vadd.f32 %v1715, %v1754
    %s1756 = sld [smem:[#allocation12 + $0x5f]]
    %v1757 = vstv %s1756
    %v1758 = vmul.f32 %v1335, %v1757
    %v1759 = vadd.f32 %v1719, %v1758
    %s1760 = sld [smem:[#allocation12 + $0x60]]
    %v1761 = vstv %s1760
    %v1762 = vmul.f32 %v1335, %v1761
    %v1763 = vadd.f32 %v1723, %v1762
    %s1764 = sld [smem:[#allocation12 + $0x61]]
    %v1765 = vstv %s1764
    %v1766 = vmul.f32 %v1335, %v1765
    %v1767 = vadd.f32 %v1727, %v1766
    %s1768 = sld [smem:[#allocation12 + $0x62]]
    %v1769 = vstv %s1768
    %v1770 = vmul.f32 %v1335, %v1769
    %v1771 = vadd.f32 %v1731, %v1770
    %s1772 = sld [smem:[#allocation12 + $0x63]]
    %v1773 = vstv %s1772
    %v1774 = vmul.f32 %v1335, %v1773
    %v1775 = vadd.f32 %v1735, %v1774
    %s1776 = sld [smem:[#allocation12 + $0x64]]
    %v1777 = vstv %s1776
    %v1778 = vmul.f32 %v1336, %v1777
    %v1779 = vadd.f32 %v1739, %v1778
    %s1780 = sld [smem:[#allocation12 + $0x65]]
    %v1781 = vstv %s1780
    %v1782 = vmul.f32 %v1336, %v1781
    %v1783 = vadd.f32 %v1743, %v1782
    %s1784 = sld [smem:[#allocation12 + $0x66]]
    %v1785 = vstv %s1784
    %v1786 = vmul.f32 %v1336, %v1785
    %v1787 = vadd.f32 %v1747, %v1786
    %s1788 = sld [smem:[#allocation12 + $0x67]]
    %v1789 = vstv %s1788
    %v1790 = vmul.f32 %v1336, %v1789
    %v1791 = vadd.f32 %v1751, %v1790
    %s1792 = sld [smem:[#allocation12 + $0x68]]
    %v1793 = vstv %s1792
    %v1794 = vmul.f32 %v1336, %v1793
    %v1795 = vadd.f32 %v1755, %v1794
    %s1796 = sld [smem:[#allocation12 + $0x69]]
    %v1797 = vstv %s1796
    %v1798 = vmul.f32 %v1336, %v1797
    %v1799 = vadd.f32 %v1759, %v1798
    %s1800 = sld [smem:[#allocation12 + $0x6a]]
    %v1801 = vstv %s1800
    %v1802 = vmul.f32 %v1336, %v1801
    %v1803 = vadd.f32 %v1763, %v1802
    %s1804 = sld [smem:[#allocation12 + $0x6b]]
    %v1805 = vstv %s1804
    %v1806 = vmul.f32 %v1336, %v1805
    %v1807 = vadd.f32 %v1767, %v1806
    %s1808 = sld [smem:[#allocation12 + $0x6c]]
    %v1809 = vstv %s1808
    %v1810 = vmul.f32 %v1336, %v1809
    %v1811 = vadd.f32 %v1771, %v1810
    %s1812 = sld [smem:[#allocation12 + $0x6d]]
    %v1813 = vstv %s1812
    %v1814 = vmul.f32 %v1336, %v1813
    %v1815 = vadd.f32 %v1775, %v1814
    %s1816 = sld [smem:[#allocation12 + $0x6e]]
    %v1817 = vstv %s1816
    %v1818 = vmul.f32 %v1337, %v1817
    %v1819 = vadd.f32 %v1779, %v1818
    %s1820 = sld [smem:[#allocation12 + $0x6f]]
    %v1821 = vstv %s1820
    %v1822 = vmul.f32 %v1337, %v1821
    %v1823 = vadd.f32 %v1783, %v1822
    %s1824 = sld [smem:[#allocation12 + $0x70]]
    %v1825 = vstv %s1824
    %v1826 = vmul.f32 %v1337, %v1825
    %v1827 = vadd.f32 %v1787, %v1826
    %s1828 = sld [smem:[#allocation12 + $0x71]]
    %v1829 = vstv %s1828
    %v1830 = vmul.f32 %v1337, %v1829
    %v1831 = vadd.f32 %v1791, %v1830
    %s1832 = sld [smem:[#allocation12 + $0x72]]
    %v1833 = vstv %s1832
    %v1834 = vmul.f32 %v1337, %v1833
    %v1835 = vadd.f32 %v1795, %v1834
    %s1836 = sld [smem:[#allocation12 + $0x73]]
    %v1837 = vstv %s1836
    %v1838 = vmul.f32 %v1337, %v1837
    %v1839 = vadd.f32 %v1799, %v1838
    %s1840 = sld [smem:[#allocation12 + $0x74]]
    %v1841 = vstv %s1840
    %v1842 = vmul.f32 %v1337, %v1841
    %v1843 = vadd.f32 %v1803, %v1842
    %s1844 = sld [smem:[#allocation12 + $0x75]]
    %v1845 = vstv %s1844
    %v1846 = vmul.f32 %v1337, %v1845
    %v1847 = vadd.f32 %v1807, %v1846
    %s1848 = sld [smem:[#allocation12 + $0x76]]
    %v1849 = vstv %s1848
    %v1850 = vmul.f32 %v1337, %v1849
    %v1851 = vadd.f32 %v1811, %v1850
    %s1852 = sld [smem:[#allocation12 + $0x77]]
    %v1853 = vstv %s1852
    %v1854 = vmul.f32 %v1337, %v1853
    %v1855 = vadd.f32 %v1815, %v1854
    %s1856 = sld [smem:[#allocation12 + $0x78]]
    %v1857 = vstv %s1856
    %v1858 = vmul.f32 %v1338, %v1857
    %v1859 = vadd.f32 %v1819, %v1858
    %s1860 = sld [smem:[#allocation12 + $0x79]]
    %v1861 = vstv %s1860
    %v1862 = vmul.f32 %v1338, %v1861
    %v1863 = vadd.f32 %v1823, %v1862
    %s1864 = sld [smem:[#allocation12 + $0x7a]]
    %v1865 = vstv %s1864
    %v1866 = vmul.f32 %v1338, %v1865
    %v1867 = vadd.f32 %v1827, %v1866
    %s1868 = sld [smem:[#allocation12 + $0x7b]]
    %v1869 = vstv %s1868
    %v1870 = vmul.f32 %v1338, %v1869
    %v1871 = vadd.f32 %v1831, %v1870
    %s1872 = sld [smem:[#allocation12 + $0x7c]]
    %v1873 = vstv %s1872
    %v1874 = vmul.f32 %v1338, %v1873
    %v1875 = vadd.f32 %v1835, %v1874
    %s1876 = sld [smem:[#allocation12 + $0x7d]]
    %v1877 = vstv %s1876
    %v1878 = vmul.f32 %v1338, %v1877
    %v1879 = vadd.f32 %v1839, %v1878
    %s1880 = sld [smem:[#allocation12 + $0x7e]]
    %v1881 = vstv %s1880
    %v1882 = vmul.f32 %v1338, %v1881
    %v1883 = vadd.f32 %v1843, %v1882
    %s1884 = sld [smem:[#allocation12 + $0x7f]]
    %v1885 = vstv %s1884
    %v1886 = vmul.f32 %v1338, %v1885
    %v1887 = vadd.f32 %v1847, %v1886
    %s1888 = sld [smem:[#allocation12 + $0x80]]
    %v1889 = vstv %s1888
    %v1890 = vmul.f32 %v1338, %v1889
    %v1891 = vadd.f32 %v1851, %v1890
    %s1892 = sld [smem:[#allocation12 + $0x81]]
    %v1893 = vstv %s1892
    %v1894 = vmul.f32 %v1338, %v1893
    %v1895 = vadd.f32 %v1855, %v1894
    %s1896 = sld [smem:[#allocation12 + $0x82]]
    %v1897 = vstv %s1896
    %v1898 = vmul.f32 %v1339, %v1897
    %v1899 = vadd.f32 %v1859, %v1898
    %s1900 = sld [smem:[#allocation12 + $0x83]]
    %v1901 = vstv %s1900
    %v1902 = vmul.f32 %v1339, %v1901
    %v1903 = vadd.f32 %v1863, %v1902
    %s1904 = sld [smem:[#allocation12 + $0x84]]
    %v1905 = vstv %s1904
    %v1906 = vmul.f32 %v1339, %v1905
    %v1907 = vadd.f32 %v1867, %v1906
    %s1908 = sld [smem:[#allocation12 + $0x85]]
    %v1909 = vstv %s1908
    %v1910 = vmul.f32 %v1339, %v1909
    %v1911 = vadd.f32 %v1871, %v1910
    %s1912 = sld [smem:[#allocation12 + $0x86]]
    %v1913 = vstv %s1912
    %v1914 = vmul.f32 %v1339, %v1913
    %v1915 = vadd.f32 %v1875, %v1914
    %s1916 = sld [smem:[#allocation12 + $0x87]]
    %v1917 = vstv %s1916
    %v1918 = vmul.f32 %v1339, %v1917
    %v1919 = vadd.f32 %v1879, %v1918
    %s1920 = sld [smem:[#allocation12 + $0x88]]
    %v1921 = vstv %s1920
    %v1922 = vmul.f32 %v1339, %v1921
    %v1923 = vadd.f32 %v1883, %v1922
    %s1924 = sld [smem:[#allocation12 + $0x89]]
    %v1925 = vstv %s1924
    %v1926 = vmul.f32 %v1339, %v1925
    %v1927 = vadd.f32 %v1887, %v1926
    %s1928 = sld [smem:[#allocation12 + $0x8a]]
    %v1929 = vstv %s1928
    %v1930 = vmul.f32 %v1339, %v1929
    %v1931 = vadd.f32 %v1891, %v1930
    %s1932 = sld [smem:[#allocation12 + $0x8b]]
    %v1933 = vstv %s1932
    %v1934 = vmul.f32 %v1339, %v1933
    %v1935 = vadd.f32 %v1895, %v1934
    %s1936 = sld [smem:[#allocation12 + $0x8c]]
    %v1937 = vstv %s1936
    %v1938 = vmul.f32 %v1340, %v1937
    %v1939 = vadd.f32 %v1899, %v1938
    %s1940 = sld [smem:[#allocation12 + $0x8d]]
    %v1941 = vstv %s1940
    %v1942 = vmul.f32 %v1340, %v1941
    %v1943 = vadd.f32 %v1903, %v1942
    %s1944 = sld [smem:[#allocation12 + $0x8e]]
    %v1945 = vstv %s1944
    %v1946 = vmul.f32 %v1340, %v1945
    %v1947 = vadd.f32 %v1907, %v1946
    %s1948 = sld [smem:[#allocation12 + $0x8f]]
    %v1949 = vstv %s1948
    %v1950 = vmul.f32 %v1340, %v1949
    %v1951 = vadd.f32 %v1911, %v1950
    %s1952 = sld [smem:[#allocation12 + $0x90]]
    %v1953 = vstv %s1952
    %v1954 = vmul.f32 %v1340, %v1953
    %v1955 = vadd.f32 %v1915, %v1954
    %s1956 = sld [smem:[#allocation12 + $0x91]]
    %v1957 = vstv %s1956
    %v1958 = vmul.f32 %v1340, %v1957
    %v1959 = vadd.f32 %v1919, %v1958
    %s1960 = sld [smem:[#allocation12 + $0x92]]
    %v1961 = vstv %s1960
    %v1962 = vmul.f32 %v1340, %v1961
    %v1963 = vadd.f32 %v1923, %v1962
    %s1964 = sld [smem:[#allocation12 + $0x93]]
    %v1965 = vstv %s1964
    %v1966 = vmul.f32 %v1340, %v1965
    %v1967 = vadd.f32 %v1927, %v1966
    %s1968 = sld [smem:[#allocation12 + $0x94]]
    %v1969 = vstv %s1968
    %v1970 = vmul.f32 %v1340, %v1969
    %v1971 = vadd.f32 %v1931, %v1970
    %s1972 = sld [smem:[#allocation12 + $0x95]]
    %v1973 = vstv %s1972
    %v1974 = vmul.f32 %v1340, %v1973
    %v1975 = vadd.f32 %v1935, %v1974
    %s1976 = sld [smem:[#allocation12 + $0x96]]
    %v1977 = vstv %s1976
    %v1978 = vmul.f32 %v1341, %v1977
    %v1979 = vadd.f32 %v1939, %v1978
    %s1980 = sld [smem:[#allocation12 + $0x97]]
    %v1981 = vstv %s1980
    %v1982 = vmul.f32 %v1341, %v1981
    %v1983 = vadd.f32 %v1943, %v1982
    %s1984 = sld [smem:[#allocation12 + $0x98]]
    %v1985 = vstv %s1984
    %v1986 = vmul.f32 %v1341, %v1985
    %v1987 = vadd.f32 %v1947, %v1986
    %s1988 = sld [smem:[#allocation12 + $0x99]]
    %v1989 = vstv %s1988
    %v1990 = vmul.f32 %v1341, %v1989
    %v1991 = vadd.f32 %v1951, %v1990
    %s1992 = sld [smem:[#allocation12 + $0x9a]]
    %v1993 = vstv %s1992
    %v1994 = vmul.f32 %v1341, %v1993
    %v1995 = vadd.f32 %v1955, %v1994
    %s1996 = sld [smem:[#allocation12 + $0x9b]]
    %v1997 = vstv %s1996
    %v1998 = vmul.f32 %v1341, %v1997
    %v1999 = vadd.f32 %v1959, %v1998
    %s2000 = sld [smem:[#allocation12 + $0x9c]]
    %v2001 = vstv %s2000
    %v2002 = vmul.f32 %v1341, %v2001
    %v2003 = vadd.f32 %v1963, %v2002
    %s2004 = sld [smem:[#allocation12 + $0x9d]]
    %v2005 = vstv %s2004
    %v2006 = vmul.f32 %v1341, %v2005
    %v2007 = vadd.f32 %v1967, %v2006
    %s2008 = sld [smem:[#allocation12 + $0x9e]]
    %v2009 = vstv %s2008
    %v2010 = vmul.f32 %v1341, %v2009
    %v2011 = vadd.f32 %v1971, %v2010
    %s2012 = sld [smem:[#allocation12 + $0x9f]]
    %v2013 = vstv %s2012
    %v2014 = vmul.f32 %v1341, %v2013
    %v2015 = vadd.f32 %v1975, %v2014
    %s2016 = sld [smem:[#allocation12 + $0xa0]]
    %v2017 = vstv %s2016
    %v2018 = vmul.f32 %v1342, %v2017
    %v2019 = vadd.f32 %v1979, %v2018
    %s2020 = sld [smem:[#allocation12 + $0xa1]]
    %v2021 = vstv %s2020
    %v2022 = vmul.f32 %v1342, %v2021
    %v2023 = vadd.f32 %v1983, %v2022
    %s2024 = sld [smem:[#allocation12 + $0xa2]]
    %v2025 = vstv %s2024
    %v2026 = vmul.f32 %v1342, %v2025
    %v2027 = vadd.f32 %v1987, %v2026
    %s2028 = sld [smem:[#allocation12 + $0xa3]]
    %v2029 = vstv %s2028
    %v2030 = vmul.f32 %v1342, %v2029
    %v2031 = vadd.f32 %v1991, %v2030
    %s2032 = sld [smem:[#allocation12 + $0xa4]]
    %v2033 = vstv %s2032
    %v2034 = vmul.f32 %v1342, %v2033
    %v2035 = vadd.f32 %v1995, %v2034
    %s2036 = sld [smem:[#allocation12 + $0xa5]]
    %v2037 = vstv %s2036
    %v2038 = vmul.f32 %v1342, %v2037
    %v2039 = vadd.f32 %v1999, %v2038
    %s2040 = sld [smem:[#allocation12 + $0xa6]]
    %v2041 = vstv %s2040
    %v2042 = vmul.f32 %v1342, %v2041
    %v2043 = vadd.f32 %v2003, %v2042
    %s2044 = sld [smem:[#allocation12 + $0xa7]]
    %v2045 = vstv %s2044
    %v2046 = vmul.f32 %v1342, %v2045
    %v2047 = vadd.f32 %v2007, %v2046
    %s2048 = sld [smem:[#allocation12 + $0xa8]]
    %v2049 = vstv %s2048
    %v2050 = vmul.f32 %v1342, %v2049
    %v2051 = vadd.f32 %v2011, %v2050
    %s2052 = sld [smem:[#allocation12 + $0xa9]]
    %v2053 = vstv %s2052
    %v2054 = vmul.f32 %v1342, %v2053
    %v2055 = vadd.f32 %v2015, %v2054
    %s2056 = sld [smem:[#allocation12 + $0xaa]]
    %v2057 = vstv %s2056
    %v2058 = vmul.f32 %v1343, %v2057
    %v2059 = vadd.f32 %v2019, %v2058
    %s2060 = sld [smem:[#allocation12 + $0xab]]
    %v2061 = vstv %s2060
    %v2062 = vmul.f32 %v1343, %v2061
    %v2063 = vadd.f32 %v2023, %v2062
    %s2064 = sld [smem:[#allocation12 + $0xac]]
    %v2065 = vstv %s2064
    %v2066 = vmul.f32 %v1343, %v2065
    %v2067 = vadd.f32 %v2027, %v2066
    %s2068 = sld [smem:[#allocation12 + $0xad]]
    %v2069 = vstv %s2068
    %v2070 = vmul.f32 %v1343, %v2069
    %v2071 = vadd.f32 %v2031, %v2070
    %s2072 = sld [smem:[#allocation12 + $0xae]]
    %v2073 = vstv %s2072
    %v2074 = vmul.f32 %v1343, %v2073
    %v2075 = vadd.f32 %v2035, %v2074
    %s2076 = sld [smem:[#allocation12 + $0xaf]]
    %v2077 = vstv %s2076
    %v2078 = vmul.f32 %v1343, %v2077
    %v2079 = vadd.f32 %v2039, %v2078
    %s2080 = sld [smem:[#allocation12 + $0xb0]]
    %v2081 = vstv %s2080
    %v2082 = vmul.f32 %v1343, %v2081
    %v2083 = vadd.f32 %v2043, %v2082
    %s2084 = sld [smem:[#allocation12 + $0xb1]]
    %v2085 = vstv %s2084
    %v2086 = vmul.f32 %v1343, %v2085
    %v2087 = vadd.f32 %v2047, %v2086
    %s2088 = sld [smem:[#allocation12 + $0xb2]]
    %v2089 = vstv %s2088
    %v2090 = vmul.f32 %v1343, %v2089
    %v2091 = vadd.f32 %v2051, %v2090
    %s2092 = sld [smem:[#allocation12 + $0xb3]]
    %v2093 = vstv %s2092
    %v2094 = vmul.f32 %v1343, %v2093
    %v2095 = vadd.f32 %v2055, %v2094
    %s2096 = sld [smem:[#allocation12 + $0xb4]]
    %v2097 = vstv %s2096
    %v2098 = vmul.f32 %v1344, %v2097
    %v2099 = vadd.f32 %v2059, %v2098
    %s2100 = sld [smem:[#allocation12 + $0xb5]]
    %v2101 = vstv %s2100
    %v2102 = vmul.f32 %v1344, %v2101
    %v2103 = vadd.f32 %v2063, %v2102
    %s2104 = sld [smem:[#allocation12 + $0xb6]]
    %v2105 = vstv %s2104
    %v2106 = vmul.f32 %v1344, %v2105
    %v2107 = vadd.f32 %v2067, %v2106
    %s2108 = sld [smem:[#allocation12 + $0xb7]]
    %v2109 = vstv %s2108
    %v2110 = vmul.f32 %v1344, %v2109
    %v2111 = vadd.f32 %v2071, %v2110
    %s2112 = sld [smem:[#allocation12 + $0xb8]]
    %v2113 = vstv %s2112
    %v2114 = vmul.f32 %v1344, %v2113
    %v2115 = vadd.f32 %v2075, %v2114
    %s2116 = sld [smem:[#allocation12 + $0xb9]]
    %v2117 = vstv %s2116
    %v2118 = vmul.f32 %v1344, %v2117
    %v2119 = vadd.f32 %v2079, %v2118
    %s2120 = sld [smem:[#allocation12 + $0xba]]
    %v2121 = vstv %s2120
    %v2122 = vmul.f32 %v1344, %v2121
    %v2123 = vadd.f32 %v2083, %v2122
    %s2124 = sld [smem:[#allocation12 + $0xbb]]
    %v2125 = vstv %s2124
    %v2126 = vmul.f32 %v1344, %v2125
    %v2127 = vadd.f32 %v2087, %v2126
    %s2128 = sld [smem:[#allocation12 + $0xbc]]
    %v2129 = vstv %s2128
    %v2130 = vmul.f32 %v1344, %v2129
    %v2131 = vadd.f32 %v2091, %v2130
    %s2132 = sld [smem:[#allocation12 + $0xbd]]
    %v2133 = vstv %s2132
    %v2134 = vmul.f32 %v1344, %v2133
    %v2135 = vadd.f32 %v2095, %v2134
    %s2136 = sld [smem:[#allocation12 + $0xbe]]
    %v2137 = vstv %s2136
    %v2138 = vmul.f32 %v1345, %v2137
    %v2139 = vadd.f32 %v2099, %v2138
    %s2140 = sld [smem:[#allocation12 + $0xbf]]
    %v2141 = vstv %s2140
    %v2142 = vmul.f32 %v1345, %v2141
    %v2143 = vadd.f32 %v2103, %v2142
    %s2144 = sld [smem:[#allocation12 + $0xc0]]
    %v2145 = vstv %s2144
    %v2146 = vmul.f32 %v1345, %v2145
    %v2147 = vadd.f32 %v2107, %v2146
    %s2148 = sld [smem:[#allocation12 + $0xc1]]
    %v2149 = vstv %s2148
    %v2150 = vmul.f32 %v1345, %v2149
    %v2151 = vadd.f32 %v2111, %v2150
    %s2152 = sld [smem:[#allocation12 + $0xc2]]
    %v2153 = vstv %s2152
    %v2154 = vmul.f32 %v1345, %v2153
    %v2155 = vadd.f32 %v2115, %v2154
    %s2156 = sld [smem:[#allocation12 + $0xc3]]
    %v2157 = vstv %s2156
    %v2158 = vmul.f32 %v1345, %v2157
    %v2159 = vadd.f32 %v2119, %v2158
    %s2160 = sld [smem:[#allocation12 + $0xc4]]
    %v2161 = vstv %s2160
    %v2162 = vmul.f32 %v1345, %v2161
    %v2163 = vadd.f32 %v2123, %v2162
    %s2164 = sld [smem:[#allocation12 + $0xc5]]
    %v2165 = vstv %s2164
    %v2166 = vmul.f32 %v1345, %v2165
    %v2167 = vadd.f32 %v2127, %v2166
    %s2168 = sld [smem:[#allocation12 + $0xc6]]
    %v2169 = vstv %s2168
    %v2170 = vmul.f32 %v1345, %v2169
    %v2171 = vadd.f32 %v2131, %v2170
    %s2172 = sld [smem:[#allocation12 + $0xc7]]
    %v2173 = vstv %s2172
    %v2174 = vmul.f32 %v1345, %v2173
    %v2175 = vadd.f32 %v2135, %v2174
    %v2176 = vmax.f32 %v2139, %v2143
    %v2177 = vmax.f32 %v2176, %v2147
    %v2178 = vmax.f32 %v2177, %v2151
    %v2179 = vmax.f32 %v2178, %v2155
    %v2180 = vmax.f32 %v2179, %v2159
    %v2181 = vmax.f32 %v2180, %v2163
    %v2182 = vmax.f32 %v2181, %v2167
    %v2183 = vmax.f32 %v2182, %v2171
    %v2184 = vmax.f32 %v2183, %v2175
    %v2185 = vsub.f32 %v2139, %v2184
    %v2186 = vmul.f32 %v2185, 1.442695
    %v2187 = vpow.pop %v2186
    %v2188 = vsub.f32 %v2143, %v2184
    %v2189 = vmul.f32 %v2188, 1.442695
    %v2190 = vpow.pop %v2189
    %v2191 = vsub.f32 %v2147, %v2184
    %v2192 = vmul.f32 %v2191, 1.442695
    %v2193 = vpow.pop %v2192
    %v2194 = vsub.f32 %v2151, %v2184
    %v2195 = vmul.f32 %v2194, 1.442695
    %v2196 = vpow.pop %v2195
    %v2197 = vsub.f32 %v2155, %v2184
    %v2198 = vmul.f32 %v2197, 1.442695
    %v2199 = vpow.pop %v2198
    %v2200 = vsub.f32 %v2159, %v2184
    %v2201 = vmul.f32 %v2200, 1.442695
    %v2202 = vpow.pop %v2201
    %v2203 = vsub.f32 %v2163, %v2184
    %v2204 = vmul.f32 %v2203, 1.442695
    %v2205 = vpow.pop %v2204
    %v2206 = vsub.f32 %v2167, %v2184
    %v2207 = vmul.f32 %v2206, 1.442695
    %v2208 = vpow.pop %v2207
    %v2209 = vsub.f32 %v2171, %v2184
    %v2210 = vmul.f32 %v2209, 1.442695
    %v2211 = vpow.pop %v2210
    %v2212 = vsub.f32 %v2175, %v2184
    %v2213 = vmul.f32 %v2212, 1.442695
    %v2214 = vpow.pop %v2213
    %v2215 = vadd.f32 %v2187, %v2190
    %v2216 = vadd.f32 %v2215, %v2193
    %v2217 = vadd.f32 %v2216, %v2196
    %v2218 = vadd.f32 %v2217, %v2199
    %v2219 = vadd.f32 %v2218, %v2202
    %v2220 = vadd.f32 %v2219, %v2205
    %v2221 = vadd.f32 %v2220, %v2208
    %v2222 = vadd.f32 %v2221, %v2211
    %v2223 = vadd.f32 %v2222, %v2214
    %v2224 = vrcp.pop %v2223
    %v2225 = vmul.f32 1.0, %v2224
    %v2226 = vmul.f32 %v2187, %v2225
    %2227 = vst [vmem:[#allocation15] sm:$0xff] %v2226
    %v2228 = vmul.f32 %v2190, %v2225
    %s2229 = scalar_lea.vmem [#allocation15], %s148
    %2230 = vst [vmem:[%s2229] sm:$0xff] %v2228
    %v2231 = vmul.f32 %v2193, %v2225
    %s2232 = scalar_lea.vmem [#allocation15], %s171
    %2233 = vst [vmem:[%s2232] sm:$0xff] %v2231
    %v2234 = vmul.f32 %v2196, %v2225
    %s2235 = scalar_lea.vmem [#allocation15], %s194
    %2236 = vst [vmem:[%s2235] sm:$0xff] %v2234
    %v2237 = vmul.f32 %v2199, %v2225
    %s2238 = scalar_lea.vmem [#allocation15], %s217
    %2239 = vst [vmem:[%s2238] sm:$0xff] %v2237
    %v2240 = vmul.f32 %v2202, %v2225
    %s2241 = scalar_lea.vmem [#allocation15], %s240
    %2242 = vst [vmem:[%s2241] sm:$0xff] %v2240
    %v2243 = vmul.f32 %v2205, %v2225
    %s2244 = scalar_lea.vmem [#allocation15], %s263
    %2245 = vst [vmem:[%s2244] sm:$0xff] %v2243
    %v2246 = vmul.f32 %v2208, %v2225
    %s2247 = scalar_lea.vmem [#allocation15], %s286
    %2248 = vst [vmem:[%s2247] sm:$0xff] %v2246
    %v2249 = vmul.f32 %v2211, %v2225
    %s2250 = scalar_lea.vmem [#allocation15], %s309
    %2251 = vst [vmem:[%s2250] sm:$0xff] %v2249
    %v2252 = vmul.f32 %v2214, %v2225
    %s2253 = scalar_lea.vmem [#allocation15], %s332
    %2254 = vst [vmem:[%s2253] sm:$0xff] %v2252
    // Predicated region
    $region58: #{tpu_custom_call.1} parent=1 // pred_check
      _
    $region59: #{tpu_custom_call.1} parent=1 // pred_check_branch
      %2256 = sbr.rel (0) target = $region61
    $region60: #{tpu_custom_call.1} parent=1 // pred_region
      %s2258 = ssub.s32 1280, 1280
      %2259 = vsyncadd [#allocation4], %s2258
      %s2260 = sshll.u32 [#allocation15], 4
      %s2261 = int_to_ptr.vmem [resolvable:$true] %s2260
      %2266 = dma.vmem_to_hbm [thread:$0]  %s2261, 1280, %s7, [#allocation4], 128, 128, 8
    $region61: #{tpu_custom_call.1} parent=1 // pred_fallthru
      _
    // Predicated region
    $region62: #{tpu_custom_call.1} parent=1 // pred_check
      _
    $region63: #{tpu_custom_call.1} parent=1 // pred_check_branch
      %2268 = sbr.rel (0) target = $region65
    $region64: #{tpu_custom_call.1} parent=1 // pred_region
      %2269 = dma.done [#allocation4], 1280
    $region65: #{tpu_custom_call.1} parent=1 // pred_fallthru
      _
    %2270 = vsyncpa [#allocation3], 1
    %2271 = vsyncpa [#allocation4], 1
    %2272 = vsyncpa [#allocation5], 1
    %2273 = vsyncpa [#allocation8], 1
    %2274 = vsyncpa [#allocation11], 1
    %2275 = vsyncpa [#allocation14], 1

</llo_original>
